<compile_context>
chip_gen: v5e
topology: v5e:2x2
jax: 0.10.0
libtpu: 0.0.40
codegen_flags: <defaults>
</compile_context>

<pallas_src>
import math

import jax
import jax.numpy as jnp
from jax import lax
from jax.experimental import pallas as pl
from jax.experimental.pallas import tpu as pltpu

# Small, forward-consistent shapes.
INPUT_SIZE = 8
HIDDEN = 32                  # must be divisible by NUM_HEADS
NUM_HEADS = 8
HEAD_DIM = HIDDEN // NUM_HEADS
HIDDEN_HALF = HIDDEN // 2
OUTPUT_SIZE = 3
SEQ_LEN = 8
BATCH = 4
BN_EPS = 1e-5


def _sigmoid(x):
    return 1.0 / (1.0 + jnp.exp(-x))


def enhanced_lstm_kernel(
    x_ref,                                   # (B, T, I) batch-first input
    w0_ref, b0_ref,                          # (I+H, 4H), (1, 4H)  fused layer-0 LSTM weights
    w1_ref, b1_ref,                          # (2H, 4H), (1, 4H)   fused layer-1 LSTM weights
    wqkv_ref, bqkv_ref,                      # (H, 3H), (1, 3H)    fused in_proj
    wo_ref, bo_ref,                          # (H, H), (1, H)      out_proj
    fc1_w_ref, fc1_b_ref,                    # (H, H/2), (1, H/2)
    bn_g_ref, bn_b_ref, bn_rm_ref, bn_rv_ref,  # (1, H/2) each
    fc2_w_ref, fc2_b_ref,                    # (H/2, 3), (1, 3)
    out_ref,                                 # (B, 3)
):
    B, T, _ = x_ref.shape
    H = HIDDEN

    # Hoist all recurrence weights out of the unrolled T loop (stay resident, no re-loads).
    W0 = w0_ref[...]
    b0 = b0_ref[...]
    W1 = w1_ref[...]
    b1 = b1_ref[...]

    def lstm_cell(xh, W, b, c):
        # Single lane-dense matmul: (B, K) @ (K, 4H) -> (B, 128); gates via static lane slices.
        pre = jnp.dot(xh, W, preferred_element_type=jnp.float32) + b
        i = _sigmoid(pre[:, 0 * H:1 * H])
        f = _sigmoid(pre[:, 1 * H:2 * H])
        g = jnp.tanh(pre[:, 2 * H:3 * H])
        o = _sigmoid(pre[:, 3 * H:4 * H])
        c_new = f * c + i * g
        h_new = o * jnp.tanh(c_new)
        return h_new, c_new

    # -------- 2-layer LSTM recurrence (static unroll over T) --------
    zeros = jnp.zeros((B, H), jnp.float32)
    h0, c0, h1, c1 = zeros, zeros, zeros, zeros
    for t in range(T):
        x_t = x_ref[:, t, :]                                              # (B, I)
        h0, c0 = lstm_cell(jnp.concatenate([x_t, h0], axis=-1), W0, b0, c0)
        # inter-layer dropout is identity at inference
        h1, c1 = lstm_cell(jnp.concatenate([h0, h1], axis=-1), W1, b1, c1)

    # -------- MultiheadAttention over the batch axis (batch_first=False quirk) --------
    # attn_out[:, -1, :] only depends on lstm_out[:, -1, :] == h1.
    z = h1                                                                # (B, H)
    qkv = jnp.dot(z, wqkv_ref[...], preferred_element_type=jnp.float32) + bqkv_ref[...]  # (B, 3H)
    scale = 1.0 / math.sqrt(HEAD_DIM)
    heads = []
    for m in range(NUM_HEADS):
        lo = m * HEAD_DIM
        qh = qkv[:, lo:lo + HEAD_DIM]                                     # (B, dh)
        kh = qkv[:, H + lo:H + lo + HEAD_DIM]                             # (B, dh)
        vh = qkv[:, 2 * H + lo:2 * H + lo + HEAD_DIM]                     # (B, dh)
        s = lax.dot_general(qh, kh, (((1,), (1,)), ((), ())),
                            preferred_element_type=jnp.float32) * scale   # (B, B)
        s = s - jnp.max(s, axis=-1, keepdims=True)
        e = jnp.exp(s)
        w = e * pl.reciprocal(jnp.sum(e, axis=-1, keepdims=True), approx=True)
        heads.append(jnp.dot(w, vh, preferred_element_type=jnp.float32))  # (B, dh)
    o_cat = jnp.concatenate(heads, axis=-1)                               # (B, H)
    attn = jnp.dot(o_cat, wo_ref[...], preferred_element_type=jnp.float32) + bo_ref[...]

    # -------- fc1 -> ReLU -> BatchNorm1d (inference) -> fc2 -> softmax --------
    h = jnp.dot(attn, fc1_w_ref[...], preferred_element_type=jnp.float32) + fc1_b_ref[...]
    h = jnp.maximum(h, 0.0)
    h = (h - bn_rm_ref[...]) * lax.rsqrt(bn_rv_ref[...] + BN_EPS) * bn_g_ref[...] + bn_b_ref[...]
    logits = jnp.dot(h, fc2_w_ref[...], preferred_element_type=jnp.float32) + fc2_b_ref[...]
    logits = logits - jnp.max(logits, axis=-1, keepdims=True)
    e = jnp.exp(logits)
    out_ref[...] = e / jnp.sum(e, axis=-1, keepdims=True)   # exact divide: rows sum to 1


def init_params(key):
    """Deterministic parameter init (PyTorch-style uniform ranges), packed for the kernel."""
    keys = jax.random.split(key, 10)
    H, I, H2 = HIDDEN, INPUT_SIZE, HIDDEN_HALF
    f32 = jnp.float32

    def uni(k, shape, scale):
        return jax.random.uniform(k, shape, f32, minval=-scale, maxval=scale)

    def lstm_layer(k, in_size):
        k1, k2, k3, k4 = jax.random.split(k, 4)
        s = 1.0 / math.sqrt(H)
        w_ih = uni(k1, (4 * H, in_size), s)   # PyTorch layout (4H, in), gate order i,f,g,o
        w_hh = uni(k2, (4 * H, H), s)
        b_ih = uni(k3, (4 * H,), s)
        b_hh = uni(k4, (4 * H,), s)
        # pre = [x, h] @ W + b ; gate g occupies output lanes g*H:(g+1)*H
        W = jnp.concatenate([w_ih.T, w_hh.T], axis=0)      # (in+H, 4H)
        b = (b_ih + b_hh)[None, :]                         # (1, 4H)
        return W, b

    w0, b0 = lstm_layer(keys[0], I)
    w1, b1 = lstm_layer(keys[1], H)

    # MultiheadAttention: in_proj (3H, H) + (3H,), out_proj (H, H) + (H,)
    sa = 1.0 / math.sqrt(H)
    in_proj_w = uni(keys[2], (3 * H, H), sa)
    in_proj_b = uni(keys[3], (3 * H,), sa)
    out_proj_w = uni(keys[4], (H, H), sa)
    out_proj_b = uni(keys[5], (H,), sa)
    # z @ wqkv gives [q | k | v] concatenated along lanes (head m = lanes m*dh:(m+1)*dh of each block)
    wqkv = in_proj_w.T                                     # (H, 3H)
    bqkv = in_proj_b[None, :]                              # (1, 3H)
    wo = out_proj_w.T                                      # (H, H): concat(heads) @ wo
    bo = out_proj_b[None, :]                               # (1, H)

    s1 = 1.0 / math.sqrt(H)
    fc1_w = uni(keys[6], (H2, H), s1).T                    # (H, H2)
    fc1_b = uni(keys[7], (H2,), s1)[None, :]               # (1, H2)
    s2 = 1.0 / math.sqrt(H2)
    fc2_w = uni(keys[8], (OUTPUT_SIZE, H2), s2).T          # (H2, 3)
    fc2_b = uni(keys[9], (OUTPUT_SIZE,), s2)[None, :]

    bn_g = jnp.ones((1, H2), f32)
    bn_b = jnp.zeros((1, H2), f32)
    bn_rm = jnp.zeros((1, H2), f32)
    bn_rv = jnp.ones((1, H2), f32)

    return (w0, b0, w1, b1, wqkv, bqkv, wo, bo,
            fc1_w, fc1_b, bn_g, bn_b, bn_rm, bn_rv, fc2_w, fc2_b)


def enhanced_lstm_forward(x, params):
    """x: (B, T, I) batch-first, exactly like the PyTorch module (no wrapper-side transpose)."""
    B = x.shape[0]
    args = (x.astype(jnp.float32),) + tuple(params)
    return pl.pallas_call(
        enhanced_lstm_kernel,
        out_shape=jax.ShapeDtypeStruct((B, OUTPUT_SIZE), jnp.float32),
        in_specs=[pl.BlockSpec(memory_space=pltpu.MemorySpace.VMEM)] * len(args),
        out_specs=pl.BlockSpec(memory_space=pltpu.MemorySpace.VMEM),
    )(*args)


if __name__ == "__main__":
    key = jax.random.PRNGKey(0)
    kx, kp = jax.random.split(key)
    x = jax.random.normal(kx, (BATCH, SEQ_LEN, INPUT_SIZE), jnp.float32)
    params = init_params(kp)

    out = enhanced_lstm_forward(x, params)
    out = jax.block_until_ready(out)

    assert out.shape == (BATCH, OUTPUT_SIZE)
    assert bool(jnp.all(jnp.isfinite(out)))
    assert bool(jnp.allclose(jnp.sum(out, axis=1), 1.0, atol=1e-4))
    print("KERNEL_OK")
</pallas_src>

<mosaic_0001>
module attributes {stable_mosaic.version = 11 : i64} {
  func.func @enhanced_lstm_kernel(%arg0: memref<4x8x8xf32, #tpu.memory_space<vmem>>, %arg1: memref<40x128xf32, #tpu.memory_space<vmem>>, %arg2: memref<1x128xf32, #tpu.memory_space<vmem>>, %arg3: memref<64x128xf32, #tpu.memory_space<vmem>>, %arg4: memref<1x128xf32, #tpu.memory_space<vmem>>, %arg5: memref<32x96xf32, #tpu.memory_space<vmem>>, %arg6: memref<1x96xf32, #tpu.memory_space<vmem>>, %arg7: memref<32x32xf32, #tpu.memory_space<vmem>>, %arg8: memref<1x32xf32, #tpu.memory_space<vmem>>, %arg9: memref<32x16xf32, #tpu.memory_space<vmem>>, %arg10: memref<1x16xf32, #tpu.memory_space<vmem>>, %arg11: memref<1x16xf32, #tpu.memory_space<vmem>>, %arg12: memref<1x16xf32, #tpu.memory_space<vmem>>, %arg13: memref<1x16xf32, #tpu.memory_space<vmem>>, %arg14: memref<1x16xf32, #tpu.memory_space<vmem>>, %arg15: memref<16x3xf32, #tpu.memory_space<vmem>>, %arg16: memref<1x3xf32, #tpu.memory_space<vmem>>, %arg17: memref<4x3xf32, #tpu.memory_space<vmem>>) attributes {dimension_semantics = [], scalar_prefetch = 0 : i64, scratch_operands = 0 : i64, tpu.core_type = #tpu.core_type<tc>} {
    %c0 = arith.constant 0 : index
    %c0_0 = arith.constant 0 : index
    %0 = vector.load %arg1[%c0, %c0_0] : memref<40x128xf32, #tpu.memory_space<vmem>>, vector<40x128xf32>
    %c0_1 = arith.constant 0 : index
    %c0_2 = arith.constant 0 : index
    %1 = vector.load %arg2[%c0_1, %c0_2] : memref<1x128xf32, #tpu.memory_space<vmem>>, vector<1x128xf32>
    %c0_3 = arith.constant 0 : index
    %c0_4 = arith.constant 0 : index
    %2 = vector.load %arg3[%c0_3, %c0_4] : memref<64x128xf32, #tpu.memory_space<vmem>>, vector<64x128xf32>
    %c0_5 = arith.constant 0 : index
    %c0_6 = arith.constant 0 : index
    %3 = vector.load %arg4[%c0_5, %c0_6] : memref<1x128xf32, #tpu.memory_space<vmem>>, vector<1x128xf32>
    %cst = arith.constant 0.000000e+00 : f32
    %4 = vector.broadcast %cst : f32 to vector<4x32xf32>
    %c0_7 = arith.constant 0 : index
    %c0_8 = arith.constant 0 : index
    %c0_9 = arith.constant 0 : index
    %5 = vector.load %arg0[%c0_7, %c0_8, %c0_9] : memref<4x8x8xf32, #tpu.memory_space<vmem>>, vector<4x1x8xf32>
    %6 = vector.shape_cast %5 : vector<4x1x8xf32> to vector<4x8xf32>
    %7 = tpu.concatenate %6, %4 in 1 : vector<4x8xf32>, vector<4x32xf32> -> vector<4x40xf32>
    %cst_10 = arith.constant dense<0.000000e+00> : vector<4x128xf32>
    %8 = tpu.matmul %7, %0, %cst_10 {dimension_numbers = #tpu.dot_dimension_numbers<[1], [0], [0], [1], [0, 0, 1, 1], [], []>} : vector<4x40xf32>, vector<40x128xf32>, vector<4x128xf32> -> vector<4x128xf32>
    %9 = vector.broadcast %1 : vector<1x128xf32> to vector<4x128xf32>
    %10 = arith.addf %8, %9 : vector<4x128xf32>
    %11 = vector.extract_strided_slice %10 {offsets = [0, 0], sizes = [4, 32], strides = [1, 1]} : vector<4x128xf32> to vector<4x32xf32>
    %cst_11 = arith.constant 0.000000e+00 : f32
    %12 = vector.broadcast %cst_11 : f32 to vector<4x32xf32>
    %13 = arith.subf %12, %11 : vector<4x32xf32>
    %14 = math.exp %13 : vector<4x32xf32>
    %cst_12 = arith.constant 1.000000e+00 : f32
    %15 = vector.broadcast %cst_12 : f32 to vector<4x32xf32>
    %16 = arith.addf %15, %14 : vector<4x32xf32>
    %cst_13 = arith.constant 1.000000e+00 : f32
    %17 = vector.broadcast %cst_13 : f32 to vector<4x32xf32>
    %18 = arith.divf %17, %16 : vector<4x32xf32>
    %19 = vector.extract_strided_slice %10 {offsets = [0, 32], sizes = [4, 32], strides = [1, 1]} : vector<4x128xf32> to vector<4x32xf32>
    %cst_14 = arith.constant 0.000000e+00 : f32
    %20 = vector.broadcast %cst_14 : f32 to vector<4x32xf32>
    %21 = arith.subf %20, %19 : vector<4x32xf32>
    %22 = math.exp %21 : vector<4x32xf32>
    %cst_15 = arith.constant 1.000000e+00 : f32
    %23 = vector.broadcast %cst_15 : f32 to vector<4x32xf32>
    %24 = arith.addf %23, %22 : vector<4x32xf32>
    %cst_16 = arith.constant 1.000000e+00 : f32
    %25 = vector.broadcast %cst_16 : f32 to vector<4x32xf32>
    %26 = arith.divf %25, %24 : vector<4x32xf32>
    %27 = vector.extract_strided_slice %10 {offsets = [0, 64], sizes = [4, 32], strides = [1, 1]} : vector<4x128xf32> to vector<4x32xf32>
    %28 = math.tanh %27 : vector<4x32xf32>
    %29 = vector.extract_strided_slice %10 {offsets = [0, 96], sizes = [4, 32], strides = [1, 1]} : vector<4x128xf32> to vector<4x32xf32>
    %cst_17 = arith.constant 0.000000e+00 : f32
    %30 = vector.broadcast %cst_17 : f32 to vector<4x32xf32>
    %31 = arith.subf %30, %29 : vector<4x32xf32>
    %32 = math.exp %31 : vector<4x32xf32>
    %cst_18 = arith.constant 1.000000e+00 : f32
    %33 = vector.broadcast %cst_18 : f32 to vector<4x32xf32>
    %34 = arith.addf %33, %32 : vector<4x32xf32>
    %cst_19 = arith.constant 1.000000e+00 : f32
    %35 = vector.broadcast %cst_19 : f32 to vector<4x32xf32>
    %36 = arith.divf %35, %34 : vector<4x32xf32>
    %37 = arith.mulf %26, %4 : vector<4x32xf32>
    %38 = arith.mulf %18, %28 : vector<4x32xf32>
    %39 = arith.addf %37, %38 : vector<4x32xf32>
    %40 = math.tanh %39 : vector<4x32xf32>
    %41 = arith.mulf %36, %40 : vector<4x32xf32>
    %42 = tpu.concatenate %41, %4 in 1 : vector<4x32xf32>, vector<4x32xf32> -> vector<4x64xf32>
    %cst_20 = arith.constant dense<0.000000e+00> : vector<4x128xf32>
    %43 = tpu.matmul %42, %2, %cst_20 {dimension_numbers = #tpu.dot_dimension_numbers<[1], [0], [0], [1], [0, 0, 1, 1], [], []>} : vector<4x64xf32>, vector<64x128xf32>, vector<4x128xf32> -> vector<4x128xf32>
    %44 = vector.broadcast %3 : vector<1x128xf32> to vector<4x128xf32>
    %45 = arith.addf %43, %44 : vector<4x128xf32>
    %46 = vector.extract_strided_slice %45 {offsets = [0, 0], sizes = [4, 32], strides = [1, 1]} : vector<4x128xf32> to vector<4x32xf32>
    %cst_21 = arith.constant 0.000000e+00 : f32
    %47 = vector.broadcast %cst_21 : f32 to vector<4x32xf32>
    %48 = arith.subf %47, %46 : vector<4x32xf32>
    %49 = math.exp %48 : vector<4x32xf32>
    %cst_22 = arith.constant 1.000000e+00 : f32
    %50 = vector.broadcast %cst_22 : f32 to vector<4x32xf32>
    %51 = arith.addf %50, %49 : vector<4x32xf32>
    %cst_23 = arith.constant 1.000000e+00 : f32
    %52 = vector.broadcast %cst_23 : f32 to vector<4x32xf32>
    %53 = arith.divf %52, %51 : vector<4x32xf32>
    %54 = vector.extract_strided_slice %45 {offsets = [0, 32], sizes = [4, 32], strides = [1, 1]} : vector<4x128xf32> to vector<4x32xf32>
    %cst_24 = arith.constant 0.000000e+00 : f32
    %55 = vector.broadcast %cst_24 : f32 to vector<4x32xf32>
    %56 = arith.subf %55, %54 : vector<4x32xf32>
    %57 = math.exp %56 : vector<4x32xf32>
    %cst_25 = arith.constant 1.000000e+00 : f32
    %58 = vector.broadcast %cst_25 : f32 to vector<4x32xf32>
    %59 = arith.addf %58, %57 : vector<4x32xf32>
    %cst_26 = arith.constant 1.000000e+00 : f32
    %60 = vector.broadcast %cst_26 : f32 to vector<4x32xf32>
    %61 = arith.divf %60, %59 : vector<4x32xf32>
    %62 = vector.extract_strided_slice %45 {offsets = [0, 64], sizes = [4, 32], strides = [1, 1]} : vector<4x128xf32> to vector<4x32xf32>
    %63 = math.tanh %62 : vector<4x32xf32>
    %64 = vector.extract_strided_slice %45 {offsets = [0, 96], sizes = [4, 32], strides = [1, 1]} : vector<4x128xf32> to vector<4x32xf32>
    %cst_27 = arith.constant 0.000000e+00 : f32
    %65 = vector.broadcast %cst_27 : f32 to vector<4x32xf32>
    %66 = arith.subf %65, %64 : vector<4x32xf32>
    %67 = math.exp %66 : vector<4x32xf32>
    %cst_28 = arith.constant 1.000000e+00 : f32
    %68 = vector.broadcast %cst_28 : f32 to vector<4x32xf32>
    %69 = arith.addf %68, %67 : vector<4x32xf32>
    %cst_29 = arith.constant 1.000000e+00 : f32
    %70 = vector.broadcast %cst_29 : f32 to vector<4x32xf32>
    %71 = arith.divf %70, %69 : vector<4x32xf32>
    %72 = arith.mulf %61, %4 : vector<4x32xf32>
    %73 = arith.mulf %53, %63 : vector<4x32xf32>
    %74 = arith.addf %72, %73 : vector<4x32xf32>
    %75 = math.tanh %74 : vector<4x32xf32>
    %76 = arith.mulf %71, %75 : vector<4x32xf32>
    %c0_30 = arith.constant 0 : index
    %c1 = arith.constant 1 : index
    %c0_31 = arith.constant 0 : index
    %77 = vector.load %arg0[%c0_30, %c1, %c0_31] : memref<4x8x8xf32, #tpu.memory_space<vmem>>, vector<4x1x8xf32>
    %78 = vector.shape_cast %77 : vector<4x1x8xf32> to vector<4x8xf32>
    %79 = tpu.concatenate %78, %41 in 1 : vector<4x8xf32>, vector<4x32xf32> -> vector<4x40xf32>
    %cst_32 = arith.constant dense<0.000000e+00> : vector<4x128xf32>
    %80 = tpu.matmul %79, %0, %cst_32 {dimension_numbers = #tpu.dot_dimension_numbers<[1], [0], [0], [1], [0, 0, 1, 1], [], []>} : vector<4x40xf32>, vector<40x128xf32>, vector<4x128xf32> -> vector<4x128xf32>
    %81 = vector.broadcast %1 : vector<1x128xf32> to vector<4x128xf32>
    %82 = arith.addf %80, %81 : vector<4x128xf32>
    %83 = vector.extract_strided_slice %82 {offsets = [0, 0], sizes = [4, 32], strides = [1, 1]} : vector<4x128xf32> to vector<4x32xf32>
    %cst_33 = arith.constant 0.000000e+00 : f32
    %84 = vector.broadcast %cst_33 : f32 to vector<4x32xf32>
    %85 = arith.subf %84, %83 : vector<4x32xf32>
    %86 = math.exp %85 : vector<4x32xf32>
    %cst_34 = arith.constant 1.000000e+00 : f32
    %87 = vector.broadcast %cst_34 : f32 to vector<4x32xf32>
    %88 = arith.addf %87, %86 : vector<4x32xf32>
    %cst_35 = arith.constant 1.000000e+00 : f32
    %89 = vector.broadcast %cst_35 : f32 to vector<4x32xf32>
    %90 = arith.divf %89, %88 : vector<4x32xf32>
    %91 = vector.extract_strided_slice %82 {offsets = [0, 32], sizes = [4, 32], strides = [1, 1]} : vector<4x128xf32> to vector<4x32xf32>
    %cst_36 = arith.constant 0.000000e+00 : f32
    %92 = vector.broadcast %cst_36 : f32 to vector<4x32xf32>
    %93 = arith.subf %92, %91 : vector<4x32xf32>
    %94 = math.exp %93 : vector<4x32xf32>
    %cst_37 = arith.constant 1.000000e+00 : f32
    %95 = vector.broadcast %cst_37 : f32 to vector<4x32xf32>
    %96 = arith.addf %95, %94 : vector<4x32xf32>
    %cst_38 = arith.constant 1.000000e+00 : f32
    %97 = vector.broadcast %cst_38 : f32 to vector<4x32xf32>
    %98 = arith.divf %97, %96 : vector<4x32xf32>
    %99 = vector.extract_strided_slice %82 {offsets = [0, 64], sizes = [4, 32], strides = [1, 1]} : vector<4x128xf32> to vector<4x32xf32>
    %100 = math.tanh %99 : vector<4x32xf32>
    %101 = vector.extract_strided_slice %82 {offsets = [0, 96], sizes = [4, 32], strides = [1, 1]} : vector<4x128xf32> to vector<4x32xf32>
    %cst_39 = arith.constant 0.000000e+00 : f32
    %102 = vector.broadcast %cst_39 : f32 to vector<4x32xf32>
    %103 = arith.subf %102, %101 : vector<4x32xf32>
    %104 = math.exp %103 : vector<4x32xf32>
    %cst_40 = arith.constant 1.000000e+00 : f32
    %105 = vector.broadcast %cst_40 : f32 to vector<4x32xf32>
    %106 = arith.addf %105, %104 : vector<4x32xf32>
    %cst_41 = arith.constant 1.000000e+00 : f32
    %107 = vector.broadcast %cst_41 : f32 to vector<4x32xf32>
    %108 = arith.divf %107, %106 : vector<4x32xf32>
    %109 = arith.mulf %98, %39 : vector<4x32xf32>
    %110 = arith.mulf %90, %100 : vector<4x32xf32>
    %111 = arith.addf %109, %110 : vector<4x32xf32>
    %112 = math.tanh %111 : vector<4x32xf32>
    %113 = arith.mulf %108, %112 : vector<4x32xf32>
    %114 = tpu.concatenate %113, %76 in 1 : vector<4x32xf32>, vector<4x32xf32> -> vector<4x64xf32>
    %cst_42 = arith.constant dense<0.000000e+00> : vector<4x128xf32>
    %115 = tpu.matmul %114, %2, %cst_42 {dimension_numbers = #tpu.dot_dimension_numbers<[1], [0], [0], [1], [0, 0, 1, 1], [], []>} : vector<4x64xf32>, vector<64x128xf32>, vector<4x128xf32> -> vector<4x128xf32>
    %116 = vector.broadcast %3 : vector<1x128xf32> to vector<4x128xf32>
    %117 = arith.addf %115, %116 : vector<4x128xf32>
    %118 = vector.extract_strided_slice %117 {offsets = [0, 0], sizes = [4, 32], strides = [1, 1]} : vector<4x128xf32> to vector<4x32xf32>
    %cst_43 = arith.constant 0.000000e+00 : f32
    %119 = vector.broadcast %cst_43 : f32 to vector<4x32xf32>
    %120 = arith.subf %119, %118 : vector<4x32xf32>
    %121 = math.exp %120 : vector<4x32xf32>
    %cst_44 = arith.constant 1.000000e+00 : f32
    %122 = vector.broadcast %cst_44 : f32 to vector<4x32xf32>
    %123 = arith.addf %122, %121 : vector<4x32xf32>
    %cst_45 = arith.constant 1.000000e+00 : f32
    %124 = vector.broadcast %cst_45 : f32 to vector<4x32xf32>
    %125 = arith.divf %124, %123 : vector<4x32xf32>
    %126 = vector.extract_strided_slice %117 {offsets = [0, 32], sizes = [4, 32], strides = [1, 1]} : vector<4x128xf32> to vector<4x32xf32>
    %cst_46 = arith.constant 0.000000e+00 : f32
    %127 = vector.broadcast %cst_46 : f32 to vector<4x32xf32>
    %128 = arith.subf %127, %126 : vector<4x32xf32>
    %129 = math.exp %128 : vector<4x32xf32>
    %cst_47 = arith.constant 1.000000e+00 : f32
    %130 = vector.broadcast %cst_47 : f32 to vector<4x32xf32>
    %131 = arith.addf %130, %129 : vector<4x32xf32>
    %cst_48 = arith.constant 1.000000e+00 : f32
    %132 = vector.broadcast %cst_48 : f32 to vector<4x32xf32>
    %133 = arith.divf %132, %131 : vector<4x32xf32>
    %134 = vector.extract_strided_slice %117 {offsets = [0, 64], sizes = [4, 32], strides = [1, 1]} : vector<4x128xf32> to vector<4x32xf32>
    %135 = math.tanh %134 : vector<4x32xf32>
    %136 = vector.extract_strided_slice %117 {offsets = [0, 96], sizes = [4, 32], strides = [1, 1]} : vector<4x128xf32> to vector<4x32xf32>
    %cst_49 = arith.constant 0.000000e+00 : f32
    %137 = vector.broadcast %cst_49 : f32 to vector<4x32xf32>
    %138 = arith.subf %137, %136 : vector<4x32xf32>
    %139 = math.exp %138 : vector<4x32xf32>
    %cst_50 = arith.constant 1.000000e+00 : f32
    %140 = vector.broadcast %cst_50 : f32 to vector<4x32xf32>
    %141 = arith.addf %140, %139 : vector<4x32xf32>
    %cst_51 = arith.constant 1.000000e+00 : f32
    %142 = vector.broadcast %cst_51 : f32 to vector<4x32xf32>
    %143 = arith.divf %142, %141 : vector<4x32xf32>
    %144 = arith.mulf %133, %74 : vector<4x32xf32>
    %145 = arith.mulf %125, %135 : vector<4x32xf32>
    %146 = arith.addf %144, %145 : vector<4x32xf32>
    %147 = math.tanh %146 : vector<4x32xf32>
    %148 = arith.mulf %143, %147 : vector<4x32xf32>
    %c0_52 = arith.constant 0 : index
    %c2 = arith.constant 2 : index
    %c0_53 = arith.constant 0 : index
    %149 = vector.load %arg0[%c0_52, %c2, %c0_53] : memref<4x8x8xf32, #tpu.memory_space<vmem>>, vector<4x1x8xf32>
    %150 = vector.shape_cast %149 : vector<4x1x8xf32> to vector<4x8xf32>
    %151 = tpu.concatenate %150, %113 in 1 : vector<4x8xf32>, vector<4x32xf32> -> vector<4x40xf32>
    %cst_54 = arith.constant dense<0.000000e+00> : vector<4x128xf32>
    %152 = tpu.matmul %151, %0, %cst_54 {dimension_numbers = #tpu.dot_dimension_numbers<[1], [0], [0], [1], [0, 0, 1, 1], [], []>} : vector<4x40xf32>, vector<40x128xf32>, vector<4x128xf32> -> vector<4x128xf32>
    %153 = vector.broadcast %1 : vector<1x128xf32> to vector<4x128xf32>
    %154 = arith.addf %152, %153 : vector<4x128xf32>
    %155 = vector.extract_strided_slice %154 {offsets = [0, 0], sizes = [4, 32], strides = [1, 1]} : vector<4x128xf32> to vector<4x32xf32>
    %cst_55 = arith.constant 0.000000e+00 : f32
    %156 = vector.broadcast %cst_55 : f32 to vector<4x32xf32>
    %157 = arith.subf %156, %155 : vector<4x32xf32>
    %158 = math.exp %157 : vector<4x32xf32>
    %cst_56 = arith.constant 1.000000e+00 : f32
    %159 = vector.broadcast %cst_56 : f32 to vector<4x32xf32>
    %160 = arith.addf %159, %158 : vector<4x32xf32>
    %cst_57 = arith.constant 1.000000e+00 : f32
    %161 = vector.broadcast %cst_57 : f32 to vector<4x32xf32>
    %162 = arith.divf %161, %160 : vector<4x32xf32>
    %163 = vector.extract_strided_slice %154 {offsets = [0, 32], sizes = [4, 32], strides = [1, 1]} : vector<4x128xf32> to vector<4x32xf32>
    %cst_58 = arith.constant 0.000000e+00 : f32
    %164 = vector.broadcast %cst_58 : f32 to vector<4x32xf32>
    %165 = arith.subf %164, %163 : vector<4x32xf32>
    %166 = math.exp %165 : vector<4x32xf32>
    %cst_59 = arith.constant 1.000000e+00 : f32
    %167 = vector.broadcast %cst_59 : f32 to vector<4x32xf32>
    %168 = arith.addf %167, %166 : vector<4x32xf32>
    %cst_60 = arith.constant 1.000000e+00 : f32
    %169 = vector.broadcast %cst_60 : f32 to vector<4x32xf32>
    %170 = arith.divf %169, %168 : vector<4x32xf32>
    %171 = vector.extract_strided_slice %154 {offsets = [0, 64], sizes = [4, 32], strides = [1, 1]} : vector<4x128xf32> to vector<4x32xf32>
    %172 = math.tanh %171 : vector<4x32xf32>
    %173 = vector.extract_strided_slice %154 {offsets = [0, 96], sizes = [4, 32], strides = [1, 1]} : vector<4x128xf32> to vector<4x32xf32>
    %cst_61 = arith.constant 0.000000e+00 : f32
    %174 = vector.broadcast %cst_61 : f32 to vector<4x32xf32>
    %175 = arith.subf %174, %173 : vector<4x32xf32>
    %176 = math.exp %175 : vector<4x32xf32>
    %cst_62 = arith.constant 1.000000e+00 : f32
    %177 = vector.broadcast %cst_62 : f32 to vector<4x32xf32>
    %178 = arith.addf %177, %176 : vector<4x32xf32>
    %cst_63 = arith.constant 1.000000e+00 : f32
    %179 = vector.broadcast %cst_63 : f32 to vector<4x32xf32>
    %180 = arith.divf %179, %178 : vector<4x32xf32>
    %181 = arith.mulf %170, %111 : vector<4x32xf32>
    %182 = arith.mulf %162, %172 : vector<4x32xf32>
    %183 = arith.addf %181, %182 : vector<4x32xf32>
    %184 = math.tanh %183 : vector<4x32xf32>
    %185 = arith.mulf %180, %184 : vector<4x32xf32>
    %186 = tpu.concatenate %185, %148 in 1 : vector<4x32xf32>, vector<4x32xf32> -> vector<4x64xf32>
    %cst_64 = arith.constant dense<0.000000e+00> : vector<4x128xf32>
    %187 = tpu.matmul %186, %2, %cst_64 {dimension_numbers = #tpu.dot_dimension_numbers<[1], [0], [0], [1], [0, 0, 1, 1], [], []>} : vector<4x64xf32>, vector<64x128xf32>, vector<4x128xf32> -> vector<4x128xf32>
    %188 = vector.broadcast %3 : vector<1x128xf32> to vector<4x128xf32>
    %189 = arith.addf %187, %188 : vector<4x128xf32>
    %190 = vector.extract_strided_slice %189 {offsets = [0, 0], sizes = [4, 32], strides = [1, 1]} : vector<4x128xf32> to vector<4x32xf32>
    %cst_65 = arith.constant 0.000000e+00 : f32
    %191 = vector.broadcast %cst_65 : f32 to vector<4x32xf32>
    %192 = arith.subf %191, %190 : vector<4x32xf32>
    %193 = math.exp %192 : vector<4x32xf32>
    %cst_66 = arith.constant 1.000000e+00 : f32
    %194 = vector.broadcast %cst_66 : f32 to vector<4x32xf32>
    %195 = arith.addf %194, %193 : vector<4x32xf32>
    %cst_67 = arith.constant 1.000000e+00 : f32
    %196 = vector.broadcast %cst_67 : f32 to vector<4x32xf32>
    %197 = arith.divf %196, %195 : vector<4x32xf32>
    %198 = vector.extract_strided_slice %189 {offsets = [0, 32], sizes = [4, 32], strides = [1, 1]} : vector<4x128xf32> to vector<4x32xf32>
    %cst_68 = arith.constant 0.000000e+00 : f32
    %199 = vector.broadcast %cst_68 : f32 to vector<4x32xf32>
    %200 = arith.subf %199, %198 : vector<4x32xf32>
    %201 = math.exp %200 : vector<4x32xf32>
    %cst_69 = arith.constant 1.000000e+00 : f32
    %202 = vector.broadcast %cst_69 : f32 to vector<4x32xf32>
    %203 = arith.addf %202, %201 : vector<4x32xf32>
    %cst_70 = arith.constant 1.000000e+00 : f32
    %204 = vector.broadcast %cst_70 : f32 to vector<4x32xf32>
    %205 = arith.divf %204, %203 : vector<4x32xf32>
    %206 = vector.extract_strided_slice %189 {offsets = [0, 64], sizes = [4, 32], strides = [1, 1]} : vector<4x128xf32> to vector<4x32xf32>
    %207 = math.tanh %206 : vector<4x32xf32>
    %208 = vector.extract_strided_slice %189 {offsets = [0, 96], sizes = [4, 32], strides = [1, 1]} : vector<4x128xf32> to vector<4x32xf32>
    %cst_71 = arith.constant 0.000000e+00 : f32
    %209 = vector.broadcast %cst_71 : f32 to vector<4x32xf32>
    %210 = arith.subf %209, %208 : vector<4x32xf32>
    %211 = math.exp %210 : vector<4x32xf32>
    %cst_72 = arith.constant 1.000000e+00 : f32
    %212 = vector.broadcast %cst_72 : f32 to vector<4x32xf32>
    %213 = arith.addf %212, %211 : vector<4x32xf32>
    %cst_73 = arith.constant 1.000000e+00 : f32
    %214 = vector.broadcast %cst_73 : f32 to vector<4x32xf32>
    %215 = arith.divf %214, %213 : vector<4x32xf32>
    %216 = arith.mulf %205, %146 : vector<4x32xf32>
    %217 = arith.mulf %197, %207 : vector<4x32xf32>
    %218 = arith.addf %216, %217 : vector<4x32xf32>
    %219 = math.tanh %218 : vector<4x32xf32>
    %220 = arith.mulf %215, %219 : vector<4x32xf32>
    %c0_74 = arith.constant 0 : index
    %c3 = arith.constant 3 : index
    %c0_75 = arith.constant 0 : index
    %221 = vector.load %arg0[%c0_74, %c3, %c0_75] : memref<4x8x8xf32, #tpu.memory_space<vmem>>, vector<4x1x8xf32>
    %222 = vector.shape_cast %221 : vector<4x1x8xf32> to vector<4x8xf32>
    %223 = tpu.concatenate %222, %185 in 1 : vector<4x8xf32>, vector<4x32xf32> -> vector<4x40xf32>
    %cst_76 = arith.constant dense<0.000000e+00> : vector<4x128xf32>
    %224 = tpu.matmul %223, %0, %cst_76 {dimension_numbers = #tpu.dot_dimension_numbers<[1], [0], [0], [1], [0, 0, 1, 1], [], []>} : vector<4x40xf32>, vector<40x128xf32>, vector<4x128xf32> -> vector<4x128xf32>
    %225 = vector.broadcast %1 : vector<1x128xf32> to vector<4x128xf32>
    %226 = arith.addf %224, %225 : vector<4x128xf32>
    %227 = vector.extract_strided_slice %226 {offsets = [0, 0], sizes = [4, 32], strides = [1, 1]} : vector<4x128xf32> to vector<4x32xf32>
    %cst_77 = arith.constant 0.000000e+00 : f32
    %228 = vector.broadcast %cst_77 : f32 to vector<4x32xf32>
    %229 = arith.subf %228, %227 : vector<4x32xf32>
    %230 = math.exp %229 : vector<4x32xf32>
    %cst_78 = arith.constant 1.000000e+00 : f32
    %231 = vector.broadcast %cst_78 : f32 to vector<4x32xf32>
    %232 = arith.addf %231, %230 : vector<4x32xf32>
    %cst_79 = arith.constant 1.000000e+00 : f32
    %233 = vector.broadcast %cst_79 : f32 to vector<4x32xf32>
    %234 = arith.divf %233, %232 : vector<4x32xf32>
    %235 = vector.extract_strided_slice %226 {offsets = [0, 32], sizes = [4, 32], strides = [1, 1]} : vector<4x128xf32> to vector<4x32xf32>
    %cst_80 = arith.constant 0.000000e+00 : f32
    %236 = vector.broadcast %cst_80 : f32 to vector<4x32xf32>
    %237 = arith.subf %236, %235 : vector<4x32xf32>
    %238 = math.exp %237 : vector<4x32xf32>
    %cst_81 = arith.constant 1.000000e+00 : f32
    %239 = vector.broadcast %cst_81 : f32 to vector<4x32xf32>
    %240 = arith.addf %239, %238 : vector<4x32xf32>
    %cst_82 = arith.constant 1.000000e+00 : f32
    %241 = vector.broadcast %cst_82 : f32 to vector<4x32xf32>
    %242 = arith.divf %241, %240 : vector<4x32xf32>
    %243 = vector.extract_strided_slice %226 {offsets = [0, 64], sizes = [4, 32], strides = [1, 1]} : vector<4x128xf32> to vector<4x32xf32>
    %244 = math.tanh %243 : vector<4x32xf32>
    %245 = vector.extract_strided_slice %226 {offsets = [0, 96], sizes = [4, 32], strides = [1, 1]} : vector<4x128xf32> to vector<4x32xf32>
    %cst_83 = arith.constant 0.000000e+00 : f32
    %246 = vector.broadcast %cst_83 : f32 to vector<4x32xf32>
    %247 = arith.subf %246, %245 : vector<4x32xf32>
    %248 = math.exp %247 : vector<4x32xf32>
    %cst_84 = arith.constant 1.000000e+00 : f32
    %249 = vector.broadcast %cst_84 : f32 to vector<4x32xf32>
    %250 = arith.addf %249, %248 : vector<4x32xf32>
    %cst_85 = arith.constant 1.000000e+00 : f32
    %251 = vector.broadcast %cst_85 : f32 to vector<4x32xf32>
    %252 = arith.divf %251, %250 : vector<4x32xf32>
    %253 = arith.mulf %242, %183 : vector<4x32xf32>
    %254 = arith.mulf %234, %244 : vector<4x32xf32>
    %255 = arith.addf %253, %254 : vector<4x32xf32>
    %256 = math.tanh %255 : vector<4x32xf32>
    %257 = arith.mulf %252, %256 : vector<4x32xf32>
    %258 = tpu.concatenate %257, %220 in 1 : vector<4x32xf32>, vector<4x32xf32> -> vector<4x64xf32>
    %cst_86 = arith.constant dense<0.000000e+00> : vector<4x128xf32>
    %259 = tpu.matmul %258, %2, %cst_86 {dimension_numbers = #tpu.dot_dimension_numbers<[1], [0], [0], [1], [0, 0, 1, 1], [], []>} : vector<4x64xf32>, vector<64x128xf32>, vector<4x128xf32> -> vector<4x128xf32>
    %260 = vector.broadcast %3 : vector<1x128xf32> to vector<4x128xf32>
    %261 = arith.addf %259, %260 : vector<4x128xf32>
    %262 = vector.extract_strided_slice %261 {offsets = [0, 0], sizes = [4, 32], strides = [1, 1]} : vector<4x128xf32> to vector<4x32xf32>
    %cst_87 = arith.constant 0.000000e+00 : f32
    %263 = vector.broadcast %cst_87 : f32 to vector<4x32xf32>
    %264 = arith.subf %263, %262 : vector<4x32xf32>
    %265 = math.exp %264 : vector<4x32xf32>
    %cst_88 = arith.constant 1.000000e+00 : f32
    %266 = vector.broadcast %cst_88 : f32 to vector<4x32xf32>
    %267 = arith.addf %266, %265 : vector<4x32xf32>
    %cst_89 = arith.constant 1.000000e+00 : f32
    %268 = vector.broadcast %cst_89 : f32 to vector<4x32xf32>
    %269 = arith.divf %268, %267 : vector<4x32xf32>
    %270 = vector.extract_strided_slice %261 {offsets = [0, 32], sizes = [4, 32], strides = [1, 1]} : vector<4x128xf32> to vector<4x32xf32>
    %cst_90 = arith.constant 0.000000e+00 : f32
    %271 = vector.broadcast %cst_90 : f32 to vector<4x32xf32>
    %272 = arith.subf %271, %270 : vector<4x32xf32>
    %273 = math.exp %272 : vector<4x32xf32>
    %cst_91 = arith.constant 1.000000e+00 : f32
    %274 = vector.broadcast %cst_91 : f32 to vector<4x32xf32>
    %275 = arith.addf %274, %273 : vector<4x32xf32>
    %cst_92 = arith.constant 1.000000e+00 : f32
    %276 = vector.broadcast %cst_92 : f32 to vector<4x32xf32>
    %277 = arith.divf %276, %275 : vector<4x32xf32>
    %278 = vector.extract_strided_slice %261 {offsets = [0, 64], sizes = [4, 32], strides = [1, 1]} : vector<4x128xf32> to vector<4x32xf32>
    %279 = math.tanh %278 : vector<4x32xf32>
    %280 = vector.extract_strided_slice %261 {offsets = [0, 96], sizes = [4, 32], strides = [1, 1]} : vector<4x128xf32> to vector<4x32xf32>
    %cst_93 = arith.constant 0.000000e+00 : f32
    %281 = vector.broadcast %cst_93 : f32 to vector<4x32xf32>
    %282 = arith.subf %281, %280 : vector<4x32xf32>
    %283 = math.exp %282 : vector<4x32xf32>
    %cst_94 = arith.constant 1.000000e+00 : f32
    %284 = vector.broadcast %cst_94 : f32 to vector<4x32xf32>
    %285 = arith.addf %284, %283 : vector<4x32xf32>
    %cst_95 = arith.constant 1.000000e+00 : f32
    %286 = vector.broadcast %cst_95 : f32 to vector<4x32xf32>
    %287 = arith.divf %286, %285 : vector<4x32xf32>
    %288 = arith.mulf %277, %218 : vector<4x32xf32>
    %289 = arith.mulf %269, %279 : vector<4x32xf32>
    %290 = arith.addf %288, %289 : vector<4x32xf32>
    %291 = math.tanh %290 : vector<4x32xf32>
    %292 = arith.mulf %287, %291 : vector<4x32xf32>
    %c0_96 = arith.constant 0 : index
    %c4 = arith.constant 4 : index
    %c0_97 = arith.constant 0 : index
    %293 = vector.load %arg0[%c0_96, %c4, %c0_97] : memref<4x8x8xf32, #tpu.memory_space<vmem>>, vector<4x1x8xf32>
    %294 = vector.shape_cast %293 : vector<4x1x8xf32> to vector<4x8xf32>
    %295 = tpu.concatenate %294, %257 in 1 : vector<4x8xf32>, vector<4x32xf32> -> vector<4x40xf32>
    %cst_98 = arith.constant dense<0.000000e+00> : vector<4x128xf32>
    %296 = tpu.matmul %295, %0, %cst_98 {dimension_numbers = #tpu.dot_dimension_numbers<[1], [0], [0], [1], [0, 0, 1, 1], [], []>} : vector<4x40xf32>, vector<40x128xf32>, vector<4x128xf32> -> vector<4x128xf32>
    %297 = vector.broadcast %1 : vector<1x128xf32> to vector<4x128xf32>
    %298 = arith.addf %296, %297 : vector<4x128xf32>
    %299 = vector.extract_strided_slice %298 {offsets = [0, 0], sizes = [4, 32], strides = [1, 1]} : vector<4x128xf32> to vector<4x32xf32>
    %cst_99 = arith.constant 0.000000e+00 : f32
    %300 = vector.broadcast %cst_99 : f32 to vector<4x32xf32>
    %301 = arith.subf %300, %299 : vector<4x32xf32>
    %302 = math.exp %301 : vector<4x32xf32>
    %cst_100 = arith.constant 1.000000e+00 : f32
    %303 = vector.broadcast %cst_100 : f32 to vector<4x32xf32>
    %304 = arith.addf %303, %302 : vector<4x32xf32>
    %cst_101 = arith.constant 1.000000e+00 : f32
    %305 = vector.broadcast %cst_101 : f32 to vector<4x32xf32>
    %306 = arith.divf %305, %304 : vector<4x32xf32>
    %307 = vector.extract_strided_slice %298 {offsets = [0, 32], sizes = [4, 32], strides = [1, 1]} : vector<4x128xf32> to vector<4x32xf32>
    %cst_102 = arith.constant 0.000000e+00 : f32
    %308 = vector.broadcast %cst_102 : f32 to vector<4x32xf32>
    %309 = arith.subf %308, %307 : vector<4x32xf32>
    %310 = math.exp %309 : vector<4x32xf32>
    %cst_103 = arith.constant 1.000000e+00 : f32
    %311 = vector.broadcast %cst_103 : f32 to vector<4x32xf32>
    %312 = arith.addf %311, %310 : vector<4x32xf32>
    %cst_104 = arith.constant 1.000000e+00 : f32
    %313 = vector.broadcast %cst_104 : f32 to vector<4x32xf32>
    %314 = arith.divf %313, %312 : vector<4x32xf32>
    %315 = vector.extract_strided_slice %298 {offsets = [0, 64], sizes = [4, 32], strides = [1, 1]} : vector<4x128xf32> to vector<4x32xf32>
    %316 = math.tanh %315 : vector<4x32xf32>
    %317 = vector.extract_strided_slice %298 {offsets = [0, 96], sizes = [4, 32], strides = [1, 1]} : vector<4x128xf32> to vector<4x32xf32>
    %cst_105 = arith.constant 0.000000e+00 : f32
    %318 = vector.broadcast %cst_105 : f32 to vector<4x32xf32>
    %319 = arith.subf %318, %317 : vector<4x32xf32>
    %320 = math.exp %319 : vector<4x32xf32>
    %cst_106 = arith.constant 1.000000e+00 : f32
    %321 = vector.broadcast %cst_106 : f32 to vector<4x32xf32>
    %322 = arith.addf %321, %320 : vector<4x32xf32>
    %cst_107 = arith.constant 1.000000e+00 : f32
    %323 = vector.broadcast %cst_107 : f32 to vector<4x32xf32>
    %324 = arith.divf %323, %322 : vector<4x32xf32>
    %325 = arith.mulf %314, %255 : vector<4x32xf32>
    %326 = arith.mulf %306, %316 : vector<4x32xf32>
    %327 = arith.addf %325, %326 : vector<4x32xf32>
    %328 = math.tanh %327 : vector<4x32xf32>
    %329 = arith.mulf %324, %328 : vector<4x32xf32>
    %330 = tpu.concatenate %329, %292 in 1 : vector<4x32xf32>, vector<4x32xf32> -> vector<4x64xf32>
    %cst_108 = arith.constant dense<0.000000e+00> : vector<4x128xf32>
    %331 = tpu.matmul %330, %2, %cst_108 {dimension_numbers = #tpu.dot_dimension_numbers<[1], [0], [0], [1], [0, 0, 1, 1], [], []>} : vector<4x64xf32>, vector<64x128xf32>, vector<4x128xf32> -> vector<4x128xf32>
    %332 = vector.broadcast %3 : vector<1x128xf32> to vector<4x128xf32>
    %333 = arith.addf %331, %332 : vector<4x128xf32>
    %334 = vector.extract_strided_slice %333 {offsets = [0, 0], sizes = [4, 32], strides = [1, 1]} : vector<4x128xf32> to vector<4x32xf32>
    %cst_109 = arith.constant 0.000000e+00 : f32
    %335 = vector.broadcast %cst_109 : f32 to vector<4x32xf32>
    %336 = arith.subf %335, %334 : vector<4x32xf32>
    %337 = math.exp %336 : vector<4x32xf32>
    %cst_110 = arith.constant 1.000000e+00 : f32
    %338 = vector.broadcast %cst_110 : f32 to vector<4x32xf32>
    %339 = arith.addf %338, %337 : vector<4x32xf32>
    %cst_111 = arith.constant 1.000000e+00 : f32
    %340 = vector.broadcast %cst_111 : f32 to vector<4x32xf32>
    %341 = arith.divf %340, %339 : vector<4x32xf32>
    %342 = vector.extract_strided_slice %333 {offsets = [0, 32], sizes = [4, 32], strides = [1, 1]} : vector<4x128xf32> to vector<4x32xf32>
    %cst_112 = arith.constant 0.000000e+00 : f32
    %343 = vector.broadcast %cst_112 : f32 to vector<4x32xf32>
    %344 = arith.subf %343, %342 : vector<4x32xf32>
    %345 = math.exp %344 : vector<4x32xf32>
    %cst_113 = arith.constant 1.000000e+00 : f32
    %346 = vector.broadcast %cst_113 : f32 to vector<4x32xf32>
    %347 = arith.addf %346, %345 : vector<4x32xf32>
    %cst_114 = arith.constant 1.000000e+00 : f32
    %348 = vector.broadcast %cst_114 : f32 to vector<4x32xf32>
    %349 = arith.divf %348, %347 : vector<4x32xf32>
    %350 = vector.extract_strided_slice %333 {offsets = [0, 64], sizes = [4, 32], strides = [1, 1]} : vector<4x128xf32> to vector<4x32xf32>
    %351 = math.tanh %350 : vector<4x32xf32>
    %352 = vector.extract_strided_slice %333 {offsets = [0, 96], sizes = [4, 32], strides = [1, 1]} : vector<4x128xf32> to vector<4x32xf32>
    %cst_115 = arith.constant 0.000000e+00 : f32
    %353 = vector.broadcast %cst_115 : f32 to vector<4x32xf32>
    %354 = arith.subf %353, %352 : vector<4x32xf32>
    %355 = math.exp %354 : vector<4x32xf32>
    %cst_116 = arith.constant 1.000000e+00 : f32
    %356 = vector.broadcast %cst_116 : f32 to vector<4x32xf32>
    %357 = arith.addf %356, %355 : vector<4x32xf32>
    %cst_117 = arith.constant 1.000000e+00 : f32
    %358 = vector.broadcast %cst_117 : f32 to vector<4x32xf32>
    %359 = arith.divf %358, %357 : vector<4x32xf32>
    %360 = arith.mulf %349, %290 : vector<4x32xf32>
    %361 = arith.mulf %341, %351 : vector<4x32xf32>
    %362 = arith.addf %360, %361 : vector<4x32xf32>
    %363 = math.tanh %362 : vector<4x32xf32>
    %364 = arith.mulf %359, %363 : vector<4x32xf32>
    %c0_118 = arith.constant 0 : index
    %c5 = arith.constant 5 : index
    %c0_119 = arith.constant 0 : index
    %365 = vector.load %arg0[%c0_118, %c5, %c0_119] : memref<4x8x8xf32, #tpu.memory_space<vmem>>, vector<4x1x8xf32>
    %366 = vector.shape_cast %365 : vector<4x1x8xf32> to vector<4x8xf32>
    %367 = tpu.concatenate %366, %329 in 1 : vector<4x8xf32>, vector<4x32xf32> -> vector<4x40xf32>
    %cst_120 = arith.constant dense<0.000000e+00> : vector<4x128xf32>
    %368 = tpu.matmul %367, %0, %cst_120 {dimension_numbers = #tpu.dot_dimension_numbers<[1], [0], [0], [1], [0, 0, 1, 1], [], []>} : vector<4x40xf32>, vector<40x128xf32>, vector<4x128xf32> -> vector<4x128xf32>
    %369 = vector.broadcast %1 : vector<1x128xf32> to vector<4x128xf32>
    %370 = arith.addf %368, %369 : vector<4x128xf32>
    %371 = vector.extract_strided_slice %370 {offsets = [0, 0], sizes = [4, 32], strides = [1, 1]} : vector<4x128xf32> to vector<4x32xf32>
    %cst_121 = arith.constant 0.000000e+00 : f32
    %372 = vector.broadcast %cst_121 : f32 to vector<4x32xf32>
    %373 = arith.subf %372, %371 : vector<4x32xf32>
    %374 = math.exp %373 : vector<4x32xf32>
    %cst_122 = arith.constant 1.000000e+00 : f32
    %375 = vector.broadcast %cst_122 : f32 to vector<4x32xf32>
    %376 = arith.addf %375, %374 : vector<4x32xf32>
    %cst_123 = arith.constant 1.000000e+00 : f32
    %377 = vector.broadcast %cst_123 : f32 to vector<4x32xf32>
    %378 = arith.divf %377, %376 : vector<4x32xf32>
    %379 = vector.extract_strided_slice %370 {offsets = [0, 32], sizes = [4, 32], strides = [1, 1]} : vector<4x128xf32> to vector<4x32xf32>
    %cst_124 = arith.constant 0.000000e+00 : f32
    %380 = vector.broadcast %cst_124 : f32 to vector<4x32xf32>
    %381 = arith.subf %380, %379 : vector<4x32xf32>
    %382 = math.exp %381 : vector<4x32xf32>
    %cst_125 = arith.constant 1.000000e+00 : f32
    %383 = vector.broadcast %cst_125 : f32 to vector<4x32xf32>
    %384 = arith.addf %383, %382 : vector<4x32xf32>
    %cst_126 = arith.constant 1.000000e+00 : f32
    %385 = vector.broadcast %cst_126 : f32 to vector<4x32xf32>
    %386 = arith.divf %385, %384 : vector<4x32xf32>
    %387 = vector.extract_strided_slice %370 {offsets = [0, 64], sizes = [4, 32], strides = [1, 1]} : vector<4x128xf32> to vector<4x32xf32>
    %388 = math.tanh %387 : vector<4x32xf32>
    %389 = vector.extract_strided_slice %370 {offsets = [0, 96], sizes = [4, 32], strides = [1, 1]} : vector<4x128xf32> to vector<4x32xf32>
    %cst_127 = arith.constant 0.000000e+00 : f32
    %390 = vector.broadcast %cst_127 : f32 to vector<4x32xf32>
    %391 = arith.subf %390, %389 : vector<4x32xf32>
    %392 = math.exp %391 : vector<4x32xf32>
    %cst_128 = arith.constant 1.000000e+00 : f32
    %393 = vector.broadcast %cst_128 : f32 to vector<4x32xf32>
    %394 = arith.addf %393, %392 : vector<4x32xf32>
    %cst_129 = arith.constant 1.000000e+00 : f32
    %395 = vector.broadcast %cst_129 : f32 to vector<4x32xf32>
    %396 = arith.divf %395, %394 : vector<4x32xf32>
    %397 = arith.mulf %386, %327 : vector<4x32xf32>
    %398 = arith.mulf %378, %388 : vector<4x32xf32>
    %399 = arith.addf %397, %398 : vector<4x32xf32>
    %400 = math.tanh %399 : vector<4x32xf32>
    %401 = arith.mulf %396, %400 : vector<4x32xf32>
    %402 = tpu.concatenate %401, %364 in 1 : vector<4x32xf32>, vector<4x32xf32> -> vector<4x64xf32>
    %cst_130 = arith.constant dense<0.000000e+00> : vector<4x128xf32>
    %403 = tpu.matmul %402, %2, %cst_130 {dimension_numbers = #tpu.dot_dimension_numbers<[1], [0], [0], [1], [0, 0, 1, 1], [], []>} : vector<4x64xf32>, vector<64x128xf32>, vector<4x128xf32> -> vector<4x128xf32>
    %404 = vector.broadcast %3 : vector<1x128xf32> to vector<4x128xf32>
    %405 = arith.addf %403, %404 : vector<4x128xf32>
    %406 = vector.extract_strided_slice %405 {offsets = [0, 0], sizes = [4, 32], strides = [1, 1]} : vector<4x128xf32> to vector<4x32xf32>
    %cst_131 = arith.constant 0.000000e+00 : f32
    %407 = vector.broadcast %cst_131 : f32 to vector<4x32xf32>
    %408 = arith.subf %407, %406 : vector<4x32xf32>
    %409 = math.exp %408 : vector<4x32xf32>
    %cst_132 = arith.constant 1.000000e+00 : f32
    %410 = vector.broadcast %cst_132 : f32 to vector<4x32xf32>
    %411 = arith.addf %410, %409 : vector<4x32xf32>
    %cst_133 = arith.constant 1.000000e+00 : f32
    %412 = vector.broadcast %cst_133 : f32 to vector<4x32xf32>
    %413 = arith.divf %412, %411 : vector<4x32xf32>
    %414 = vector.extract_strided_slice %405 {offsets = [0, 32], sizes = [4, 32], strides = [1, 1]} : vector<4x128xf32> to vector<4x32xf32>
    %cst_134 = arith.constant 0.000000e+00 : f32
    %415 = vector.broadcast %cst_134 : f32 to vector<4x32xf32>
    %416 = arith.subf %415, %414 : vector<4x32xf32>
    %417 = math.exp %416 : vector<4x32xf32>
    %cst_135 = arith.constant 1.000000e+00 : f32
    %418 = vector.broadcast %cst_135 : f32 to vector<4x32xf32>
    %419 = arith.addf %418, %417 : vector<4x32xf32>
    %cst_136 = arith.constant 1.000000e+00 : f32
    %420 = vector.broadcast %cst_136 : f32 to vector<4x32xf32>
    %421 = arith.divf %420, %419 : vector<4x32xf32>
    %422 = vector.extract_strided_slice %405 {offsets = [0, 64], sizes = [4, 32], strides = [1, 1]} : vector<4x128xf32> to vector<4x32xf32>
    %423 = math.tanh %422 : vector<4x32xf32>
    %424 = vector.extract_strided_slice %405 {offsets = [0, 96], sizes = [4, 32], strides = [1, 1]} : vector<4x128xf32> to vector<4x32xf32>
    %cst_137 = arith.constant 0.000000e+00 : f32
    %425 = vector.broadcast %cst_137 : f32 to vector<4x32xf32>
    %426 = arith.subf %425, %424 : vector<4x32xf32>
    %427 = math.exp %426 : vector<4x32xf32>
    %cst_138 = arith.constant 1.000000e+00 : f32
    %428 = vector.broadcast %cst_138 : f32 to vector<4x32xf32>
    %429 = arith.addf %428, %427 : vector<4x32xf32>
    %cst_139 = arith.constant 1.000000e+00 : f32
    %430 = vector.broadcast %cst_139 : f32 to vector<4x32xf32>
    %431 = arith.divf %430, %429 : vector<4x32xf32>
    %432 = arith.mulf %421, %362 : vector<4x32xf32>
    %433 = arith.mulf %413, %423 : vector<4x32xf32>
    %434 = arith.addf %432, %433 : vector<4x32xf32>
    %435 = math.tanh %434 : vector<4x32xf32>
    %436 = arith.mulf %431, %435 : vector<4x32xf32>
    %c0_140 = arith.constant 0 : index
    %c6 = arith.constant 6 : index
    %c0_141 = arith.constant 0 : index
    %437 = vector.load %arg0[%c0_140, %c6, %c0_141] : memref<4x8x8xf32, #tpu.memory_space<vmem>>, vector<4x1x8xf32>
    %438 = vector.shape_cast %437 : vector<4x1x8xf32> to vector<4x8xf32>
    %439 = tpu.concatenate %438, %401 in 1 : vector<4x8xf32>, vector<4x32xf32> -> vector<4x40xf32>
    %cst_142 = arith.constant dense<0.000000e+00> : vector<4x128xf32>
    %440 = tpu.matmul %439, %0, %cst_142 {dimension_numbers = #tpu.dot_dimension_numbers<[1], [0], [0], [1], [0, 0, 1, 1], [], []>} : vector<4x40xf32>, vector<40x128xf32>, vector<4x128xf32> -> vector<4x128xf32>
    %441 = vector.broadcast %1 : vector<1x128xf32> to vector<4x128xf32>
    %442 = arith.addf %440, %441 : vector<4x128xf32>
    %443 = vector.extract_strided_slice %442 {offsets = [0, 0], sizes = [4, 32], strides = [1, 1]} : vector<4x128xf32> to vector<4x32xf32>
    %cst_143 = arith.constant 0.000000e+00 : f32
    %444 = vector.broadcast %cst_143 : f32 to vector<4x32xf32>
    %445 = arith.subf %444, %443 : vector<4x32xf32>
    %446 = math.exp %445 : vector<4x32xf32>
    %cst_144 = arith.constant 1.000000e+00 : f32
    %447 = vector.broadcast %cst_144 : f32 to vector<4x32xf32>
    %448 = arith.addf %447, %446 : vector<4x32xf32>
    %cst_145 = arith.constant 1.000000e+00 : f32
    %449 = vector.broadcast %cst_145 : f32 to vector<4x32xf32>
    %450 = arith.divf %449, %448 : vector<4x32xf32>
    %451 = vector.extract_strided_slice %442 {offsets = [0, 32], sizes = [4, 32], strides = [1, 1]} : vector<4x128xf32> to vector<4x32xf32>
    %cst_146 = arith.constant 0.000000e+00 : f32
    %452 = vector.broadcast %cst_146 : f32 to vector<4x32xf32>
    %453 = arith.subf %452, %451 : vector<4x32xf32>
    %454 = math.exp %453 : vector<4x32xf32>
    %cst_147 = arith.constant 1.000000e+00 : f32
    %455 = vector.broadcast %cst_147 : f32 to vector<4x32xf32>
    %456 = arith.addf %455, %454 : vector<4x32xf32>
    %cst_148 = arith.constant 1.000000e+00 : f32
    %457 = vector.broadcast %cst_148 : f32 to vector<4x32xf32>
    %458 = arith.divf %457, %456 : vector<4x32xf32>
    %459 = vector.extract_strided_slice %442 {offsets = [0, 64], sizes = [4, 32], strides = [1, 1]} : vector<4x128xf32> to vector<4x32xf32>
    %460 = math.tanh %459 : vector<4x32xf32>
    %461 = vector.extract_strided_slice %442 {offsets = [0, 96], sizes = [4, 32], strides = [1, 1]} : vector<4x128xf32> to vector<4x32xf32>
    %cst_149 = arith.constant 0.000000e+00 : f32
    %462 = vector.broadcast %cst_149 : f32 to vector<4x32xf32>
    %463 = arith.subf %462, %461 : vector<4x32xf32>
    %464 = math.exp %463 : vector<4x32xf32>
    %cst_150 = arith.constant 1.000000e+00 : f32
    %465 = vector.broadcast %cst_150 : f32 to vector<4x32xf32>
    %466 = arith.addf %465, %464 : vector<4x32xf32>
    %cst_151 = arith.constant 1.000000e+00 : f32
    %467 = vector.broadcast %cst_151 : f32 to vector<4x32xf32>
    %468 = arith.divf %467, %466 : vector<4x32xf32>
    %469 = arith.mulf %458, %399 : vector<4x32xf32>
    %470 = arith.mulf %450, %460 : vector<4x32xf32>
    %471 = arith.addf %469, %470 : vector<4x32xf32>
    %472 = math.tanh %471 : vector<4x32xf32>
    %473 = arith.mulf %468, %472 : vector<4x32xf32>
    %474 = tpu.concatenate %473, %436 in 1 : vector<4x32xf32>, vector<4x32xf32> -> vector<4x64xf32>
    %cst_152 = arith.constant dense<0.000000e+00> : vector<4x128xf32>
    %475 = tpu.matmul %474, %2, %cst_152 {dimension_numbers = #tpu.dot_dimension_numbers<[1], [0], [0], [1], [0, 0, 1, 1], [], []>} : vector<4x64xf32>, vector<64x128xf32>, vector<4x128xf32> -> vector<4x128xf32>
    %476 = vector.broadcast %3 : vector<1x128xf32> to vector<4x128xf32>
    %477 = arith.addf %475, %476 : vector<4x128xf32>
    %478 = vector.extract_strided_slice %477 {offsets = [0, 0], sizes = [4, 32], strides = [1, 1]} : vector<4x128xf32> to vector<4x32xf32>
    %cst_153 = arith.constant 0.000000e+00 : f32
    %479 = vector.broadcast %cst_153 : f32 to vector<4x32xf32>
    %480 = arith.subf %479, %478 : vector<4x32xf32>
    %481 = math.exp %480 : vector<4x32xf32>
    %cst_154 = arith.constant 1.000000e+00 : f32
    %482 = vector.broadcast %cst_154 : f32 to vector<4x32xf32>
    %483 = arith.addf %482, %481 : vector<4x32xf32>
    %cst_155 = arith.constant 1.000000e+00 : f32
    %484 = vector.broadcast %cst_155 : f32 to vector<4x32xf32>
    %485 = arith.divf %484, %483 : vector<4x32xf32>
    %486 = vector.extract_strided_slice %477 {offsets = [0, 32], sizes = [4, 32], strides = [1, 1]} : vector<4x128xf32> to vector<4x32xf32>
    %cst_156 = arith.constant 0.000000e+00 : f32
    %487 = vector.broadcast %cst_156 : f32 to vector<4x32xf32>
    %488 = arith.subf %487, %486 : vector<4x32xf32>
    %489 = math.exp %488 : vector<4x32xf32>
    %cst_157 = arith.constant 1.000000e+00 : f32
    %490 = vector.broadcast %cst_157 : f32 to vector<4x32xf32>
    %491 = arith.addf %490, %489 : vector<4x32xf32>
    %cst_158 = arith.constant 1.000000e+00 : f32
    %492 = vector.broadcast %cst_158 : f32 to vector<4x32xf32>
    %493 = arith.divf %492, %491 : vector<4x32xf32>
    %494 = vector.extract_strided_slice %477 {offsets = [0, 64], sizes = [4, 32], strides = [1, 1]} : vector<4x128xf32> to vector<4x32xf32>
    %495 = math.tanh %494 : vector<4x32xf32>
    %496 = vector.extract_strided_slice %477 {offsets = [0, 96], sizes = [4, 32], strides = [1, 1]} : vector<4x128xf32> to vector<4x32xf32>
    %cst_159 = arith.constant 0.000000e+00 : f32
    %497 = vector.broadcast %cst_159 : f32 to vector<4x32xf32>
    %498 = arith.subf %497, %496 : vector<4x32xf32>
    %499 = math.exp %498 : vector<4x32xf32>
    %cst_160 = arith.constant 1.000000e+00 : f32
    %500 = vector.broadcast %cst_160 : f32 to vector<4x32xf32>
    %501 = arith.addf %500, %499 : vector<4x32xf32>
    %cst_161 = arith.constant 1.000000e+00 : f32
    %502 = vector.broadcast %cst_161 : f32 to vector<4x32xf32>
    %503 = arith.divf %502, %501 : vector<4x32xf32>
    %504 = arith.mulf %493, %434 : vector<4x32xf32>
    %505 = arith.mulf %485, %495 : vector<4x32xf32>
    %506 = arith.addf %504, %505 : vector<4x32xf32>
    %507 = math.tanh %506 : vector<4x32xf32>
    %508 = arith.mulf %503, %507 : vector<4x32xf32>
    %c0_162 = arith.constant 0 : index
    %c7 = arith.constant 7 : index
    %c0_163 = arith.constant 0 : index
    %509 = vector.load %arg0[%c0_162, %c7, %c0_163] : memref<4x8x8xf32, #tpu.memory_space<vmem>>, vector<4x1x8xf32>
    %510 = vector.shape_cast %509 : vector<4x1x8xf32> to vector<4x8xf32>
    %511 = tpu.concatenate %510, %473 in 1 : vector<4x8xf32>, vector<4x32xf32> -> vector<4x40xf32>
    %cst_164 = arith.constant dense<0.000000e+00> : vector<4x128xf32>
    %512 = tpu.matmul %511, %0, %cst_164 {dimension_numbers = #tpu.dot_dimension_numbers<[1], [0], [0], [1], [0, 0, 1, 1], [], []>} : vector<4x40xf32>, vector<40x128xf32>, vector<4x128xf32> -> vector<4x128xf32>
    %513 = vector.broadcast %1 : vector<1x128xf32> to vector<4x128xf32>
    %514 = arith.addf %512, %513 : vector<4x128xf32>
    %515 = vector.extract_strided_slice %514 {offsets = [0, 0], sizes = [4, 32], strides = [1, 1]} : vector<4x128xf32> to vector<4x32xf32>
    %cst_165 = arith.constant 0.000000e+00 : f32
    %516 = vector.broadcast %cst_165 : f32 to vector<4x32xf32>
    %517 = arith.subf %516, %515 : vector<4x32xf32>
    %518 = math.exp %517 : vector<4x32xf32>
    %cst_166 = arith.constant 1.000000e+00 : f32
    %519 = vector.broadcast %cst_166 : f32 to vector<4x32xf32>
    %520 = arith.addf %519, %518 : vector<4x32xf32>
    %cst_167 = arith.constant 1.000000e+00 : f32
    %521 = vector.broadcast %cst_167 : f32 to vector<4x32xf32>
    %522 = arith.divf %521, %520 : vector<4x32xf32>
    %523 = vector.extract_strided_slice %514 {offsets = [0, 32], sizes = [4, 32], strides = [1, 1]} : vector<4x128xf32> to vector<4x32xf32>
    %cst_168 = arith.constant 0.000000e+00 : f32
    %524 = vector.broadcast %cst_168 : f32 to vector<4x32xf32>
    %525 = arith.subf %524, %523 : vector<4x32xf32>
    %526 = math.exp %525 : vector<4x32xf32>
    %cst_169 = arith.constant 1.000000e+00 : f32
    %527 = vector.broadcast %cst_169 : f32 to vector<4x32xf32>
    %528 = arith.addf %527, %526 : vector<4x32xf32>
    %cst_170 = arith.constant 1.000000e+00 : f32
    %529 = vector.broadcast %cst_170 : f32 to vector<4x32xf32>
    %530 = arith.divf %529, %528 : vector<4x32xf32>
    %531 = vector.extract_strided_slice %514 {offsets = [0, 64], sizes = [4, 32], strides = [1, 1]} : vector<4x128xf32> to vector<4x32xf32>
    %532 = math.tanh %531 : vector<4x32xf32>
    %533 = vector.extract_strided_slice %514 {offsets = [0, 96], sizes = [4, 32], strides = [1, 1]} : vector<4x128xf32> to vector<4x32xf32>
    %cst_171 = arith.constant 0.000000e+00 : f32
    %534 = vector.broadcast %cst_171 : f32 to vector<4x32xf32>
    %535 = arith.subf %534, %533 : vector<4x32xf32>
    %536 = math.exp %535 : vector<4x32xf32>
    %cst_172 = arith.constant 1.000000e+00 : f32
    %537 = vector.broadcast %cst_172 : f32 to vector<4x32xf32>
    %538 = arith.addf %537, %536 : vector<4x32xf32>
    %cst_173 = arith.constant 1.000000e+00 : f32
    %539 = vector.broadcast %cst_173 : f32 to vector<4x32xf32>
    %540 = arith.divf %539, %538 : vector<4x32xf32>
    %541 = arith.mulf %530, %471 : vector<4x32xf32>
    %542 = arith.mulf %522, %532 : vector<4x32xf32>
    %543 = arith.addf %541, %542 : vector<4x32xf32>
    %544 = math.tanh %543 : vector<4x32xf32>
    %545 = arith.mulf %540, %544 : vector<4x32xf32>
    %546 = tpu.concatenate %545, %508 in 1 : vector<4x32xf32>, vector<4x32xf32> -> vector<4x64xf32>
    %cst_174 = arith.constant dense<0.000000e+00> : vector<4x128xf32>
    %547 = tpu.matmul %546, %2, %cst_174 {dimension_numbers = #tpu.dot_dimension_numbers<[1], [0], [0], [1], [0, 0, 1, 1], [], []>} : vector<4x64xf32>, vector<64x128xf32>, vector<4x128xf32> -> vector<4x128xf32>
    %548 = vector.broadcast %3 : vector<1x128xf32> to vector<4x128xf32>
    %549 = arith.addf %547, %548 : vector<4x128xf32>
    %550 = vector.extract_strided_slice %549 {offsets = [0, 0], sizes = [4, 32], strides = [1, 1]} : vector<4x128xf32> to vector<4x32xf32>
    %cst_175 = arith.constant 0.000000e+00 : f32
    %551 = vector.broadcast %cst_175 : f32 to vector<4x32xf32>
    %552 = arith.subf %551, %550 : vector<4x32xf32>
    %553 = math.exp %552 : vector<4x32xf32>
    %cst_176 = arith.constant 1.000000e+00 : f32
    %554 = vector.broadcast %cst_176 : f32 to vector<4x32xf32>
    %555 = arith.addf %554, %553 : vector<4x32xf32>
    %cst_177 = arith.constant 1.000000e+00 : f32
    %556 = vector.broadcast %cst_177 : f32 to vector<4x32xf32>
    %557 = arith.divf %556, %555 : vector<4x32xf32>
    %558 = vector.extract_strided_slice %549 {offsets = [0, 32], sizes = [4, 32], strides = [1, 1]} : vector<4x128xf32> to vector<4x32xf32>
    %cst_178 = arith.constant 0.000000e+00 : f32
    %559 = vector.broadcast %cst_178 : f32 to vector<4x32xf32>
    %560 = arith.subf %559, %558 : vector<4x32xf32>
    %561 = math.exp %560 : vector<4x32xf32>
    %cst_179 = arith.constant 1.000000e+00 : f32
    %562 = vector.broadcast %cst_179 : f32 to vector<4x32xf32>
    %563 = arith.addf %562, %561 : vector<4x32xf32>
    %cst_180 = arith.constant 1.000000e+00 : f32
    %564 = vector.broadcast %cst_180 : f32 to vector<4x32xf32>
    %565 = arith.divf %564, %563 : vector<4x32xf32>
    %566 = vector.extract_strided_slice %549 {offsets = [0, 64], sizes = [4, 32], strides = [1, 1]} : vector<4x128xf32> to vector<4x32xf32>
    %567 = math.tanh %566 : vector<4x32xf32>
    %568 = vector.extract_strided_slice %549 {offsets = [0, 96], sizes = [4, 32], strides = [1, 1]} : vector<4x128xf32> to vector<4x32xf32>
    %cst_181 = arith.constant 0.000000e+00 : f32
    %569 = vector.broadcast %cst_181 : f32 to vector<4x32xf32>
    %570 = arith.subf %569, %568 : vector<4x32xf32>
    %571 = math.exp %570 : vector<4x32xf32>
    %cst_182 = arith.constant 1.000000e+00 : f32
    %572 = vector.broadcast %cst_182 : f32 to vector<4x32xf32>
    %573 = arith.addf %572, %571 : vector<4x32xf32>
    %cst_183 = arith.constant 1.000000e+00 : f32
    %574 = vector.broadcast %cst_183 : f32 to vector<4x32xf32>
    %575 = arith.divf %574, %573 : vector<4x32xf32>
    %576 = arith.mulf %565, %506 : vector<4x32xf32>
    %577 = arith.mulf %557, %567 : vector<4x32xf32>
    %578 = arith.addf %576, %577 : vector<4x32xf32>
    %579 = math.tanh %578 : vector<4x32xf32>
    %580 = arith.mulf %575, %579 : vector<4x32xf32>
    %c0_184 = arith.constant 0 : index
    %c0_185 = arith.constant 0 : index
    %581 = vector.load %arg5[%c0_184, %c0_185] : memref<32x96xf32, #tpu.memory_space<vmem>>, vector<32x96xf32>
    %cst_186 = arith.constant dense<0.000000e+00> : vector<4x96xf32>
    %582 = tpu.matmul %580, %581, %cst_186 {dimension_numbers = #tpu.dot_dimension_numbers<[1], [0], [0], [1], [0, 0, 1, 1], [], []>} : vector<4x32xf32>, vector<32x96xf32>, vector<4x96xf32> -> vector<4x96xf32>
    %c0_187 = arith.constant 0 : index
    %c0_188 = arith.constant 0 : index
    %583 = vector.load %arg6[%c0_187, %c0_188] : memref<1x96xf32, #tpu.memory_space<vmem>>, vector<1x96xf32>
    %584 = vector.broadcast %583 : vector<1x96xf32> to vector<4x96xf32>
    %585 = arith.addf %582, %584 : vector<4x96xf32>
    %586 = vector.extract_strided_slice %585 {offsets = [0, 0], sizes = [4, 4], strides = [1, 1]} : vector<4x96xf32> to vector<4x4xf32>
    %587 = vector.extract_strided_slice %585 {offsets = [0, 32], sizes = [4, 4], strides = [1, 1]} : vector<4x96xf32> to vector<4x4xf32>
    %588 = vector.extract_strided_slice %585 {offsets = [0, 64], sizes = [4, 4], strides = [1, 1]} : vector<4x96xf32> to vector<4x4xf32>
    %cst_189 = arith.constant dense<0.000000e+00> : vector<4x4xf32>
    %589 = tpu.matmul %586, %587, %cst_189 {dimension_numbers = #tpu.dot_dimension_numbers<[1], [1], [0], [0], [0, 0, 1, 0], [], []>} : vector<4x4xf32>, vector<4x4xf32>, vector<4x4xf32> -> vector<4x4xf32>
    %cst_190 = arith.constant 5.000000e-01 : f32
    %590 = vector.broadcast %cst_190 : f32 to vector<4x4xf32>
    %591 = arith.mulf %589, %590 : vector<4x4xf32>
    %cst_191 = arith.constant dense<0xFF800000> : vector<4xf32>
    %592 = vector.multi_reduction <maximumf>, %591, %cst_191 [1] : vector<4x4xf32> to vector<4xf32>
    %593 = vector.shape_cast %592 : vector<4xf32> to vector<4x1xf32>
    %594 = vector.broadcast %593 : vector<4x1xf32> to vector<4x4xf32>
    %595 = arith.subf %591, %594 : vector<4x4xf32>
    %596 = math.exp %595 : vector<4x4xf32>
    %cst_192 = arith.constant dense<0.000000e+00> : vector<4xf32>
    %597 = vector.multi_reduction <add>, %596, %cst_192 [1] : vector<4x4xf32> to vector<4xf32>
    %598 = vector.shape_cast %597 : vector<4xf32> to vector<4x1xf32>
    %599 = tpu.reciprocal %598 {approx = true} : vector<4x1xf32> -> vector<4x1xf32>
    %600 = vector.broadcast %599 : vector<4x1xf32> to vector<4x4xf32>
    %601 = arith.mulf %596, %600 : vector<4x4xf32>
    %cst_193 = arith.constant dense<0.000000e+00> : vector<4x4xf32>
    %602 = tpu.matmul %601, %588, %cst_193 {dimension_numbers = #tpu.dot_dimension_numbers<[1], [0], [0], [1], [0, 0, 1, 1], [], []>} : vector<4x4xf32>, vector<4x4xf32>, vector<4x4xf32> -> vector<4x4xf32>
    %603 = vector.extract_strided_slice %585 {offsets = [0, 4], sizes = [4, 4], strides = [1, 1]} : vector<4x96xf32> to vector<4x4xf32>
    %604 = vector.extract_strided_slice %585 {offsets = [0, 36], sizes = [4, 4], strides = [1, 1]} : vector<4x96xf32> to vector<4x4xf32>
    %605 = vector.extract_strided_slice %585 {offsets = [0, 68], sizes = [4, 4], strides = [1, 1]} : vector<4x96xf32> to vector<4x4xf32>
    %cst_194 = arith.constant dense<0.000000e+00> : vector<4x4xf32>
    %606 = tpu.matmul %603, %604, %cst_194 {dimension_numbers = #tpu.dot_dimension_numbers<[1], [1], [0], [0], [0, 0, 1, 0], [], []>} : vector<4x4xf32>, vector<4x4xf32>, vector<4x4xf32> -> vector<4x4xf32>
    %cst_195 = arith.constant 5.000000e-01 : f32
    %607 = vector.broadcast %cst_195 : f32 to vector<4x4xf32>
    %608 = arith.mulf %606, %607 : vector<4x4xf32>
    %cst_196 = arith.constant dense<0xFF800000> : vector<4xf32>
    %609 = vector.multi_reduction <maximumf>, %608, %cst_196 [1] : vector<4x4xf32> to vector<4xf32>
    %610 = vector.shape_cast %609 : vector<4xf32> to vector<4x1xf32>
    %611 = vector.broadcast %610 : vector<4x1xf32> to vector<4x4xf32>
    %612 = arith.subf %608, %611 : vector<4x4xf32>
    %613 = math.exp %612 : vector<4x4xf32>
    %cst_197 = arith.constant dense<0.000000e+00> : vector<4xf32>
    %614 = vector.multi_reduction <add>, %613, %cst_197 [1] : vector<4x4xf32> to vector<4xf32>
    %615 = vector.shape_cast %614 : vector<4xf32> to vector<4x1xf32>
    %616 = tpu.reciprocal %615 {approx = true} : vector<4x1xf32> -> vector<4x1xf32>
    %617 = vector.broadcast %616 : vector<4x1xf32> to vector<4x4xf32>
    %618 = arith.mulf %613, %617 : vector<4x4xf32>
    %cst_198 = arith.constant dense<0.000000e+00> : vector<4x4xf32>
    %619 = tpu.matmul %618, %605, %cst_198 {dimension_numbers = #tpu.dot_dimension_numbers<[1], [0], [0], [1], [0, 0, 1, 1], [], []>} : vector<4x4xf32>, vector<4x4xf32>, vector<4x4xf32> -> vector<4x4xf32>
    %620 = vector.extract_strided_slice %585 {offsets = [0, 8], sizes = [4, 4], strides = [1, 1]} : vector<4x96xf32> to vector<4x4xf32>
    %621 = vector.extract_strided_slice %585 {offsets = [0, 40], sizes = [4, 4], strides = [1, 1]} : vector<4x96xf32> to vector<4x4xf32>
    %622 = vector.extract_strided_slice %585 {offsets = [0, 72], sizes = [4, 4], strides = [1, 1]} : vector<4x96xf32> to vector<4x4xf32>
    %cst_199 = arith.constant dense<0.000000e+00> : vector<4x4xf32>
    %623 = tpu.matmul %620, %621, %cst_199 {dimension_numbers = #tpu.dot_dimension_numbers<[1], [1], [0], [0], [0, 0, 1, 0], [], []>} : vector<4x4xf32>, vector<4x4xf32>, vector<4x4xf32> -> vector<4x4xf32>
    %cst_200 = arith.constant 5.000000e-01 : f32
    %624 = vector.broadcast %cst_200 : f32 to vector<4x4xf32>
    %625 = arith.mulf %623, %624 : vector<4x4xf32>
    %cst_201 = arith.constant dense<0xFF800000> : vector<4xf32>
    %626 = vector.multi_reduction <maximumf>, %625, %cst_201 [1] : vector<4x4xf32> to vector<4xf32>
    %627 = vector.shape_cast %626 : vector<4xf32> to vector<4x1xf32>
    %628 = vector.broadcast %627 : vector<4x1xf32> to vector<4x4xf32>
    %629 = arith.subf %625, %628 : vector<4x4xf32>
    %630 = math.exp %629 : vector<4x4xf32>
    %cst_202 = arith.constant dense<0.000000e+00> : vector<4xf32>
    %631 = vector.multi_reduction <add>, %630, %cst_202 [1] : vector<4x4xf32> to vector<4xf32>
    %632 = vector.shape_cast %631 : vector<4xf32> to vector<4x1xf32>
    %633 = tpu.reciprocal %632 {approx = true} : vector<4x1xf32> -> vector<4x1xf32>
    %634 = vector.broadcast %633 : vector<4x1xf32> to vector<4x4xf32>
    %635 = arith.mulf %630, %634 : vector<4x4xf32>
    %cst_203 = arith.constant dense<0.000000e+00> : vector<4x4xf32>
    %636 = tpu.matmul %635, %622, %cst_203 {dimension_numbers = #tpu.dot_dimension_numbers<[1], [0], [0], [1], [0, 0, 1, 1], [], []>} : vector<4x4xf32>, vector<4x4xf32>, vector<4x4xf32> -> vector<4x4xf32>
    %637 = vector.extract_strided_slice %585 {offsets = [0, 12], sizes = [4, 4], strides = [1, 1]} : vector<4x96xf32> to vector<4x4xf32>
    %638 = vector.extract_strided_slice %585 {offsets = [0, 44], sizes = [4, 4], strides = [1, 1]} : vector<4x96xf32> to vector<4x4xf32>
    %639 = vector.extract_strided_slice %585 {offsets = [0, 76], sizes = [4, 4], strides = [1, 1]} : vector<4x96xf32> to vector<4x4xf32>
    %cst_204 = arith.constant dense<0.000000e+00> : vector<4x4xf32>
    %640 = tpu.matmul %637, %638, %cst_204 {dimension_numbers = #tpu.dot_dimension_numbers<[1], [1], [0], [0], [0, 0, 1, 0], [], []>} : vector<4x4xf32>, vector<4x4xf32>, vector<4x4xf32> -> vector<4x4xf32>
    %cst_205 = arith.constant 5.000000e-01 : f32
    %641 = vector.broadcast %cst_205 : f32 to vector<4x4xf32>
    %642 = arith.mulf %640, %641 : vector<4x4xf32>
    %cst_206 = arith.constant dense<0xFF800000> : vector<4xf32>
    %643 = vector.multi_reduction <maximumf>, %642, %cst_206 [1] : vector<4x4xf32> to vector<4xf32>
    %644 = vector.shape_cast %643 : vector<4xf32> to vector<4x1xf32>
    %645 = vector.broadcast %644 : vector<4x1xf32> to vector<4x4xf32>
    %646 = arith.subf %642, %645 : vector<4x4xf32>
    %647 = math.exp %646 : vector<4x4xf32>
    %cst_207 = arith.constant dense<0.000000e+00> : vector<4xf32>
    %648 = vector.multi_reduction <add>, %647, %cst_207 [1] : vector<4x4xf32> to vector<4xf32>
    %649 = vector.shape_cast %648 : vector<4xf32> to vector<4x1xf32>
    %650 = tpu.reciprocal %649 {approx = true} : vector<4x1xf32> -> vector<4x1xf32>
    %651 = vector.broadcast %650 : vector<4x1xf32> to vector<4x4xf32>
    %652 = arith.mulf %647, %651 : vector<4x4xf32>
    %cst_208 = arith.constant dense<0.000000e+00> : vector<4x4xf32>
    %653 = tpu.matmul %652, %639, %cst_208 {dimension_numbers = #tpu.dot_dimension_numbers<[1], [0], [0], [1], [0, 0, 1, 1], [], []>} : vector<4x4xf32>, vector<4x4xf32>, vector<4x4xf32> -> vector<4x4xf32>
    %654 = vector.extract_strided_slice %585 {offsets = [0, 16], sizes = [4, 4], strides = [1, 1]} : vector<4x96xf32> to vector<4x4xf32>
    %655 = vector.extract_strided_slice %585 {offsets = [0, 48], sizes = [4, 4], strides = [1, 1]} : vector<4x96xf32> to vector<4x4xf32>
    %656 = vector.extract_strided_slice %585 {offsets = [0, 80], sizes = [4, 4], strides = [1, 1]} : vector<4x96xf32> to vector<4x4xf32>
    %cst_209 = arith.constant dense<0.000000e+00> : vector<4x4xf32>
    %657 = tpu.matmul %654, %655, %cst_209 {dimension_numbers = #tpu.dot_dimension_numbers<[1], [1], [0], [0], [0, 0, 1, 0], [], []>} : vector<4x4xf32>, vector<4x4xf32>, vector<4x4xf32> -> vector<4x4xf32>
    %cst_210 = arith.constant 5.000000e-01 : f32
    %658 = vector.broadcast %cst_210 : f32 to vector<4x4xf32>
    %659 = arith.mulf %657, %658 : vector<4x4xf32>
    %cst_211 = arith.constant dense<0xFF800000> : vector<4xf32>
    %660 = vector.multi_reduction <maximumf>, %659, %cst_211 [1] : vector<4x4xf32> to vector<4xf32>
    %661 = vector.shape_cast %660 : vector<4xf32> to vector<4x1xf32>
    %662 = vector.broadcast %661 : vector<4x1xf32> to vector<4x4xf32>
    %663 = arith.subf %659, %662 : vector<4x4xf32>
    %664 = math.exp %663 : vector<4x4xf32>
    %cst_212 = arith.constant dense<0.000000e+00> : vector<4xf32>
    %665 = vector.multi_reduction <add>, %664, %cst_212 [1] : vector<4x4xf32> to vector<4xf32>
    %666 = vector.shape_cast %665 : vector<4xf32> to vector<4x1xf32>
    %667 = tpu.reciprocal %666 {approx = true} : vector<4x1xf32> -> vector<4x1xf32>
    %668 = vector.broadcast %667 : vector<4x1xf32> to vector<4x4xf32>
    %669 = arith.mulf %664, %668 : vector<4x4xf32>
    %cst_213 = arith.constant dense<0.000000e+00> : vector<4x4xf32>
    %670 = tpu.matmul %669, %656, %cst_213 {dimension_numbers = #tpu.dot_dimension_numbers<[1], [0], [0], [1], [0, 0, 1, 1], [], []>} : vector<4x4xf32>, vector<4x4xf32>, vector<4x4xf32> -> vector<4x4xf32>
    %671 = vector.extract_strided_slice %585 {offsets = [0, 20], sizes = [4, 4], strides = [1, 1]} : vector<4x96xf32> to vector<4x4xf32>
    %672 = vector.extract_strided_slice %585 {offsets = [0, 52], sizes = [4, 4], strides = [1, 1]} : vector<4x96xf32> to vector<4x4xf32>
    %673 = vector.extract_strided_slice %585 {offsets = [0, 84], sizes = [4, 4], strides = [1, 1]} : vector<4x96xf32> to vector<4x4xf32>
    %cst_214 = arith.constant dense<0.000000e+00> : vector<4x4xf32>
    %674 = tpu.matmul %671, %672, %cst_214 {dimension_numbers = #tpu.dot_dimension_numbers<[1], [1], [0], [0], [0, 0, 1, 0], [], []>} : vector<4x4xf32>, vector<4x4xf32>, vector<4x4xf32> -> vector<4x4xf32>
    %cst_215 = arith.constant 5.000000e-01 : f32
    %675 = vector.broadcast %cst_215 : f32 to vector<4x4xf32>
    %676 = arith.mulf %674, %675 : vector<4x4xf32>
    %cst_216 = arith.constant dense<0xFF800000> : vector<4xf32>
    %677 = vector.multi_reduction <maximumf>, %676, %cst_216 [1] : vector<4x4xf32> to vector<4xf32>
    %678 = vector.shape_cast %677 : vector<4xf32> to vector<4x1xf32>
    %679 = vector.broadcast %678 : vector<4x1xf32> to vector<4x4xf32>
    %680 = arith.subf %676, %679 : vector<4x4xf32>
    %681 = math.exp %680 : vector<4x4xf32>
    %cst_217 = arith.constant dense<0.000000e+00> : vector<4xf32>
    %682 = vector.multi_reduction <add>, %681, %cst_217 [1] : vector<4x4xf32> to vector<4xf32>
    %683 = vector.shape_cast %682 : vector<4xf32> to vector<4x1xf32>
    %684 = tpu.reciprocal %683 {approx = true} : vector<4x1xf32> -> vector<4x1xf32>
    %685 = vector.broadcast %684 : vector<4x1xf32> to vector<4x4xf32>
    %686 = arith.mulf %681, %685 : vector<4x4xf32>
    %cst_218 = arith.constant dense<0.000000e+00> : vector<4x4xf32>
    %687 = tpu.matmul %686, %673, %cst_218 {dimension_numbers = #tpu.dot_dimension_numbers<[1], [0], [0], [1], [0, 0, 1, 1], [], []>} : vector<4x4xf32>, vector<4x4xf32>, vector<4x4xf32> -> vector<4x4xf32>
    %688 = vector.extract_strided_slice %585 {offsets = [0, 24], sizes = [4, 4], strides = [1, 1]} : vector<4x96xf32> to vector<4x4xf32>
    %689 = vector.extract_strided_slice %585 {offsets = [0, 56], sizes = [4, 4], strides = [1, 1]} : vector<4x96xf32> to vector<4x4xf32>
    %690 = vector.extract_strided_slice %585 {offsets = [0, 88], sizes = [4, 4], strides = [1, 1]} : vector<4x96xf32> to vector<4x4xf32>
    %cst_219 = arith.constant dense<0.000000e+00> : vector<4x4xf32>
    %691 = tpu.matmul %688, %689, %cst_219 {dimension_numbers = #tpu.dot_dimension_numbers<[1], [1], [0], [0], [0, 0, 1, 0], [], []>} : vector<4x4xf32>, vector<4x4xf32>, vector<4x4xf32> -> vector<4x4xf32>
    %cst_220 = arith.constant 5.000000e-01 : f32
    %692 = vector.broadcast %cst_220 : f32 to vector<4x4xf32>
    %693 = arith.mulf %691, %692 : vector<4x4xf32>
    %cst_221 = arith.constant dense<0xFF800000> : vector<4xf32>
    %694 = vector.multi_reduction <maximumf>, %693, %cst_221 [1] : vector<4x4xf32> to vector<4xf32>
    %695 = vector.shape_cast %694 : vector<4xf32> to vector<4x1xf32>
    %696 = vector.broadcast %695 : vector<4x1xf32> to vector<4x4xf32>
    %697 = arith.subf %693, %696 : vector<4x4xf32>
    %698 = math.exp %697 : vector<4x4xf32>
    %cst_222 = arith.constant dense<0.000000e+00> : vector<4xf32>
    %699 = vector.multi_reduction <add>, %698, %cst_222 [1] : vector<4x4xf32> to vector<4xf32>
    %700 = vector.shape_cast %699 : vector<4xf32> to vector<4x1xf32>
    %701 = tpu.reciprocal %700 {approx = true} : vector<4x1xf32> -> vector<4x1xf32>
    %702 = vector.broadcast %701 : vector<4x1xf32> to vector<4x4xf32>
    %703 = arith.mulf %698, %702 : vector<4x4xf32>
    %cst_223 = arith.constant dense<0.000000e+00> : vector<4x4xf32>
    %704 = tpu.matmul %703, %690, %cst_223 {dimension_numbers = #tpu.dot_dimension_numbers<[1], [0], [0], [1], [0, 0, 1, 1], [], []>} : vector<4x4xf32>, vector<4x4xf32>, vector<4x4xf32> -> vector<4x4xf32>
    %705 = vector.extract_strided_slice %585 {offsets = [0, 28], sizes = [4, 4], strides = [1, 1]} : vector<4x96xf32> to vector<4x4xf32>
    %706 = vector.extract_strided_slice %585 {offsets = [0, 60], sizes = [4, 4], strides = [1, 1]} : vector<4x96xf32> to vector<4x4xf32>
    %707 = vector.extract_strided_slice %585 {offsets = [0, 92], sizes = [4, 4], strides = [1, 1]} : vector<4x96xf32> to vector<4x4xf32>
    %cst_224 = arith.constant dense<0.000000e+00> : vector<4x4xf32>
    %708 = tpu.matmul %705, %706, %cst_224 {dimension_numbers = #tpu.dot_dimension_numbers<[1], [1], [0], [0], [0, 0, 1, 0], [], []>} : vector<4x4xf32>, vector<4x4xf32>, vector<4x4xf32> -> vector<4x4xf32>
    %cst_225 = arith.constant 5.000000e-01 : f32
    %709 = vector.broadcast %cst_225 : f32 to vector<4x4xf32>
    %710 = arith.mulf %708, %709 : vector<4x4xf32>
    %cst_226 = arith.constant dense<0xFF800000> : vector<4xf32>
    %711 = vector.multi_reduction <maximumf>, %710, %cst_226 [1] : vector<4x4xf32> to vector<4xf32>
    %712 = vector.shape_cast %711 : vector<4xf32> to vector<4x1xf32>
    %713 = vector.broadcast %712 : vector<4x1xf32> to vector<4x4xf32>
    %714 = arith.subf %710, %713 : vector<4x4xf32>
    %715 = math.exp %714 : vector<4x4xf32>
    %cst_227 = arith.constant dense<0.000000e+00> : vector<4xf32>
    %716 = vector.multi_reduction <add>, %715, %cst_227 [1] : vector<4x4xf32> to vector<4xf32>
    %717 = vector.shape_cast %716 : vector<4xf32> to vector<4x1xf32>
    %718 = tpu.reciprocal %717 {approx = true} : vector<4x1xf32> -> vector<4x1xf32>
    %719 = vector.broadcast %718 : vector<4x1xf32> to vector<4x4xf32>
    %720 = arith.mulf %715, %719 : vector<4x4xf32>
    %cst_228 = arith.constant dense<0.000000e+00> : vector<4x4xf32>
    %721 = tpu.matmul %720, %707, %cst_228 {dimension_numbers = #tpu.dot_dimension_numbers<[1], [0], [0], [1], [0, 0, 1, 1], [], []>} : vector<4x4xf32>, vector<4x4xf32>, vector<4x4xf32> -> vector<4x4xf32>
    %722 = tpu.concatenate %602, %619, %636, %653, %670, %687, %704, %721 in 1 : vector<4x4xf32>, vector<4x4xf32>, vector<4x4xf32>, vector<4x4xf32>, vector<4x4xf32>, vector<4x4xf32>, vector<4x4xf32>, vector<4x4xf32> -> vector<4x32xf32>
    %c0_229 = arith.constant 0 : index
    %c0_230 = arith.constant 0 : index
    %723 = vector.load %arg7[%c0_229, %c0_230] : memref<32x32xf32, #tpu.memory_space<vmem>>, vector<32x32xf32>
    %cst_231 = arith.constant dense<0.000000e+00> : vector<4x32xf32>
    %724 = tpu.matmul %722, %723, %cst_231 {dimension_numbers = #tpu.dot_dimension_numbers<[1], [0], [0], [1], [0, 0, 1, 1], [], []>} : vector<4x32xf32>, vector<32x32xf32>, vector<4x32xf32> -> vector<4x32xf32>
    %c0_232 = arith.constant 0 : index
    %c0_233 = arith.constant 0 : index
    %725 = vector.load %arg8[%c0_232, %c0_233] : memref<1x32xf32, #tpu.memory_space<vmem>>, vector<1x32xf32>
    %726 = vector.broadcast %725 : vector<1x32xf32> to vector<4x32xf32>
    %727 = arith.addf %724, %726 : vector<4x32xf32>
    %c0_234 = arith.constant 0 : index
    %c0_235 = arith.constant 0 : index
    %728 = vector.load %arg9[%c0_234, %c0_235] : memref<32x16xf32, #tpu.memory_space<vmem>>, vector<32x16xf32>
    %cst_236 = arith.constant dense<0.000000e+00> : vector<4x16xf32>
    %729 = tpu.matmul %727, %728, %cst_236 {dimension_numbers = #tpu.dot_dimension_numbers<[1], [0], [0], [1], [0, 0, 1, 1], [], []>} : vector<4x32xf32>, vector<32x16xf32>, vector<4x16xf32> -> vector<4x16xf32>
    %c0_237 = arith.constant 0 : index
    %c0_238 = arith.constant 0 : index
    %730 = vector.load %arg10[%c0_237, %c0_238] : memref<1x16xf32, #tpu.memory_space<vmem>>, vector<1x16xf32>
    %731 = vector.broadcast %730 : vector<1x16xf32> to vector<4x16xf32>
    %732 = arith.addf %729, %731 : vector<4x16xf32>
    %cst_239 = arith.constant 0.000000e+00 : f32
    %733 = vector.broadcast %cst_239 : f32 to vector<4x16xf32>
    %734 = arith.maximumf %732, %733 : vector<4x16xf32>
    %c0_240 = arith.constant 0 : index
    %c0_241 = arith.constant 0 : index
    %735 = vector.load %arg13[%c0_240, %c0_241] : memref<1x16xf32, #tpu.memory_space<vmem>>, vector<1x16xf32>
    %736 = vector.broadcast %735 : vector<1x16xf32> to vector<4x16xf32>
    %737 = arith.subf %734, %736 : vector<4x16xf32>
    %c0_242 = arith.constant 0 : index
    %c0_243 = arith.constant 0 : index
    %738 = vector.load %arg14[%c0_242, %c0_243] : memref<1x16xf32, #tpu.memory_space<vmem>>, vector<1x16xf32>
    %cst_244 = arith.constant 9.99999974E-6 : f32
    %739 = vector.broadcast %cst_244 : f32 to vector<1x16xf32>
    %740 = arith.addf %738, %739 : vector<1x16xf32>
    %741 = math.rsqrt %740 : vector<1x16xf32>
    %742 = vector.broadcast %741 : vector<1x16xf32> to vector<4x16xf32>
    %743 = arith.mulf %737, %742 : vector<4x16xf32>
    %c0_245 = arith.constant 0 : index
    %c0_246 = arith.constant 0 : index
    %744 = vector.load %arg11[%c0_245, %c0_246] : memref<1x16xf32, #tpu.memory_space<vmem>>, vector<1x16xf32>
    %745 = vector.broadcast %744 : vector<1x16xf32> to vector<4x16xf32>
    %746 = arith.mulf %743, %745 : vector<4x16xf32>
    %c0_247 = arith.constant 0 : index
    %c0_248 = arith.constant 0 : index
    %747 = vector.load %arg12[%c0_247, %c0_248] : memref<1x16xf32, #tpu.memory_space<vmem>>, vector<1x16xf32>
    %748 = vector.broadcast %747 : vector<1x16xf32> to vector<4x16xf32>
    %749 = arith.addf %746, %748 : vector<4x16xf32>
    %c0_249 = arith.constant 0 : index
    %c0_250 = arith.constant 0 : index
    %750 = vector.load %arg15[%c0_249, %c0_250] : memref<16x3xf32, #tpu.memory_space<vmem>>, vector<16x3xf32>
    %cst_251 = arith.constant dense<0.000000e+00> : vector<4x3xf32>
    %751 = tpu.matmul %749, %750, %cst_251 {dimension_numbers = #tpu.dot_dimension_numbers<[1], [0], [0], [1], [0, 0, 1, 1], [], []>} : vector<4x16xf32>, vector<16x3xf32>, vector<4x3xf32> -> vector<4x3xf32>
    %c0_252 = arith.constant 0 : index
    %c0_253 = arith.constant 0 : index
    %752 = vector.load %arg16[%c0_252, %c0_253] : memref<1x3xf32, #tpu.memory_space<vmem>>, vector<1x3xf32>
    %753 = vector.broadcast %752 : vector<1x3xf32> to vector<4x3xf32>
    %754 = arith.addf %751, %753 : vector<4x3xf32>
    %cst_254 = arith.constant dense<0xFF800000> : vector<4xf32>
    %755 = vector.multi_reduction <maximumf>, %754, %cst_254 [1] : vector<4x3xf32> to vector<4xf32>
    %756 = vector.shape_cast %755 : vector<4xf32> to vector<4x1xf32>
    %757 = vector.broadcast %756 : vector<4x1xf32> to vector<4x3xf32>
    %758 = arith.subf %754, %757 : vector<4x3xf32>
    %759 = math.exp %758 : vector<4x3xf32>
    %cst_255 = arith.constant dense<0.000000e+00> : vector<4xf32>
    %760 = vector.multi_reduction <add>, %759, %cst_255 [1] : vector<4x3xf32> to vector<4xf32>
    %761 = vector.shape_cast %760 : vector<4xf32> to vector<4x1xf32>
    %762 = vector.broadcast %761 : vector<4x1xf32> to vector<4x3xf32>
    %763 = arith.divf %759, %762 : vector<4x3xf32>
    %c0_256 = arith.constant 0 : index
    %c0_257 = arith.constant 0 : index
    %764 = vector.load %arg17[%c0_256, %c0_257] : memref<4x3xf32, #tpu.memory_space<vmem>>, vector<4x3xf32>
    tpu.vector_store %arg17[%c0_256, %c0_257], %763 {strides = array<i32>} : memref<4x3xf32, #tpu.memory_space<vmem>>, vector<4x3xf32>,
    return
  }
}

</mosaic_0001>

<llo_original>
// kernel: tpu_custom_call.1
$region0: #{tpu_custom_call.1}
  #allocation0 [shape = 'u32[]', space=smem, size = 0x4, offset = 0x4, fixed_abs, tag = 'smem constant byte address 0x4 - core index']
  #allocation1 [shape = 'u32[72,128]{1,0:T(1,128)}', space=vmem, size = 0x9000, scoped, tag = 'internal scratch']
  %s0 = inlined_call_operand.hbm [shape: f32[4,8,8], index: 0, kind: input, shape index: {}]
  %s1 = inlined_call_operand.vmem [shape: f32[40,128], index: 1, kind: input, shape index: {}]
  %s2 = inlined_call_operand.vmem [shape: f32[1,128], index: 2, kind: input, shape index: {}]
  %s3 = inlined_call_operand.hbm [shape: f32[64,128], index: 3, kind: input, shape index: {}]
  %s4 = inlined_call_operand.vmem [shape: f32[1,128], index: 4, kind: input, shape index: {}]
  %s5 = inlined_call_operand.hbm [shape: f32[32,96], index: 5, kind: input, shape index: {}]
  %s6 = inlined_call_operand.vmem [shape: f32[1,96], index: 6, kind: input, shape index: {}]
  %s7 = inlined_call_operand.hbm [shape: f32[32,32], index: 7, kind: input, shape index: {}]
  %s8 = inlined_call_operand.vmem [shape: f32[1,32], index: 8, kind: input, shape index: {}]
  %s9 = inlined_call_operand.vmem [shape: f32[32,16], index: 9, kind: input, shape index: {}]
  %s10 = inlined_call_operand.vmem [shape: f32[1,16], index: 10, kind: input, shape index: {}]
  %s11 = inlined_call_operand.vmem [shape: f32[1,16], index: 11, kind: input, shape index: {}]
  %s12 = inlined_call_operand.vmem [shape: f32[1,16], index: 12, kind: input, shape index: {}]
  %s13 = inlined_call_operand.vmem [shape: f32[1,16], index: 13, kind: input, shape index: {}]
  %s14 = inlined_call_operand.vmem [shape: f32[1,16], index: 14, kind: input, shape index: {}]
  %s15 = inlined_call_operand.vmem [shape: f32[16,3], index: 15, kind: input, shape index: {}]
  %s16 = inlined_call_operand.vmem [shape: f32[1,3], index: 16, kind: input, shape index: {}]
  %s17 = inlined_call_operand.hbm [shape: f32[4,3], index: 17, kind: output, shape index: {}]
  %s18 = sld [smem:[#allocation0]]
  $region94: #{tpu_custom_call.1} parent=0
    _
  %s20 = ssub.s32 1, %s18
  %s21 = scalar_select 0, %s20, %s18
  $region1: #{tpu_custom_call.1} parent=0
    #allocation2 [shape = 'u8[16384]{0}', space=vmem, size = 0x4000, scoped, tag = 'input window, operand 0, single buffered']
    #allocation3 [shape = 's32[1]{0}', space=sflag, size = 0x4, scoped, tag = 'scoped memory for tpu_custom_call.1']
    #allocation4 [shape = 's32[1]{0}', space=sflag, size = 0x4, scoped, tag = 'scoped memory for tpu_custom_call.1']
    #allocation5 [shape = 'u8[32768]{0}', space=vmem, size = 0x8000, scoped, tag = 'input window, operand 3, single buffered']
    #allocation6 [shape = 's32[1]{0}', space=sflag, size = 0x4, scoped, tag = 'scoped memory for tpu_custom_call.1']
    #allocation7 [shape = 'u8[16384]{0}', space=vmem, size = 0x4000, scoped, tag = 'input window, operand 5, single buffered']
    #allocation8 [shape = 'u8[16384]{0}', space=vmem, size = 0x4000, scoped, tag = 'input window, operand 7, single buffered']
    #allocation9 [shape = 's32[1]{0}', space=sflag, size = 0x4, scoped, tag = 'scoped memory for tpu_custom_call.1']
    #allocation10 [shape = 'u8[2048]{0}', space=vmem, size = 0x800, scoped, tag = 'output window, operand 0, single buffered']
    %22 = vsyncpa [#allocation3], 0
    %23 = vsyncpa [#allocation6], 0
    %24 = vsyncpa [#allocation9], 0
    %25 = vsyncpa [#allocation4], 0
    // Predicated region
    $region2: #{tpu_custom_call.1} parent=1 // pred_check
      _
    $region3: #{tpu_custom_call.1} parent=1 // pred_check_branch
      %27 = sbr.rel (0) target = $region5
    $region4: #{tpu_custom_call.1} parent=1 // pred_region
      %29 = vsyncadd [#allocation3], 0
      %s30 = sshll.u32 %s0, 4
      %s31 = int_to_ptr.hbm [resolvable:$true] %s30
      %s32 = sshll.u32 [#allocation2], 4
      %s33 = int_to_ptr.vmem [resolvable:$true] %s32
      %38 = dma.hbm_to_vmem [thread:$0]  %s31, 512, %s33, [#allocation3], 128, 128, 8
    $region5: #{tpu_custom_call.1} parent=1 // pred_fallthru
      _
    // Predicated region
    $region6: #{tpu_custom_call.1} parent=1 // pred_check
      _
    $region7: #{tpu_custom_call.1} parent=1 // pred_check_branch
      %40 = sbr.rel (0) target = $region9
    $region8: #{tpu_custom_call.1} parent=1 // pred_region
      _
    $region9: #{tpu_custom_call.1} parent=1 // pred_fallthru
      _
    // Predicated region
    $region10: #{tpu_custom_call.1} parent=1 // pred_check
      _
    $region11: #{tpu_custom_call.1} parent=1 // pred_check_branch
      %42 = sbr.rel (0) target = $region13
    $region12: #{tpu_custom_call.1} parent=1 // pred_region
      _
    $region13: #{tpu_custom_call.1} parent=1 // pred_fallthru
      _
    // Predicated region
    $region14: #{tpu_custom_call.1} parent=1 // pred_check
      _
    $region15: #{tpu_custom_call.1} parent=1 // pred_check_branch
      %44 = sbr.rel (0) target = $region17
    $region16: #{tpu_custom_call.1} parent=1 // pred_region
      %46 = vsyncadd [#allocation6], 0
      %s47 = sshll.u32 %s3, 4
      %s48 = int_to_ptr.hbm [resolvable:$true] %s47
      %s49 = sshll.u32 [#allocation5], 4
      %s50 = int_to_ptr.vmem [resolvable:$true] %s49
      %55 = dma.hbm_to_vmem [thread:$0]  %s48, 1024, %s50, [#allocation6], 128, 128, 8
    $region17: #{tpu_custom_call.1} parent=1 // pred_fallthru
      _
    // Predicated region
    $region18: #{tpu_custom_call.1} parent=1 // pred_check
      _
    $region19: #{tpu_custom_call.1} parent=1 // pred_check_branch
      %57 = sbr.rel (0) target = $region21
    $region20: #{tpu_custom_call.1} parent=1 // pred_region
      _
    $region21: #{tpu_custom_call.1} parent=1 // pred_fallthru
      _
    // Predicated region
    $region22: #{tpu_custom_call.1} parent=1 // pred_check
      _
    $region23: #{tpu_custom_call.1} parent=1 // pred_check_branch
      %59 = sbr.rel (0) target = $region25
    $region24: #{tpu_custom_call.1} parent=1 // pred_region
      %61 = vsyncadd [#allocation6], 0
      %s62 = sshll.u32 %s5, 4
      %s63 = int_to_ptr.hbm [resolvable:$true] %s62
      %s64 = sshll.u32 [#allocation7], 4
      %s65 = int_to_ptr.vmem [resolvable:$true] %s64
      %70 = dma.hbm_to_vmem [thread:$0]  %s63, 512, %s65, [#allocation6], 128, 128, 8
    $region25: #{tpu_custom_call.1} parent=1 // pred_fallthru
      _
    // Predicated region
    $region26: #{tpu_custom_call.1} parent=1 // pred_check
      _
    $region27: #{tpu_custom_call.1} parent=1 // pred_check_branch
      %72 = sbr.rel (0) target = $region29
    $region28: #{tpu_custom_call.1} parent=1 // pred_region
      _
    $region29: #{tpu_custom_call.1} parent=1 // pred_fallthru
      _
    // Predicated region
    $region30: #{tpu_custom_call.1} parent=1 // pred_check
      _
    $region31: #{tpu_custom_call.1} parent=1 // pred_check_branch
      %74 = sbr.rel (0) target = $region33
    $region32: #{tpu_custom_call.1} parent=1 // pred_region
      %76 = vsyncadd [#allocation9], 0
      %s77 = sshll.u32 %s7, 4
      %s78 = int_to_ptr.hbm [resolvable:$true] %s77
      %s79 = sshll.u32 [#allocation8], 4
      %s80 = int_to_ptr.vmem [resolvable:$true] %s79
      %85 = dma.hbm_to_vmem [thread:$0]  %s78, 512, %s80, [#allocation9], 128, 128, 8
    $region33: #{tpu_custom_call.1} parent=1 // pred_fallthru
      _
    // Predicated region
    $region34: #{tpu_custom_call.1} parent=1 // pred_check
      _
    $region35: #{tpu_custom_call.1} parent=1 // pred_check_branch
      %87 = sbr.rel (0) target = $region37
    $region36: #{tpu_custom_call.1} parent=1 // pred_region
      _
    $region37: #{tpu_custom_call.1} parent=1 // pred_fallthru
      _
    // Predicated region
    $region38: #{tpu_custom_call.1} parent=1 // pred_check
      _
    $region39: #{tpu_custom_call.1} parent=1 // pred_check_branch
      %89 = sbr.rel (0) target = $region41
    $region40: #{tpu_custom_call.1} parent=1 // pred_region
      _
    $region41: #{tpu_custom_call.1} parent=1 // pred_fallthru
      _
    // Predicated region
    $region42: #{tpu_custom_call.1} parent=1 // pred_check
      _
    $region43: #{tpu_custom_call.1} parent=1 // pred_check_branch
      %91 = sbr.rel (0) target = $region45
    $region44: #{tpu_custom_call.1} parent=1 // pred_region
      _
    $region45: #{tpu_custom_call.1} parent=1 // pred_fallthru
      _
    // Predicated region
    $region46: #{tpu_custom_call.1} parent=1 // pred_check
      _
    $region47: #{tpu_custom_call.1} parent=1 // pred_check_branch
      %93 = sbr.rel (0) target = $region49
    $region48: #{tpu_custom_call.1} parent=1 // pred_region
      _
    $region49: #{tpu_custom_call.1} parent=1 // pred_fallthru
      _
    // Predicated region
    $region50: #{tpu_custom_call.1} parent=1 // pred_check
      _
    $region51: #{tpu_custom_call.1} parent=1 // pred_check_branch
      %95 = sbr.rel (0) target = $region53
    $region52: #{tpu_custom_call.1} parent=1 // pred_region
      _
    $region53: #{tpu_custom_call.1} parent=1 // pred_fallthru
      _
    // Predicated region
    $region54: #{tpu_custom_call.1} parent=1 // pred_check
      _
    $region55: #{tpu_custom_call.1} parent=1 // pred_check_branch
      %97 = sbr.rel (0) target = $region57
    $region56: #{tpu_custom_call.1} parent=1 // pred_region
      _
    $region57: #{tpu_custom_call.1} parent=1 // pred_fallthru
      _
    // Predicated region
    $region58: #{tpu_custom_call.1} parent=1 // pred_check
      _
    $region59: #{tpu_custom_call.1} parent=1 // pred_check_branch
      %99 = sbr.rel (0) target = $region61
    $region60: #{tpu_custom_call.1} parent=1 // pred_region
      _
    $region61: #{tpu_custom_call.1} parent=1 // pred_fallthru
      _
    // Predicated region
    $region62: #{tpu_custom_call.1} parent=1 // pred_check
      _
    $region63: #{tpu_custom_call.1} parent=1 // pred_check_branch
      %101 = sbr.rel (0) target = $region65
    $region64: #{tpu_custom_call.1} parent=1 // pred_region
      _
    $region65: #{tpu_custom_call.1} parent=1 // pred_fallthru
      _
    // Predicated region
    $region66: #{tpu_custom_call.1} parent=1 // pred_check
      _
    $region67: #{tpu_custom_call.1} parent=1 // pred_check_branch
      %103 = sbr.rel (0) target = $region69
    $region68: #{tpu_custom_call.1} parent=1 // pred_region
      _
    $region69: #{tpu_custom_call.1} parent=1 // pred_fallthru
      _
    // Predicated region
    $region70: #{tpu_custom_call.1} parent=1 // pred_check
      _
    $region71: #{tpu_custom_call.1} parent=1 // pred_check_branch
      %105 = sbr.rel (0) target = $region73
    $region72: #{tpu_custom_call.1} parent=1 // pred_region
      %107 = dma.done [#allocation3], 512
    $region73: #{tpu_custom_call.1} parent=1 // pred_fallthru
      _
    // Predicated region
    $region74: #{tpu_custom_call.1} parent=1 // pred_check
      _
    $region75: #{tpu_custom_call.1} parent=1 // pred_check_branch
      %109 = sbr.rel (0) target = $region77
    $region76: #{tpu_custom_call.1} parent=1 // pred_region
      %111 = dma.done [#allocation6], 1024
    $region77: #{tpu_custom_call.1} parent=1 // pred_fallthru
      _
    // Predicated region
    $region78: #{tpu_custom_call.1} parent=1 // pred_check
      _
    $region79: #{tpu_custom_call.1} parent=1 // pred_check_branch
      %113 = sbr.rel (0) target = $region81
    $region80: #{tpu_custom_call.1} parent=1 // pred_region
      %115 = dma.done [#allocation6], 512
    $region81: #{tpu_custom_call.1} parent=1 // pred_fallthru
      _
    // Predicated region
    $region82: #{tpu_custom_call.1} parent=1 // pred_check
      _
    $region83: #{tpu_custom_call.1} parent=1 // pred_check_branch
      %117 = sbr.rel (0) target = $region85
    $region84: #{tpu_custom_call.1} parent=1 // pred_region
      %119 = dma.done [#allocation9], 512
    $region85: #{tpu_custom_call.1} parent=1 // pred_fallthru
      _
    %v120 = vld [vmem:[%s1] sm:$0xff]
    %v121 = vld [vmem:[%s1 + $0x8] sm:$0xff]
    %v122 = vld [vmem:[%s1 + $0x10] sm:$0xff]
    %v123 = vld [vmem:[%s1 + $0x18] sm:$0xff]
    %v124 = vld [vmem:[%s1 + $0x20] sm:$0xff]
    %v125 = vld [vmem:[%s2] sm:$0x1]
    %v126 = vld [vmem:[#allocation5] sm:$0xff]
    %v127 = vld [vmem:[#allocation5 + $0x8] sm:$0xff]
    %v128 = vld [vmem:[#allocation5 + $0x10] sm:$0xff]
    %v129 = vld [vmem:[#allocation5 + $0x18] sm:$0xff]
    %v130 = vld [vmem:[#allocation5 + $0x20] sm:$0xff]
    %v131 = vld [vmem:[#allocation5 + $0x28] sm:$0xff]
    %v132 = vld [vmem:[#allocation5 + $0x30] sm:$0xff]
    %v133 = vld [vmem:[#allocation5 + $0x38] sm:$0xff]
    %v134 = vld [vmem:[%s4] sm:$0x1]
    %v135 = vld [vmem:[#allocation2] sm:$0x1]
    %v136 = vld [vmem:[#allocation2 + $0x8] sm:$0x1]
    %v137 = vld [vmem:[#allocation2 + $0x10] sm:$0x1]
    %v138 = vld [vmem:[#allocation2 + $0x18] sm:$0x1]
    %v143 = vrot.slane %v136, 7
    %vm144 = vcmask 1041409
    %v145 = vsel %vm144, %v143, %v135
    %v146 = vrot.slane %v137, 6
    %vm147 = vcmask 1042434
    %v148 = vsel %vm147, %v146, %v145
    %v149 = vrot.slane %v138, 5
    %vm150 = vcmask 1043459
    %v151 = vsel %vm150, %v149, %v148
    %vm153 = vcmask 64512
    %v154 = vsel %vm153, %v151, 0.0
    %v156 = vperm.slane %v125, 0
    %vm158 = vcmask 326656
    %v160 = vsel %vm158, %v154, 0
    %162 = vmatpush.msra.mxu0 0.0
    %163 = vmatpush.msra.mxu0 0.0
    %164 = vmatpush.msra.mxu0 0.0
    %165 = vmatpush.msra.mxu0 0.0
    %166 = vmatpush.msra.mxu0 0.0
    %167 = vmatpush.msra.mxu0 0.0
    %168 = vmatpush.msra.mxu0 0.0
    %169 = vmatpush.msra.mxu0 0.0
    %170 = vmatpush.msra.mxu0 0.0
    %171 = vmatpush.msra.mxu0 0.0
    %172 = vmatpush.msra.mxu0 0.0
    %173 = vmatpush.msra.mxu0 %v124
    %174 = vmatpush.msra.mxu0 %v123
    %175 = vmatpush.msra.mxu0 %v122
    %176 = vmatpush.msra.mxu0 %v121
    %177 = vmatpush.msra.mxu0 %v120
    %178 = vmatmul.f32.gmra.mxu0 %v160
    %v179 = vpop.f32.mrf.mxu0
    %v180 = vadd.f32 %v156, %v179
    %181 = vdwg.mxu0
    %v182 = vsub.f32 0.0, %v180
    %v183 = vmul.f32 %v182, 1.442695
    %v184 = vpow.pop %v183
    %v185 = vadd.f32 %v184, 1.0
    %v186 = vrcp.pop %v185
    %v187 = vmul.f32 %v185, %v186
    %v188 = vsub.f32 1.0, %v187
    %v189 = vmul.f32 %v186, %v188
    %v190 = vadd.f32 %v186, %v189
    %vm191 = vweird.f32 %v185
    %vm192 = vweird.f32 %v186
    %vm193 = vmor %vm191, %vm192
    %v194 = vsel %vm193, %v186, %v190
    %v195 = vand.u32 2147483647, %v185
    %vm196 = vcmp.eq.f32.partialorder %v195, 8.507059e+37
    %v197 = vand.u32 %v185, 2147483648
    %v198 = vor.u32 1.1754944e-38, %v197
    %v199 = vsel %vm196, %v198, %v194
    %v200 = vmul.f32 1.0, %v199
    %v201 = vtanh.pop %v180
    %v202 = vmul.f32 %v200, 0.0
    %204 = vrot.lane.b32.xlu0 %v201, 64
    %v205 = vpop.permute.xlu0 %204
    %v207 = vmul.f32 %v200, %v205
    %209 = vrot.lane.b32.xlu0 %v207, 32
    %v210 = vpop.permute.xlu0 %209
    %v212 = vadd.f32 %v202, %v210
    %v213 = vtanh.pop %v212
    %215 = vrot.lane.b32.xlu0 %v213, 64
    %v216 = vpop.permute.xlu0 %215
    %v218 = vmul.f32 %v200, %v216
    %220 = vrot.lane.b32.xlu0 %v218, 32
    %v221 = vpop.permute.xlu0 %220
    %vm223 = vcmask 261120
    %v224 = vsel %vm223, %v221, 0.0
    %v226 = vperm.slane %v134, 0
    %vm228 = vcmask 523264
    %v230 = vsel %vm228, %v224, 0
    %232 = vmatpush.msra.mxu0 0.0
    %233 = vmatpush.msra.mxu0 0.0
    %234 = vmatpush.msra.mxu0 0.0
    %235 = vmatpush.msra.mxu0 0.0
    %236 = vmatpush.msra.mxu0 0.0
    %237 = vmatpush.msra.mxu0 0.0
    %238 = vmatpush.msra.mxu0 0.0
    %239 = vmatpush.msra.mxu0 0.0
    %240 = vmatpush.msra.mxu0 %v133
    %241 = vmatpush.msra.mxu0 %v132
    %242 = vmatpush.msra.mxu0 %v131
    %243 = vmatpush.msra.mxu0 %v130
    %244 = vmatpush.msra.mxu0 %v129
    %245 = vmatpush.msra.mxu0 %v128
    %246 = vmatpush.msra.mxu0 %v127
    %247 = vmatpush.msra.mxu0 %v126
    %248 = vmatmul.f32.gmra.mxu0 %v230
    %v249 = vpop.f32.mrf.mxu0
    %v250 = vadd.f32 %v226, %v249
    %251 = vdwg.mxu0
    %v252 = vsub.f32 0.0, %v250
    %v253 = vmul.f32 %v252, 1.442695
    %v254 = vpow.pop %v253
    %v255 = vadd.f32 %v254, 1.0
    %v256 = vrcp.pop %v255
    %v257 = vmul.f32 %v255, %v256
    %v258 = vsub.f32 1.0, %v257
    %v259 = vmul.f32 %v256, %v258
    %v260 = vadd.f32 %v256, %v259
    %vm261 = vweird.f32 %v255
    %vm262 = vweird.f32 %v256
    %vm263 = vmor %vm261, %vm262
    %v264 = vsel %vm263, %v256, %v260
    %v265 = vand.u32 2147483647, %v255
    %vm266 = vcmp.eq.f32.partialorder %v265, 8.507059e+37
    %v267 = vand.u32 %v255, 2147483648
    %v268 = vor.u32 1.1754944e-38, %v267
    %v269 = vsel %vm266, %v268, %v264
    %v270 = vmul.f32 1.0, %v269
    %v271 = vtanh.pop %v250
    %v272 = vmul.f32 %v270, 0.0
    %274 = vrot.lane.b32.xlu0 %v271, 64
    %v275 = vpop.permute.xlu0 %274
    %v277 = vmul.f32 %v270, %v275
    %279 = vrot.lane.b32.xlu0 %v277, 32
    %v280 = vpop.permute.xlu0 %279
    %v282 = vadd.f32 %v272, %v280
    %v283 = vtanh.pop %v282
    %285 = vrot.lane.b32.xlu0 %v283, 64
    %v286 = vpop.permute.xlu0 %285
    %v288 = vmul.f32 %v270, %v286
    %v289 = vld [vmem:[#allocation2 + $0x1] sm:$0x1]
    %v290 = vld [vmem:[#allocation2 + $0x9] sm:$0x1]
    %v291 = vld [vmem:[#allocation2 + $0x11] sm:$0x1]
    %v292 = vld [vmem:[#allocation2 + $0x19] sm:$0x1]
    %v297 = vrot.slane %v290, 7
    %v298 = vsel %vm144, %v297, %v289
    %v299 = vrot.slane %v291, 6
    %v300 = vsel %vm147, %v299, %v298
    %v301 = vrot.slane %v292, 5
    %v302 = vsel %vm150, %v301, %v300
    %304 = vrot.lane.b32.xlu0 %v218, 40
    %v305 = vpop.permute.xlu0 %304
    %v307 = vsel %vm153, %v302, %v305
    %v309 = vsel %vm158, %v307, 0
    %311 = vmatpush.msra.mxu0 0.0
    %312 = vmatpush.msra.mxu0 0.0
    %313 = vmatpush.msra.mxu0 0.0
    %314 = vmatpush.msra.mxu0 0.0
    %315 = vmatpush.msra.mxu0 0.0
    %316 = vmatpush.msra.mxu0 0.0
    %317 = vmatpush.msra.mxu0 0.0
    %318 = vmatpush.msra.mxu0 0.0
    %319 = vmatpush.msra.mxu0 0.0
    %320 = vmatpush.msra.mxu0 0.0
    %321 = vmatpush.msra.mxu0 0.0
    %322 = vmatpush.msra.mxu0 %v124
    %323 = vmatpush.msra.mxu0 %v123
    %324 = vmatpush.msra.mxu0 %v122
    %325 = vmatpush.msra.mxu0 %v121
    %326 = vmatpush.msra.mxu0 %v120
    %327 = vmatmul.f32.gmra.mxu0 %v309
    %v328 = vpop.f32.mrf.mxu0
    %v329 = vadd.f32 %v156, %v328
    %330 = vdwg.mxu0
    %v331 = vsub.f32 0.0, %v329
    %v332 = vmul.f32 %v331, 1.442695
    %v333 = vpow.pop %v332
    %v334 = vadd.f32 %v333, 1.0
    %v335 = vrcp.pop %v334
    %v336 = vmul.f32 %v334, %v335
    %v337 = vsub.f32 1.0, %v336
    %v338 = vmul.f32 %v335, %v337
    %v339 = vadd.f32 %v335, %v338
    %vm340 = vweird.f32 %v334
    %vm341 = vweird.f32 %v335
    %vm342 = vmor %vm340, %vm341
    %v343 = vsel %vm342, %v335, %v339
    %v344 = vand.u32 2147483647, %v334
    %vm345 = vcmp.eq.f32.partialorder %v344, 8.507059e+37
    %v346 = vand.u32 %v334, 2147483648
    %v347 = vor.u32 1.1754944e-38, %v346
    %v348 = vsel %vm345, %v347, %v343
    %v349 = vmul.f32 1.0, %v348
    %v350 = vtanh.pop %v329
    %v351 = vmul.f32 %v349, %v212
    %353 = vrot.lane.b32.xlu0 %v350, 64
    %v354 = vpop.permute.xlu0 %353
    %v356 = vmul.f32 %v349, %v354
    %358 = vrot.lane.b32.xlu0 %v356, 32
    %v359 = vpop.permute.xlu0 %358
    %v361 = vadd.f32 %v351, %v359
    %v362 = vtanh.pop %v361
    %364 = vrot.lane.b32.xlu0 %v362, 64
    %v365 = vpop.permute.xlu0 %364
    %v367 = vmul.f32 %v349, %v365
    %369 = vrot.lane.b32.xlu0 %v367, 32
    %v370 = vpop.permute.xlu0 %369
    %373 = vrot.lane.b32.xlu0 %v288, 64
    %v374 = vpop.permute.xlu0 %373
    %v376 = vsel %vm223, %v370, %v374
    %v378 = vsel %vm228, %v376, 0
    %380 = vmatpush.msra.mxu0 0.0
    %381 = vmatpush.msra.mxu0 0.0
    %382 = vmatpush.msra.mxu0 0.0
    %383 = vmatpush.msra.mxu0 0.0
    %384 = vmatpush.msra.mxu0 0.0
    %385 = vmatpush.msra.mxu0 0.0
    %386 = vmatpush.msra.mxu0 0.0
    %387 = vmatpush.msra.mxu0 0.0
    %388 = vmatpush.msra.mxu0 %v133
    %389 = vmatpush.msra.mxu0 %v132
    %390 = vmatpush.msra.mxu0 %v131
    %391 = vmatpush.msra.mxu0 %v130
    %392 = vmatpush.msra.mxu0 %v129
    %393 = vmatpush.msra.mxu0 %v128
    %394 = vmatpush.msra.mxu0 %v127
    %395 = vmatpush.msra.mxu0 %v126
    %396 = vmatmul.f32.gmra.mxu0 %v378
    %v397 = vpop.f32.mrf.mxu0
    %v398 = vadd.f32 %v226, %v397
    %399 = vdwg.mxu0
    %v400 = vsub.f32 0.0, %v398
    %v401 = vmul.f32 %v400, 1.442695
    %v402 = vpow.pop %v401
    %v403 = vadd.f32 %v402, 1.0
    %v404 = vrcp.pop %v403
    %v405 = vmul.f32 %v403, %v404
    %v406 = vsub.f32 1.0, %v405
    %v407 = vmul.f32 %v404, %v406
    %v408 = vadd.f32 %v404, %v407
    %vm409 = vweird.f32 %v403
    %vm410 = vweird.f32 %v404
    %vm411 = vmor %vm409, %vm410
    %v412 = vsel %vm411, %v404, %v408
    %v413 = vand.u32 2147483647, %v403
    %vm414 = vcmp.eq.f32.partialorder %v413, 8.507059e+37
    %v415 = vand.u32 %v403, 2147483648
    %v416 = vor.u32 1.1754944e-38, %v415
    %v417 = vsel %vm414, %v416, %v412
    %v418 = vmul.f32 1.0, %v417
    %v419 = vtanh.pop %v398
    %v420 = vmul.f32 %v418, %v282
    %422 = vrot.lane.b32.xlu0 %v419, 64
    %v423 = vpop.permute.xlu0 %422
    %v425 = vmul.f32 %v418, %v423
    %427 = vrot.lane.b32.xlu0 %v425, 32
    %v428 = vpop.permute.xlu0 %427
    %v430 = vadd.f32 %v420, %v428
    %v431 = vtanh.pop %v430
    %433 = vrot.lane.b32.xlu0 %v431, 64
    %v434 = vpop.permute.xlu0 %433
    %v436 = vmul.f32 %v418, %v434
    %v437 = vld [vmem:[#allocation2 + $0x2] sm:$0x1]
    %v438 = vld [vmem:[#allocation2 + $0xa] sm:$0x1]
    %v439 = vld [vmem:[#allocation2 + $0x12] sm:$0x1]
    %v440 = vld [vmem:[#allocation2 + $0x1a] sm:$0x1]
    %v445 = vrot.slane %v438, 7
    %v446 = vsel %vm144, %v445, %v437
    %v447 = vrot.slane %v439, 6
    %v448 = vsel %vm147, %v447, %v446
    %v449 = vrot.slane %v440, 5
    %v450 = vsel %vm150, %v449, %v448
    %452 = vrot.lane.b32.xlu0 %v367, 40
    %v453 = vpop.permute.xlu0 %452
    %v455 = vsel %vm153, %v450, %v453
    %v457 = vsel %vm158, %v455, 0
    %459 = vmatpush.msra.mxu0 0.0
    %460 = vmatpush.msra.mxu0 0.0
    %461 = vmatpush.msra.mxu0 0.0
    %462 = vmatpush.msra.mxu0 0.0
    %463 = vmatpush.msra.mxu0 0.0
    %464 = vmatpush.msra.mxu0 0.0
    %465 = vmatpush.msra.mxu0 0.0
    %466 = vmatpush.msra.mxu0 0.0
    %467 = vmatpush.msra.mxu0 0.0
    %468 = vmatpush.msra.mxu0 0.0
    %469 = vmatpush.msra.mxu0 0.0
    %470 = vmatpush.msra.mxu0 %v124
    %471 = vmatpush.msra.mxu0 %v123
    %472 = vmatpush.msra.mxu0 %v122
    %473 = vmatpush.msra.mxu0 %v121
    %474 = vmatpush.msra.mxu0 %v120
    %475 = vmatmul.f32.gmra.mxu0 %v457
    %v476 = vpop.f32.mrf.mxu0
    %v477 = vadd.f32 %v156, %v476
    %478 = vdwg.mxu0
    %v479 = vsub.f32 0.0, %v477
    %v480 = vmul.f32 %v479, 1.442695
    %v481 = vpow.pop %v480
    %v482 = vadd.f32 %v481, 1.0
    %v483 = vrcp.pop %v482
    %v484 = vmul.f32 %v482, %v483
    %v485 = vsub.f32 1.0, %v484
    %v486 = vmul.f32 %v483, %v485
    %v487 = vadd.f32 %v483, %v486
    %vm488 = vweird.f32 %v482
    %vm489 = vweird.f32 %v483
    %vm490 = vmor %vm488, %vm489
    %v491 = vsel %vm490, %v483, %v487
    %v492 = vand.u32 2147483647, %v482
    %vm493 = vcmp.eq.f32.partialorder %v492, 8.507059e+37
    %v494 = vand.u32 %v482, 2147483648
    %v495 = vor.u32 1.1754944e-38, %v494
    %v496 = vsel %vm493, %v495, %v491
    %v497 = vmul.f32 1.0, %v496
    %v498 = vtanh.pop %v477
    %v499 = vmul.f32 %v497, %v361
    %501 = vrot.lane.b32.xlu0 %v498, 64
    %v502 = vpop.permute.xlu0 %501
    %v504 = vmul.f32 %v497, %v502
    %506 = vrot.lane.b32.xlu0 %v504, 32
    %v507 = vpop.permute.xlu0 %506
    %v509 = vadd.f32 %v499, %v507
    %v510 = vtanh.pop %v509
    %512 = vrot.lane.b32.xlu0 %v510, 64
    %v513 = vpop.permute.xlu0 %512
    %v515 = vmul.f32 %v497, %v513
    %517 = vrot.lane.b32.xlu0 %v515, 32
    %v518 = vpop.permute.xlu0 %517
    %521 = vrot.lane.b32.xlu0 %v436, 64
    %v522 = vpop.permute.xlu0 %521
    %v524 = vsel %vm223, %v518, %v522
    %v526 = vsel %vm228, %v524, 0
    %528 = vmatpush.msra.mxu0 0.0
    %529 = vmatpush.msra.mxu0 0.0
    %530 = vmatpush.msra.mxu0 0.0
    %531 = vmatpush.msra.mxu0 0.0
    %532 = vmatpush.msra.mxu0 0.0
    %533 = vmatpush.msra.mxu0 0.0
    %534 = vmatpush.msra.mxu0 0.0
    %535 = vmatpush.msra.mxu0 0.0
    %536 = vmatpush.msra.mxu0 %v133
    %537 = vmatpush.msra.mxu0 %v132
    %538 = vmatpush.msra.mxu0 %v131
    %539 = vmatpush.msra.mxu0 %v130
    %540 = vmatpush.msra.mxu0 %v129
    %541 = vmatpush.msra.mxu0 %v128
    %542 = vmatpush.msra.mxu0 %v127
    %543 = vmatpush.msra.mxu0 %v126
    %544 = vmatmul.f32.gmra.mxu0 %v526
    %v545 = vpop.f32.mrf.mxu0
    %v546 = vadd.f32 %v226, %v545
    %547 = vdwg.mxu0
    %v548 = vsub.f32 0.0, %v546
    %v549 = vmul.f32 %v548, 1.442695
    %v550 = vpow.pop %v549
    %v551 = vadd.f32 %v550, 1.0
    %v552 = vrcp.pop %v551
    %v553 = vmul.f32 %v551, %v552
    %v554 = vsub.f32 1.0, %v553
    %v555 = vmul.f32 %v552, %v554
    %v556 = vadd.f32 %v552, %v555
    %vm557 = vweird.f32 %v551
    %vm558 = vweird.f32 %v552
    %vm559 = vmor %vm557, %vm558
    %v560 = vsel %vm559, %v552, %v556
    %v561 = vand.u32 2147483647, %v551
    %vm562 = vcmp.eq.f32.partialorder %v561, 8.507059e+37
    %v563 = vand.u32 %v551, 2147483648
    %v564 = vor.u32 1.1754944e-38, %v563
    %v565 = vsel %vm562, %v564, %v560
    %v566 = vmul.f32 1.0, %v565
    %v567 = vtanh.pop %v546
    %v568 = vmul.f32 %v566, %v430
    %570 = vrot.lane.b32.xlu0 %v567, 64
    %v571 = vpop.permute.xlu0 %570
    %v573 = vmul.f32 %v566, %v571
    %575 = vrot.lane.b32.xlu0 %v573, 32
    %v576 = vpop.permute.xlu0 %575
    %v578 = vadd.f32 %v568, %v576
    %v579 = vtanh.pop %v578
    %581 = vrot.lane.b32.xlu0 %v579, 64
    %v582 = vpop.permute.xlu0 %581
    %v584 = vmul.f32 %v566, %v582
    %v585 = vld [vmem:[#allocation2 + $0x3] sm:$0x1]
    %v586 = vld [vmem:[#allocation2 + $0xb] sm:$0x1]
    %v587 = vld [vmem:[#allocation2 + $0x13] sm:$0x1]
    %v588 = vld [vmem:[#allocation2 + $0x1b] sm:$0x1]
    %v593 = vrot.slane %v586, 7
    %v594 = vsel %vm144, %v593, %v585
    %v595 = vrot.slane %v587, 6
    %v596 = vsel %vm147, %v595, %v594
    %v597 = vrot.slane %v588, 5
    %v598 = vsel %vm150, %v597, %v596
    %600 = vrot.lane.b32.xlu0 %v515, 40
    %v601 = vpop.permute.xlu0 %600
    %v603 = vsel %vm153, %v598, %v601
    %v605 = vsel %vm158, %v603, 0
    %607 = vmatpush.msra.mxu0 0.0
    %608 = vmatpush.msra.mxu0 0.0
    %609 = vmatpush.msra.mxu0 0.0
    %610 = vmatpush.msra.mxu0 0.0
    %611 = vmatpush.msra.mxu0 0.0
    %612 = vmatpush.msra.mxu0 0.0
    %613 = vmatpush.msra.mxu0 0.0
    %614 = vmatpush.msra.mxu0 0.0
    %615 = vmatpush.msra.mxu0 0.0
    %616 = vmatpush.msra.mxu0 0.0
    %617 = vmatpush.msra.mxu0 0.0
    %618 = vmatpush.msra.mxu0 %v124
    %619 = vmatpush.msra.mxu0 %v123
    %620 = vmatpush.msra.mxu0 %v122
    %621 = vmatpush.msra.mxu0 %v121
    %622 = vmatpush.msra.mxu0 %v120
    %623 = vmatmul.f32.gmra.mxu0 %v605
    %v624 = vpop.f32.mrf.mxu0
    %v625 = vadd.f32 %v156, %v624
    %626 = vdwg.mxu0
    %v627 = vsub.f32 0.0, %v625
    %v628 = vmul.f32 %v627, 1.442695
    %v629 = vpow.pop %v628
    %v630 = vadd.f32 %v629, 1.0
    %v631 = vrcp.pop %v630
    %v632 = vmul.f32 %v630, %v631
    %v633 = vsub.f32 1.0, %v632
    %v634 = vmul.f32 %v631, %v633
    %v635 = vadd.f32 %v631, %v634
    %vm636 = vweird.f32 %v630
    %vm637 = vweird.f32 %v631
    %vm638 = vmor %vm636, %vm637
    %v639 = vsel %vm638, %v631, %v635
    %v640 = vand.u32 2147483647, %v630
    %vm641 = vcmp.eq.f32.partialorder %v640, 8.507059e+37
    %v642 = vand.u32 %v630, 2147483648
    %v643 = vor.u32 1.1754944e-38, %v642
    %v644 = vsel %vm641, %v643, %v639
    %v645 = vmul.f32 1.0, %v644
    %v646 = vtanh.pop %v625
    %v647 = vmul.f32 %v645, %v509
    %649 = vrot.lane.b32.xlu0 %v646, 64
    %v650 = vpop.permute.xlu0 %649
    %v652 = vmul.f32 %v645, %v650
    %654 = vrot.lane.b32.xlu0 %v652, 32
    %v655 = vpop.permute.xlu0 %654
    %v657 = vadd.f32 %v647, %v655
    %v658 = vtanh.pop %v657
    %660 = vrot.lane.b32.xlu0 %v658, 64
    %v661 = vpop.permute.xlu0 %660
    %v663 = vmul.f32 %v645, %v661
    %665 = vrot.lane.b32.xlu0 %v663, 32
    %v666 = vpop.permute.xlu0 %665
    %669 = vrot.lane.b32.xlu0 %v584, 64
    %v670 = vpop.permute.xlu0 %669
    %v672 = vsel %vm223, %v666, %v670
    %v674 = vsel %vm228, %v672, 0
    %676 = vmatpush.msra.mxu0 0.0
    %677 = vmatpush.msra.mxu0 0.0
    %678 = vmatpush.msra.mxu0 0.0
    %679 = vmatpush.msra.mxu0 0.0
    %680 = vmatpush.msra.mxu0 0.0
    %681 = vmatpush.msra.mxu0 0.0
    %682 = vmatpush.msra.mxu0 0.0
    %683 = vmatpush.msra.mxu0 0.0
    %684 = vmatpush.msra.mxu0 %v133
    %685 = vmatpush.msra.mxu0 %v132
    %686 = vmatpush.msra.mxu0 %v131
    %687 = vmatpush.msra.mxu0 %v130
    %688 = vmatpush.msra.mxu0 %v129
    %689 = vmatpush.msra.mxu0 %v128
    %690 = vmatpush.msra.mxu0 %v127
    %691 = vmatpush.msra.mxu0 %v126
    %692 = vmatmul.f32.gmra.mxu0 %v674
    %v693 = vpop.f32.mrf.mxu0
    %v694 = vadd.f32 %v226, %v693
    %695 = vdwg.mxu0
    %v696 = vsub.f32 0.0, %v694
    %v697 = vmul.f32 %v696, 1.442695
    %v698 = vpow.pop %v697
    %v699 = vadd.f32 %v698, 1.0
    %v700 = vrcp.pop %v699
    %v701 = vmul.f32 %v699, %v700
    %v702 = vsub.f32 1.0, %v701
    %v703 = vmul.f32 %v700, %v702
    %v704 = vadd.f32 %v700, %v703
    %vm705 = vweird.f32 %v699
    %vm706 = vweird.f32 %v700
    %vm707 = vmor %vm705, %vm706
    %v708 = vsel %vm707, %v700, %v704
    %v709 = vand.u32 2147483647, %v699
    %vm710 = vcmp.eq.f32.partialorder %v709, 8.507059e+37
    %v711 = vand.u32 %v699, 2147483648
    %v712 = vor.u32 1.1754944e-38, %v711
    %v713 = vsel %vm710, %v712, %v708
    %v714 = vmul.f32 1.0, %v713
    %v715 = vtanh.pop %v694
    %v716 = vmul.f32 %v714, %v578
    %718 = vrot.lane.b32.xlu0 %v715, 64
    %v719 = vpop.permute.xlu0 %718
    %v721 = vmul.f32 %v714, %v719
    %723 = vrot.lane.b32.xlu0 %v721, 32
    %v724 = vpop.permute.xlu0 %723
    %v726 = vadd.f32 %v716, %v724
    %v727 = vtanh.pop %v726
    %729 = vrot.lane.b32.xlu0 %v727, 64
    %v730 = vpop.permute.xlu0 %729
    %v732 = vmul.f32 %v714, %v730
    %v733 = vld [vmem:[#allocation2 + $0x4] sm:$0x1]
    %v734 = vld [vmem:[#allocation2 + $0xc] sm:$0x1]
    %v735 = vld [vmem:[#allocation2 + $0x14] sm:$0x1]
    %v736 = vld [vmem:[#allocation2 + $0x1c] sm:$0x1]
    %v741 = vrot.slane %v734, 7
    %v742 = vsel %vm144, %v741, %v733
    %v743 = vrot.slane %v735, 6
    %v744 = vsel %vm147, %v743, %v742
    %v745 = vrot.slane %v736, 5
    %v746 = vsel %vm150, %v745, %v744
    %748 = vrot.lane.b32.xlu0 %v663, 40
    %v749 = vpop.permute.xlu0 %748
    %v751 = vsel %vm153, %v746, %v749
    %v753 = vsel %vm158, %v751, 0
    %755 = vmatpush.msra.mxu0 0.0
    %756 = vmatpush.msra.mxu0 0.0
    %757 = vmatpush.msra.mxu0 0.0
    %758 = vmatpush.msra.mxu0 0.0
    %759 = vmatpush.msra.mxu0 0.0
    %760 = vmatpush.msra.mxu0 0.0
    %761 = vmatpush.msra.mxu0 0.0
    %762 = vmatpush.msra.mxu0 0.0
    %763 = vmatpush.msra.mxu0 0.0
    %764 = vmatpush.msra.mxu0 0.0
    %765 = vmatpush.msra.mxu0 0.0
    %766 = vmatpush.msra.mxu0 %v124
    %767 = vmatpush.msra.mxu0 %v123
    %768 = vmatpush.msra.mxu0 %v122
    %769 = vmatpush.msra.mxu0 %v121
    %770 = vmatpush.msra.mxu0 %v120
    %771 = vmatmul.f32.gmra.mxu0 %v753
    %v772 = vpop.f32.mrf.mxu0
    %v773 = vadd.f32 %v156, %v772
    %774 = vdwg.mxu0
    %v775 = vsub.f32 0.0, %v773
    %v776 = vmul.f32 %v775, 1.442695
    %v777 = vpow.pop %v776
    %v778 = vadd.f32 %v777, 1.0
    %v779 = vrcp.pop %v778
    %v780 = vmul.f32 %v778, %v779
    %v781 = vsub.f32 1.0, %v780
    %v782 = vmul.f32 %v779, %v781
    %v783 = vadd.f32 %v779, %v782
    %vm784 = vweird.f32 %v778
    %vm785 = vweird.f32 %v779
    %vm786 = vmor %vm784, %vm785
    %v787 = vsel %vm786, %v779, %v783
    %v788 = vand.u32 2147483647, %v778
    %vm789 = vcmp.eq.f32.partialorder %v788, 8.507059e+37
    %v790 = vand.u32 %v778, 2147483648
    %v791 = vor.u32 1.1754944e-38, %v790
    %v792 = vsel %vm789, %v791, %v787
    %v793 = vmul.f32 1.0, %v792
    %v794 = vtanh.pop %v773
    %v795 = vmul.f32 %v793, %v657
    %797 = vrot.lane.b32.xlu0 %v794, 64
    %v798 = vpop.permute.xlu0 %797
    %v800 = vmul.f32 %v793, %v798
    %802 = vrot.lane.b32.xlu0 %v800, 32
    %v803 = vpop.permute.xlu0 %802
    %v805 = vadd.f32 %v795, %v803
    %v806 = vtanh.pop %v805
    %808 = vrot.lane.b32.xlu0 %v806, 64
    %v809 = vpop.permute.xlu0 %808
    %v811 = vmul.f32 %v793, %v809
    %813 = vrot.lane.b32.xlu0 %v811, 32
    %v814 = vpop.permute.xlu0 %813
    %817 = vrot.lane.b32.xlu0 %v732, 64
    %v818 = vpop.permute.xlu0 %817
    %v820 = vsel %vm223, %v814, %v818
    %v822 = vsel %vm228, %v820, 0
    %824 = vmatpush.msra.mxu0 0.0
    %825 = vmatpush.msra.mxu0 0.0
    %826 = vmatpush.msra.mxu0 0.0
    %827 = vmatpush.msra.mxu0 0.0
    %828 = vmatpush.msra.mxu0 0.0
    %829 = vmatpush.msra.mxu0 0.0
    %830 = vmatpush.msra.mxu0 0.0
    %831 = vmatpush.msra.mxu0 0.0
    %832 = vmatpush.msra.mxu0 %v133
    %833 = vmatpush.msra.mxu0 %v132
    %834 = vmatpush.msra.mxu0 %v131
    %835 = vmatpush.msra.mxu0 %v130
    %836 = vmatpush.msra.mxu0 %v129
    %837 = vmatpush.msra.mxu0 %v128
    %838 = vmatpush.msra.mxu0 %v127
    %839 = vmatpush.msra.mxu0 %v126
    %840 = vmatmul.f32.gmra.mxu0 %v822
    %v841 = vpop.f32.mrf.mxu0
    %v842 = vadd.f32 %v226, %v841
    %843 = vdwg.mxu0
    %v844 = vsub.f32 0.0, %v842
    %v845 = vmul.f32 %v844, 1.442695
    %v846 = vpow.pop %v845
    %v847 = vadd.f32 %v846, 1.0
    %v848 = vrcp.pop %v847
    %v849 = vmul.f32 %v847, %v848
    %v850 = vsub.f32 1.0, %v849
    %v851 = vmul.f32 %v848, %v850
    %v852 = vadd.f32 %v848, %v851
    %vm853 = vweird.f32 %v847
    %vm854 = vweird.f32 %v848
    %vm855 = vmor %vm853, %vm854
    %v856 = vsel %vm855, %v848, %v852
    %v857 = vand.u32 2147483647, %v847
    %vm858 = vcmp.eq.f32.partialorder %v857, 8.507059e+37
    %v859 = vand.u32 %v847, 2147483648
    %v860 = vor.u32 1.1754944e-38, %v859
    %v861 = vsel %vm858, %v860, %v856
    %v862 = vmul.f32 1.0, %v861
    %v863 = vtanh.pop %v842
    %v864 = vmul.f32 %v862, %v726
    %866 = vrot.lane.b32.xlu0 %v863, 64
    %v867 = vpop.permute.xlu0 %866
    %v869 = vmul.f32 %v862, %v867
    %871 = vrot.lane.b32.xlu0 %v869, 32
    %v872 = vpop.permute.xlu0 %871
    %v874 = vadd.f32 %v864, %v872
    %v875 = vtanh.pop %v874
    %877 = vrot.lane.b32.xlu0 %v875, 64
    %v878 = vpop.permute.xlu0 %877
    %v880 = vmul.f32 %v862, %v878
    %v881 = vld [vmem:[#allocation2 + $0x5] sm:$0x1]
    %v882 = vld [vmem:[#allocation2 + $0xd] sm:$0x1]
    %v883 = vld [vmem:[#allocation2 + $0x15] sm:$0x1]
    %v884 = vld [vmem:[#allocation2 + $0x1d] sm:$0x1]
    %v889 = vrot.slane %v882, 7
    %v890 = vsel %vm144, %v889, %v881
    %v891 = vrot.slane %v883, 6
    %v892 = vsel %vm147, %v891, %v890
    %v893 = vrot.slane %v884, 5
    %v894 = vsel %vm150, %v893, %v892
    %896 = vrot.lane.b32.xlu0 %v811, 40
    %v897 = vpop.permute.xlu0 %896
    %v899 = vsel %vm153, %v894, %v897
    %v901 = vsel %vm158, %v899, 0
    %903 = vmatpush.msra.mxu0 0.0
    %904 = vmatpush.msra.mxu0 0.0
    %905 = vmatpush.msra.mxu0 0.0
    %906 = vmatpush.msra.mxu0 0.0
    %907 = vmatpush.msra.mxu0 0.0
    %908 = vmatpush.msra.mxu0 0.0
    %909 = vmatpush.msra.mxu0 0.0
    %910 = vmatpush.msra.mxu0 0.0
    %911 = vmatpush.msra.mxu0 0.0
    %912 = vmatpush.msra.mxu0 0.0
    %913 = vmatpush.msra.mxu0 0.0
    %914 = vmatpush.msra.mxu0 %v124
    %915 = vmatpush.msra.mxu0 %v123
    %916 = vmatpush.msra.mxu0 %v122
    %917 = vmatpush.msra.mxu0 %v121
    %918 = vmatpush.msra.mxu0 %v120
    %919 = vmatmul.f32.gmra.mxu0 %v901
    %v920 = vpop.f32.mrf.mxu0
    %v921 = vadd.f32 %v156, %v920
    %922 = vdwg.mxu0
    %v923 = vsub.f32 0.0, %v921
    %v924 = vmul.f32 %v923, 1.442695
    %v925 = vpow.pop %v924
    %v926 = vadd.f32 %v925, 1.0
    %v927 = vrcp.pop %v926
    %v928 = vmul.f32 %v926, %v927
    %v929 = vsub.f32 1.0, %v928
    %v930 = vmul.f32 %v927, %v929
    %v931 = vadd.f32 %v927, %v930
    %vm932 = vweird.f32 %v926
    %vm933 = vweird.f32 %v927
    %vm934 = vmor %vm932, %vm933
    %v935 = vsel %vm934, %v927, %v931
    %v936 = vand.u32 2147483647, %v926
    %vm937 = vcmp.eq.f32.partialorder %v936, 8.507059e+37
    %v938 = vand.u32 %v926, 2147483648
    %v939 = vor.u32 1.1754944e-38, %v938
    %v940 = vsel %vm937, %v939, %v935
    %v941 = vmul.f32 1.0, %v940
    %v942 = vtanh.pop %v921
    %v943 = vmul.f32 %v941, %v805
    %945 = vrot.lane.b32.xlu0 %v942, 64
    %v946 = vpop.permute.xlu0 %945
    %v948 = vmul.f32 %v941, %v946
    %950 = vrot.lane.b32.xlu0 %v948, 32
    %v951 = vpop.permute.xlu0 %950
    %v953 = vadd.f32 %v943, %v951
    %v954 = vtanh.pop %v953
    %956 = vrot.lane.b32.xlu0 %v954, 64
    %v957 = vpop.permute.xlu0 %956
    %v959 = vmul.f32 %v941, %v957
    %961 = vrot.lane.b32.xlu0 %v959, 32
    %v962 = vpop.permute.xlu0 %961
    %965 = vrot.lane.b32.xlu0 %v880, 64
    %v966 = vpop.permute.xlu0 %965
    %v968 = vsel %vm223, %v962, %v966
    %v970 = vsel %vm228, %v968, 0
    %972 = vmatpush.msra.mxu0 0.0
    %973 = vmatpush.msra.mxu0 0.0
    %974 = vmatpush.msra.mxu0 0.0
    %975 = vmatpush.msra.mxu0 0.0
    %976 = vmatpush.msra.mxu0 0.0
    %977 = vmatpush.msra.mxu0 0.0
    %978 = vmatpush.msra.mxu0 0.0
    %979 = vmatpush.msra.mxu0 0.0
    %980 = vmatpush.msra.mxu0 %v133
    %981 = vmatpush.msra.mxu0 %v132
    %982 = vmatpush.msra.mxu0 %v131
    %983 = vmatpush.msra.mxu0 %v130
    %984 = vmatpush.msra.mxu0 %v129
    %985 = vmatpush.msra.mxu0 %v128
    %986 = vmatpush.msra.mxu0 %v127
    %987 = vmatpush.msra.mxu0 %v126
    %988 = vmatmul.f32.gmra.mxu0 %v970
    %v989 = vpop.f32.mrf.mxu0
    %v990 = vadd.f32 %v226, %v989
    %991 = vdwg.mxu0
    %v992 = vsub.f32 0.0, %v990
    %v993 = vmul.f32 %v992, 1.442695
    %v994 = vpow.pop %v993
    %v995 = vadd.f32 %v994, 1.0
    %v996 = vrcp.pop %v995
    %v997 = vmul.f32 %v995, %v996
    %v998 = vsub.f32 1.0, %v997
    %v999 = vmul.f32 %v996, %v998
    %v1000 = vadd.f32 %v996, %v999
    %vm1001 = vweird.f32 %v995
    %vm1002 = vweird.f32 %v996
    %vm1003 = vmor %vm1001, %vm1002
    %v1004 = vsel %vm1003, %v996, %v1000
    %v1005 = vand.u32 2147483647, %v995
    %vm1006 = vcmp.eq.f32.partialorder %v1005, 8.507059e+37
    %v1007 = vand.u32 %v995, 2147483648
    %v1008 = vor.u32 1.1754944e-38, %v1007
    %v1009 = vsel %vm1006, %v1008, %v1004
    %v1010 = vmul.f32 1.0, %v1009
    %v1011 = vtanh.pop %v990
    %v1012 = vmul.f32 %v1010, %v874
    %1014 = vrot.lane.b32.xlu0 %v1011, 64
    %v1015 = vpop.permute.xlu0 %1014
    %v1017 = vmul.f32 %v1010, %v1015
    %1019 = vrot.lane.b32.xlu0 %v1017, 32
    %v1020 = vpop.permute.xlu0 %1019
    %v1022 = vadd.f32 %v1012, %v1020
    %v1023 = vtanh.pop %v1022
    %1025 = vrot.lane.b32.xlu0 %v1023, 64
    %v1026 = vpop.permute.xlu0 %1025
    %v1028 = vmul.f32 %v1010, %v1026
    %v1029 = vld [vmem:[#allocation2 + $0x6] sm:$0x1]
    %v1030 = vld [vmem:[#allocation2 + $0xe] sm:$0x1]
    %v1031 = vld [vmem:[#allocation2 + $0x16] sm:$0x1]
    %v1032 = vld [vmem:[#allocation2 + $0x1e] sm:$0x1]
    %v1037 = vrot.slane %v1030, 7
    %v1038 = vsel %vm144, %v1037, %v1029
    %v1039 = vrot.slane %v1031, 6
    %v1040 = vsel %vm147, %v1039, %v1038
    %v1041 = vrot.slane %v1032, 5
    %v1042 = vsel %vm150, %v1041, %v1040
    %1044 = vrot.lane.b32.xlu0 %v959, 40
    %v1045 = vpop.permute.xlu0 %1044
    %v1047 = vsel %vm153, %v1042, %v1045
    %v1049 = vsel %vm158, %v1047, 0
    %1051 = vmatpush.msra.mxu0 0.0
    %1052 = vmatpush.msra.mxu0 0.0
    %1053 = vmatpush.msra.mxu0 0.0
    %1054 = vmatpush.msra.mxu0 0.0
    %1055 = vmatpush.msra.mxu0 0.0
    %1056 = vmatpush.msra.mxu0 0.0
    %1057 = vmatpush.msra.mxu0 0.0
    %1058 = vmatpush.msra.mxu0 0.0
    %1059 = vmatpush.msra.mxu0 0.0
    %1060 = vmatpush.msra.mxu0 0.0
    %1061 = vmatpush.msra.mxu0 0.0
    %1062 = vmatpush.msra.mxu0 %v124
    %1063 = vmatpush.msra.mxu0 %v123
    %1064 = vmatpush.msra.mxu0 %v122
    %1065 = vmatpush.msra.mxu0 %v121
    %1066 = vmatpush.msra.mxu0 %v120
    %1067 = vmatmul.f32.gmra.mxu0 %v1049
    %v1068 = vpop.f32.mrf.mxu0
    %v1069 = vadd.f32 %v156, %v1068
    %1070 = vdwg.mxu0
    %v1071 = vsub.f32 0.0, %v1069
    %v1072 = vmul.f32 %v1071, 1.442695
    %v1073 = vpow.pop %v1072
    %v1074 = vadd.f32 %v1073, 1.0
    %v1075 = vrcp.pop %v1074
    %v1076 = vmul.f32 %v1074, %v1075
    %v1077 = vsub.f32 1.0, %v1076
    %v1078 = vmul.f32 %v1075, %v1077
    %v1079 = vadd.f32 %v1075, %v1078
    %vm1080 = vweird.f32 %v1074
    %vm1081 = vweird.f32 %v1075
    %vm1082 = vmor %vm1080, %vm1081
    %v1083 = vsel %vm1082, %v1075, %v1079
    %v1084 = vand.u32 2147483647, %v1074
    %vm1085 = vcmp.eq.f32.partialorder %v1084, 8.507059e+37
    %v1086 = vand.u32 %v1074, 2147483648
    %v1087 = vor.u32 1.1754944e-38, %v1086
    %v1088 = vsel %vm1085, %v1087, %v1083
    %v1089 = vmul.f32 1.0, %v1088
    %v1090 = vtanh.pop %v1069
    %v1091 = vmul.f32 %v1089, %v953
    %1093 = vrot.lane.b32.xlu0 %v1090, 64
    %v1094 = vpop.permute.xlu0 %1093
    %v1096 = vmul.f32 %v1089, %v1094
    %1098 = vrot.lane.b32.xlu0 %v1096, 32
    %v1099 = vpop.permute.xlu0 %1098
    %v1101 = vadd.f32 %v1091, %v1099
    %v1102 = vtanh.pop %v1101
    %1104 = vrot.lane.b32.xlu0 %v1102, 64
    %v1105 = vpop.permute.xlu0 %1104
    %v1107 = vmul.f32 %v1089, %v1105
    %1109 = vrot.lane.b32.xlu0 %v1107, 32
    %v1110 = vpop.permute.xlu0 %1109
    %1113 = vrot.lane.b32.xlu0 %v1028, 64
    %v1114 = vpop.permute.xlu0 %1113
    %v1116 = vsel %vm223, %v1110, %v1114
    %v1118 = vsel %vm228, %v1116, 0
    %1120 = vmatpush.msra.mxu0 0.0
    %1121 = vmatpush.msra.mxu0 0.0
    %1122 = vmatpush.msra.mxu0 0.0
    %1123 = vmatpush.msra.mxu0 0.0
    %1124 = vmatpush.msra.mxu0 0.0
    %1125 = vmatpush.msra.mxu0 0.0
    %1126 = vmatpush.msra.mxu0 0.0
    %1127 = vmatpush.msra.mxu0 0.0
    %1128 = vmatpush.msra.mxu0 %v133
    %1129 = vmatpush.msra.mxu0 %v132
    %1130 = vmatpush.msra.mxu0 %v131
    %1131 = vmatpush.msra.mxu0 %v130
    %1132 = vmatpush.msra.mxu0 %v129
    %1133 = vmatpush.msra.mxu0 %v128
    %1134 = vmatpush.msra.mxu0 %v127
    %1135 = vmatpush.msra.mxu0 %v126
    %1136 = vmatmul.f32.gmra.mxu0 %v1118
    %v1137 = vpop.f32.mrf.mxu0
    %v1138 = vadd.f32 %v226, %v1137
    %1139 = vdwg.mxu0
    %v1140 = vsub.f32 0.0, %v1138
    %v1141 = vmul.f32 %v1140, 1.442695
    %v1142 = vpow.pop %v1141
    %v1143 = vadd.f32 %v1142, 1.0
    %v1144 = vrcp.pop %v1143
    %v1145 = vmul.f32 %v1143, %v1144
    %v1146 = vsub.f32 1.0, %v1145
    %v1147 = vmul.f32 %v1144, %v1146
    %v1148 = vadd.f32 %v1144, %v1147
    %vm1149 = vweird.f32 %v1143
    %vm1150 = vweird.f32 %v1144
    %vm1151 = vmor %vm1149, %vm1150
    %v1152 = vsel %vm1151, %v1144, %v1148
    %v1153 = vand.u32 2147483647, %v1143
    %vm1154 = vcmp.eq.f32.partialorder %v1153, 8.507059e+37
    %v1155 = vand.u32 %v1143, 2147483648
    %v1156 = vor.u32 1.1754944e-38, %v1155
    %v1157 = vsel %vm1154, %v1156, %v1152
    %v1158 = vmul.f32 1.0, %v1157
    %v1159 = vtanh.pop %v1138
    %v1160 = vmul.f32 %v1158, %v1022
    %1162 = vrot.lane.b32.xlu0 %v1159, 64
    %v1163 = vpop.permute.xlu0 %1162
    %v1165 = vmul.f32 %v1158, %v1163
    %1167 = vrot.lane.b32.xlu0 %v1165, 32
    %v1168 = vpop.permute.xlu0 %1167
    %v1170 = vadd.f32 %v1160, %v1168
    %v1171 = vtanh.pop %v1170
    %1173 = vrot.lane.b32.xlu0 %v1171, 64
    %v1174 = vpop.permute.xlu0 %1173
    %v1176 = vmul.f32 %v1158, %v1174
    %v1177 = vld [vmem:[#allocation2 + $0x7] sm:$0x1]
    %v1178 = vld [vmem:[#allocation2 + $0xf] sm:$0x1]
    %v1179 = vld [vmem:[#allocation2 + $0x17] sm:$0x1]
    %v1180 = vld [vmem:[#allocation2 + $0x1f] sm:$0x1]
    %v1185 = vrot.slane %v1178, 7
    %v1186 = vsel %vm144, %v1185, %v1177
    %v1187 = vrot.slane %v1179, 6
    %v1188 = vsel %vm147, %v1187, %v1186
    %v1189 = vrot.slane %v1180, 5
    %v1190 = vsel %vm150, %v1189, %v1188
    %1192 = vrot.lane.b32.xlu0 %v1107, 40
    %v1193 = vpop.permute.xlu0 %1192
    %v1195 = vsel %vm153, %v1190, %v1193
    %v1197 = vsel %vm158, %v1195, 0
    %1199 = vmatpush.msra.mxu0 0.0
    %1200 = vmatpush.msra.mxu0 0.0
    %1201 = vmatpush.msra.mxu0 0.0
    %1202 = vmatpush.msra.mxu0 0.0
    %1203 = vmatpush.msra.mxu0 0.0
    %1204 = vmatpush.msra.mxu0 0.0
    %1205 = vmatpush.msra.mxu0 0.0
    %1206 = vmatpush.msra.mxu0 0.0
    %1207 = vmatpush.msra.mxu0 0.0
    %1208 = vmatpush.msra.mxu0 0.0
    %1209 = vmatpush.msra.mxu0 0.0
    %1210 = vmatpush.msra.mxu0 %v124
    %1211 = vmatpush.msra.mxu0 %v123
    %1212 = vmatpush.msra.mxu0 %v122
    %1213 = vmatpush.msra.mxu0 %v121
    %1214 = vmatpush.msra.mxu0 %v120
    %1215 = vmatmul.f32.gmra.mxu0 %v1197
    %v1216 = vpop.f32.mrf.mxu0
    %v1217 = vadd.f32 %v156, %v1216
    %1218 = vdwg.mxu0
    %v1219 = vsub.f32 0.0, %v1217
    %v1220 = vmul.f32 %v1219, 1.442695
    %v1221 = vpow.pop %v1220
    %v1222 = vadd.f32 %v1221, 1.0
    %v1223 = vrcp.pop %v1222
    %v1224 = vmul.f32 %v1222, %v1223
    %v1225 = vsub.f32 1.0, %v1224
    %v1226 = vmul.f32 %v1223, %v1225
    %v1227 = vadd.f32 %v1223, %v1226
    %vm1228 = vweird.f32 %v1222
    %vm1229 = vweird.f32 %v1223
    %vm1230 = vmor %vm1228, %vm1229
    %v1231 = vsel %vm1230, %v1223, %v1227
    %v1232 = vand.u32 2147483647, %v1222
    %vm1233 = vcmp.eq.f32.partialorder %v1232, 8.507059e+37
    %v1234 = vand.u32 %v1222, 2147483648
    %v1235 = vor.u32 1.1754944e-38, %v1234
    %v1236 = vsel %vm1233, %v1235, %v1231
    %v1237 = vmul.f32 1.0, %v1236
    %v1238 = vtanh.pop %v1217
    %v1239 = vmul.f32 %v1237, %v1101
    %1241 = vrot.lane.b32.xlu0 %v1238, 64
    %v1242 = vpop.permute.xlu0 %1241
    %v1244 = vmul.f32 %v1237, %v1242
    %1246 = vrot.lane.b32.xlu0 %v1244, 32
    %v1247 = vpop.permute.xlu0 %1246
    %v1249 = vadd.f32 %v1239, %v1247
    %v1250 = vtanh.pop %v1249
    %1252 = vrot.lane.b32.xlu0 %v1250, 64
    %v1253 = vpop.permute.xlu0 %1252
    %v1255 = vmul.f32 %v1237, %v1253
    %1257 = vrot.lane.b32.xlu0 %v1255, 32
    %v1258 = vpop.permute.xlu0 %1257
    %1261 = vrot.lane.b32.xlu0 %v1176, 64
    %v1262 = vpop.permute.xlu0 %1261
    %v1264 = vsel %vm223, %v1258, %v1262
    %v1266 = vsel %vm228, %v1264, 0
    %1268 = vmatpush.msra.mxu0 0.0
    %1269 = vmatpush.msra.mxu0 0.0
    %1270 = vmatpush.msra.mxu0 0.0
    %1271 = vmatpush.msra.mxu0 0.0
    %1272 = vmatpush.msra.mxu0 0.0
    %1273 = vmatpush.msra.mxu0 0.0
    %1274 = vmatpush.msra.mxu0 0.0
    %1275 = vmatpush.msra.mxu0 0.0
    %1276 = vmatpush.msra.mxu0 %v133
    %1277 = vmatpush.msra.mxu0 %v132
    %1278 = vmatpush.msra.mxu0 %v131
    %1279 = vmatpush.msra.mxu0 %v130
    %1280 = vmatpush.msra.mxu0 %v129
    %1281 = vmatpush.msra.mxu0 %v128
    %1282 = vmatpush.msra.mxu0 %v127
    %1283 = vmatpush.msra.mxu0 %v126
    %1284 = vmatmul.f32.gmra.mxu0 %v1266
    %v1285 = vpop.f32.mrf.mxu0
    %v1286 = vadd.f32 %v226, %v1285
    %1287 = vdwg.mxu0
    %v1288 = vsub.f32 0.0, %v1286
    %v1289 = vmul.f32 %v1288, 1.442695
    %v1290 = vpow.pop %v1289
    %v1291 = vadd.f32 %v1290, 1.0
    %v1292 = vrcp.pop %v1291
    %v1293 = vmul.f32 %v1291, %v1292
    %v1294 = vsub.f32 1.0, %v1293
    %v1295 = vmul.f32 %v1292, %v1294
    %v1296 = vadd.f32 %v1292, %v1295
    %vm1297 = vweird.f32 %v1291
    %vm1298 = vweird.f32 %v1292
    %vm1299 = vmor %vm1297, %vm1298
    %v1300 = vsel %vm1299, %v1292, %v1296
    %v1301 = vand.u32 2147483647, %v1291
    %vm1302 = vcmp.eq.f32.partialorder %v1301, 8.507059e+37
    %v1303 = vand.u32 %v1291, 2147483648
    %v1304 = vor.u32 1.1754944e-38, %v1303
    %v1305 = vsel %vm1302, %v1304, %v1300
    %v1306 = vmul.f32 1.0, %v1305
    %v1307 = vtanh.pop %v1286
    %v1308 = vmul.f32 %v1306, %v1170
    %1310 = vrot.lane.b32.xlu0 %v1307, 64
    %v1311 = vpop.permute.xlu0 %1310
    %v1313 = vmul.f32 %v1306, %v1311
    %1315 = vrot.lane.b32.xlu0 %v1313, 32
    %v1316 = vpop.permute.xlu0 %1315
    %v1318 = vadd.f32 %v1308, %v1316
    %v1319 = vtanh.pop %v1318
    %1321 = vrot.lane.b32.xlu0 %v1319, 64
    %v1322 = vpop.permute.xlu0 %1321
    %v1324 = vmul.f32 %v1306, %v1322
    %v1325 = vld [vmem:[#allocation7] sm:$0xff]
    %v1326 = vld [vmem:[#allocation7 + $0x8] sm:$0xff]
    %v1327 = vld [vmem:[#allocation7 + $0x10] sm:$0xff]
    %v1328 = vld [vmem:[#allocation7 + $0x18] sm:$0xff]
    %v1329 = vld [vmem:[%s6] sm:$0x1]
    %v1331 = vperm.slane %v1329, 0
    %1334 = vrot.lane.b32.xlu0 %v1324, 32
    %v1335 = vpop.permute.xlu0 %1334
    %v1336 = vsel %vm223, %v1335, 0
    %1338 = vmatpush.msra.mxu0 0.0
    %1339 = vmatpush.msra.mxu0 0.0
    %1340 = vmatpush.msra.mxu0 0.0
    %1341 = vmatpush.msra.mxu0 0.0
    %1342 = vmatpush.msra.mxu0 0.0
    %1343 = vmatpush.msra.mxu0 0.0
    %1344 = vmatpush.msra.mxu0 0.0
    %1345 = vmatpush.msra.mxu0 0.0
    %1346 = vmatpush.msra.mxu0 0.0
    %1347 = vmatpush.msra.mxu0 0.0
    %1348 = vmatpush.msra.mxu0 0.0
    %1349 = vmatpush.msra.mxu0 0.0
    %1350 = vmatpush.msra.mxu0 %v1328
    %1351 = vmatpush.msra.mxu0 %v1327
    %1352 = vmatpush.msra.mxu0 %v1326
    %1353 = vmatpush.msra.mxu0 %v1325
    %1354 = vmatmul.f32.gmra.mxu0 %v1336
    %v1355 = vpop.f32.mrf.mxu0
    %v1356 = vadd.f32 %v1331, %v1355
    %1357 = vdwg.mxu0
    %1359 = vrot.lane.b32.xlu0 %v1356, 96
    %v1360 = vpop.permute.xlu0 %1359
    %vm1361 = vcmask 31744
    %v1362 = vsel %vm1361, %v1356, 0
    %v1364 = vsel %vm1361, %v1360, 0
    %1366 = vmatpush.xpose.msra.mxu0 0.0
    %1367 = vmatpush.xpose.msra.mxu0 0.0
    %1368 = vmatpush.xpose.msra.mxu0 0.0
    %1369 = vmatpush.xpose.msra.mxu0 0.0
    %1370 = vmatpush.xpose.msra.mxu0 0.0
    %1371 = vmatpush.xpose.msra.mxu0 0.0
    %1372 = vmatpush.xpose.msra.mxu0 0.0
    %1373 = vmatpush.xpose.msra.mxu0 0.0
    %1374 = vmatpush.xpose.msra.mxu0 0.0
    %1375 = vmatpush.xpose.msra.mxu0 0.0
    %1376 = vmatpush.xpose.msra.mxu0 0.0
    %1377 = vmatpush.xpose.msra.mxu0 0.0
    %1378 = vmatpush.xpose.msra.mxu0 0.0
    %1379 = vmatpush.xpose.msra.mxu0 0.0
    %1380 = vmatpush.xpose.msra.mxu0 0.0
    %1381 = vmatpush.xpose.msra.mxu0 %v1364
    %1382 = vmatmul.f32.gmra.mxu0 %v1362
    %v1383 = vpop.f32.mrf.mxu0
    %v1384 = vadd.f32 0.0, %v1383
    %1385 = vdwg.mxu0
    %v1386 = vmul.f32 %v1384, 0.5
    %vm1387 = vcmask 27648
    %v1388 = vsel %vm1387, %v1386, -inf
    %1389 = vmax.xlane.f32.xlu0 %v1388
    %v1390 = vpop.xlane.xlu0 %1389
    %v1391 = vsub.f32 %v1386, %v1390
    %v1392 = vmul.f32 %v1391, 1.442695
    %v1393 = vpow.pop %v1392
    %v1394 = vsel %vm1387, %v1393, 0.0
    %1395 = vadd.xlane.f32.xlu0 %v1394
    %v1396 = vpop.xlane.xlu0 %1395
    %v1397 = vrcp.pop %v1396
    %v1398 = vmul.f32 %v1393, %v1397
    %1399 = vrot.lane.b32.xlu0 %v1356, 64
    %v1400 = vpop.permute.xlu0 %1399
    %v1402 = vsel %vm1361, %v1398, 0
    %vm1404 = vcmask 1043456
    %v1405 = vsel %vm1404, %v1400, 0
    %1407 = vmatpush.msra.mxu0 0.0
    %1408 = vmatpush.msra.mxu0 0.0
    %1409 = vmatpush.msra.mxu0 0.0
    %1410 = vmatpush.msra.mxu0 0.0
    %1411 = vmatpush.msra.mxu0 0.0
    %1412 = vmatpush.msra.mxu0 0.0
    %1413 = vmatpush.msra.mxu0 0.0
    %1414 = vmatpush.msra.mxu0 0.0
    %1415 = vmatpush.msra.mxu0 0.0
    %1416 = vmatpush.msra.mxu0 0.0
    %1417 = vmatpush.msra.mxu0 0.0
    %1418 = vmatpush.msra.mxu0 0.0
    %1419 = vmatpush.msra.mxu0 0.0
    %1420 = vmatpush.msra.mxu0 0.0
    %1421 = vmatpush.msra.mxu0 0.0
    %1422 = vmatpush.msra.mxu0 %v1405
    %1423 = vmatmul.f32.gmra.mxu0 %v1402
    %v1424 = vpop.f32.mrf.mxu0
    %v1425 = vadd.f32 0.0, %v1424
    %1426 = vdwg.mxu0
    %1427 = vrot.lane.b32.xlu0 %v1356, 124
    %v1428 = vpop.permute.xlu0 %1427
    %1429 = vrot.lane.b32.xlu0 %v1356, 92
    %v1430 = vpop.permute.xlu0 %1429
    %v1431 = vsel %vm1361, %v1428, 0
    %v1433 = vsel %vm1361, %v1430, 0
    %1435 = vmatpush.xpose.msra.mxu0 0.0
    %1436 = vmatpush.xpose.msra.mxu0 0.0
    %1437 = vmatpush.xpose.msra.mxu0 0.0
    %1438 = vmatpush.xpose.msra.mxu0 0.0
    %1439 = vmatpush.xpose.msra.mxu0 0.0
    %1440 = vmatpush.xpose.msra.mxu0 0.0
    %1441 = vmatpush.xpose.msra.mxu0 0.0
    %1442 = vmatpush.xpose.msra.mxu0 0.0
    %1443 = vmatpush.xpose.msra.mxu0 0.0
    %1444 = vmatpush.xpose.msra.mxu0 0.0
    %1445 = vmatpush.xpose.msra.mxu0 0.0
    %1446 = vmatpush.xpose.msra.mxu0 0.0
    %1447 = vmatpush.xpose.msra.mxu0 0.0
    %1448 = vmatpush.xpose.msra.mxu0 0.0
    %1449 = vmatpush.xpose.msra.mxu0 0.0
    %1450 = vmatpush.xpose.msra.mxu0 %v1433
    %1451 = vmatmul.f32.gmra.mxu0 %v1431
    %v1452 = vpop.f32.mrf.mxu0
    %v1453 = vadd.f32 0.0, %v1452
    %1454 = vdwg.mxu0
    %v1455 = vmul.f32 %v1453, 0.5
    %v1456 = vsel %vm1387, %v1455, -inf
    %1457 = vmax.xlane.f32.xlu0 %v1456
    %v1458 = vpop.xlane.xlu0 %1457
    %v1459 = vsub.f32 %v1455, %v1458
    %v1460 = vmul.f32 %v1459, 1.442695
    %v1461 = vpow.pop %v1460
    %v1462 = vsel %vm1387, %v1461, 0.0
    %1463 = vadd.xlane.f32.xlu0 %v1462
    %v1464 = vpop.xlane.xlu0 %1463
    %v1465 = vrcp.pop %v1464
    %v1466 = vmul.f32 %v1461, %v1465
    %1467 = vrot.lane.b32.xlu0 %v1356, 60
    %v1468 = vpop.permute.xlu0 %1467
    %v1470 = vsel %vm1361, %v1466, 0
    %v1472 = vsel %vm1404, %v1468, 0
    %1474 = vmatpush.msra.mxu0 0.0
    %1475 = vmatpush.msra.mxu0 0.0
    %1476 = vmatpush.msra.mxu0 0.0
    %1477 = vmatpush.msra.mxu0 0.0
    %1478 = vmatpush.msra.mxu0 0.0
    %1479 = vmatpush.msra.mxu0 0.0
    %1480 = vmatpush.msra.mxu0 0.0
    %1481 = vmatpush.msra.mxu0 0.0
    %1482 = vmatpush.msra.mxu0 0.0
    %1483 = vmatpush.msra.mxu0 0.0
    %1484 = vmatpush.msra.mxu0 0.0
    %1485 = vmatpush.msra.mxu0 0.0
    %1486 = vmatpush.msra.mxu0 0.0
    %1487 = vmatpush.msra.mxu0 0.0
    %1488 = vmatpush.msra.mxu0 0.0
    %1489 = vmatpush.msra.mxu0 %v1472
    %1490 = vmatmul.f32.gmra.mxu0 %v1470
    %v1491 = vpop.f32.mrf.mxu0
    %v1492 = vadd.f32 0.0, %v1491
    %1493 = vdwg.mxu0
    %1494 = vrot.lane.b32.xlu0 %v1356, 120
    %v1495 = vpop.permute.xlu0 %1494
    %1496 = vrot.lane.b32.xlu0 %v1356, 88
    %v1497 = vpop.permute.xlu0 %1496
    %v1498 = vsel %vm1361, %v1495, 0
    %v1500 = vsel %vm1361, %v1497, 0
    %1502 = vmatpush.xpose.msra.mxu0 0.0
    %1503 = vmatpush.xpose.msra.mxu0 0.0
    %1504 = vmatpush.xpose.msra.mxu0 0.0
    %1505 = vmatpush.xpose.msra.mxu0 0.0
    %1506 = vmatpush.xpose.msra.mxu0 0.0
    %1507 = vmatpush.xpose.msra.mxu0 0.0
    %1508 = vmatpush.xpose.msra.mxu0 0.0
    %1509 = vmatpush.xpose.msra.mxu0 0.0
    %1510 = vmatpush.xpose.msra.mxu0 0.0
    %1511 = vmatpush.xpose.msra.mxu0 0.0
    %1512 = vmatpush.xpose.msra.mxu0 0.0
    %1513 = vmatpush.xpose.msra.mxu0 0.0
    %1514 = vmatpush.xpose.msra.mxu0 0.0
    %1515 = vmatpush.xpose.msra.mxu0 0.0
    %1516 = vmatpush.xpose.msra.mxu0 0.0
    %1517 = vmatpush.xpose.msra.mxu0 %v1500
    %1518 = vmatmul.f32.gmra.mxu0 %v1498
    %v1519 = vpop.f32.mrf.mxu0
    %v1520 = vadd.f32 0.0, %v1519
    %1521 = vdwg.mxu0
    %v1522 = vmul.f32 %v1520, 0.5
    %v1523 = vsel %vm1387, %v1522, -inf
    %1524 = vmax.xlane.f32.xlu0 %v1523
    %v1525 = vpop.xlane.xlu0 %1524
    %v1526 = vsub.f32 %v1522, %v1525
    %v1527 = vmul.f32 %v1526, 1.442695
    %v1528 = vpow.pop %v1527
    %v1529 = vsel %vm1387, %v1528, 0.0
    %1530 = vadd.xlane.f32.xlu0 %v1529
    %v1531 = vpop.xlane.xlu0 %1530
    %v1532 = vrcp.pop %v1531
    %v1533 = vmul.f32 %v1528, %v1532
    %1534 = vrot.lane.b32.xlu0 %v1356, 56
    %v1535 = vpop.permute.xlu0 %1534
    %v1537 = vsel %vm1361, %v1533, 0
    %v1539 = vsel %vm1404, %v1535, 0
    %1541 = vmatpush.msra.mxu0 0.0
    %1542 = vmatpush.msra.mxu0 0.0
    %1543 = vmatpush.msra.mxu0 0.0
    %1544 = vmatpush.msra.mxu0 0.0
    %1545 = vmatpush.msra.mxu0 0.0
    %1546 = vmatpush.msra.mxu0 0.0
    %1547 = vmatpush.msra.mxu0 0.0
    %1548 = vmatpush.msra.mxu0 0.0
    %1549 = vmatpush.msra.mxu0 0.0
    %1550 = vmatpush.msra.mxu0 0.0
    %1551 = vmatpush.msra.mxu0 0.0
    %1552 = vmatpush.msra.mxu0 0.0
    %1553 = vmatpush.msra.mxu0 0.0
    %1554 = vmatpush.msra.mxu0 0.0
    %1555 = vmatpush.msra.mxu0 0.0
    %1556 = vmatpush.msra.mxu0 %v1539
    %1557 = vmatmul.f32.gmra.mxu0 %v1537
    %v1558 = vpop.f32.mrf.mxu0
    %v1559 = vadd.f32 0.0, %v1558
    %1560 = vdwg.mxu0
    %1561 = vrot.lane.b32.xlu0 %v1356, 116
    %v1562 = vpop.permute.xlu0 %1561
    %1563 = vrot.lane.b32.xlu0 %v1356, 84
    %v1564 = vpop.permute.xlu0 %1563
    %v1565 = vsel %vm1361, %v1562, 0
    %v1567 = vsel %vm1361, %v1564, 0
    %1569 = vmatpush.xpose.msra.mxu0 0.0
    %1570 = vmatpush.xpose.msra.mxu0 0.0
    %1571 = vmatpush.xpose.msra.mxu0 0.0
    %1572 = vmatpush.xpose.msra.mxu0 0.0
    %1573 = vmatpush.xpose.msra.mxu0 0.0
    %1574 = vmatpush.xpose.msra.mxu0 0.0
    %1575 = vmatpush.xpose.msra.mxu0 0.0
    %1576 = vmatpush.xpose.msra.mxu0 0.0
    %1577 = vmatpush.xpose.msra.mxu0 0.0
    %1578 = vmatpush.xpose.msra.mxu0 0.0
    %1579 = vmatpush.xpose.msra.mxu0 0.0
    %1580 = vmatpush.xpose.msra.mxu0 0.0
    %1581 = vmatpush.xpose.msra.mxu0 0.0
    %1582 = vmatpush.xpose.msra.mxu0 0.0
    %1583 = vmatpush.xpose.msra.mxu0 0.0
    %1584 = vmatpush.xpose.msra.mxu0 %v1567
    %1585 = vmatmul.f32.gmra.mxu0 %v1565
    %v1586 = vpop.f32.mrf.mxu0
    %v1587 = vadd.f32 0.0, %v1586
    %1588 = vdwg.mxu0
    %v1589 = vmul.f32 %v1587, 0.5
    %v1590 = vsel %vm1387, %v1589, -inf
    %1591 = vmax.xlane.f32.xlu0 %v1590
    %v1592 = vpop.xlane.xlu0 %1591
    %v1593 = vsub.f32 %v1589, %v1592
    %v1594 = vmul.f32 %v1593, 1.442695
    %v1595 = vpow.pop %v1594
    %v1596 = vsel %vm1387, %v1595, 0.0
    %1597 = vadd.xlane.f32.xlu0 %v1596
    %v1598 = vpop.xlane.xlu0 %1597
    %v1599 = vrcp.pop %v1598
    %v1600 = vmul.f32 %v1595, %v1599
    %1601 = vrot.lane.b32.xlu0 %v1356, 52
    %v1602 = vpop.permute.xlu0 %1601
    %v1604 = vsel %vm1361, %v1600, 0
    %v1606 = vsel %vm1404, %v1602, 0
    %1608 = vmatpush.msra.mxu0 0.0
    %1609 = vmatpush.msra.mxu0 0.0
    %1610 = vmatpush.msra.mxu0 0.0
    %1611 = vmatpush.msra.mxu0 0.0
    %1612 = vmatpush.msra.mxu0 0.0
    %1613 = vmatpush.msra.mxu0 0.0
    %1614 = vmatpush.msra.mxu0 0.0
    %1615 = vmatpush.msra.mxu0 0.0
    %1616 = vmatpush.msra.mxu0 0.0
    %1617 = vmatpush.msra.mxu0 0.0
    %1618 = vmatpush.msra.mxu0 0.0
    %1619 = vmatpush.msra.mxu0 0.0
    %1620 = vmatpush.msra.mxu0 0.0
    %1621 = vmatpush.msra.mxu0 0.0
    %1622 = vmatpush.msra.mxu0 0.0
    %1623 = vmatpush.msra.mxu0 %v1606
    %1624 = vmatmul.f32.gmra.mxu0 %v1604
    %v1625 = vpop.f32.mrf.mxu0
    %v1626 = vadd.f32 0.0, %v1625
    %1627 = vdwg.mxu0
    %1628 = vrot.lane.b32.xlu0 %v1356, 112
    %v1629 = vpop.permute.xlu0 %1628
    %1630 = vrot.lane.b32.xlu0 %v1356, 80
    %v1631 = vpop.permute.xlu0 %1630
    %v1632 = vsel %vm1361, %v1629, 0
    %v1634 = vsel %vm1361, %v1631, 0
    %1636 = vmatpush.xpose.msra.mxu0 0.0
    %1637 = vmatpush.xpose.msra.mxu0 0.0
    %1638 = vmatpush.xpose.msra.mxu0 0.0
    %1639 = vmatpush.xpose.msra.mxu0 0.0
    %1640 = vmatpush.xpose.msra.mxu0 0.0
    %1641 = vmatpush.xpose.msra.mxu0 0.0
    %1642 = vmatpush.xpose.msra.mxu0 0.0
    %1643 = vmatpush.xpose.msra.mxu0 0.0
    %1644 = vmatpush.xpose.msra.mxu0 0.0
    %1645 = vmatpush.xpose.msra.mxu0 0.0
    %1646 = vmatpush.xpose.msra.mxu0 0.0
    %1647 = vmatpush.xpose.msra.mxu0 0.0
    %1648 = vmatpush.xpose.msra.mxu0 0.0
    %1649 = vmatpush.xpose.msra.mxu0 0.0
    %1650 = vmatpush.xpose.msra.mxu0 0.0
    %1651 = vmatpush.xpose.msra.mxu0 %v1634
    %1652 = vmatmul.f32.gmra.mxu0 %v1632
    %v1653 = vpop.f32.mrf.mxu0
    %v1654 = vadd.f32 0.0, %v1653
    %1655 = vdwg.mxu0
    %v1656 = vmul.f32 %v1654, 0.5
    %v1657 = vsel %vm1387, %v1656, -inf
    %1658 = vmax.xlane.f32.xlu0 %v1657
    %v1659 = vpop.xlane.xlu0 %1658
    %v1660 = vsub.f32 %v1656, %v1659
    %v1661 = vmul.f32 %v1660, 1.442695
    %v1662 = vpow.pop %v1661
    %v1663 = vsel %vm1387, %v1662, 0.0
    %1664 = vadd.xlane.f32.xlu0 %v1663
    %v1665 = vpop.xlane.xlu0 %1664
    %v1666 = vrcp.pop %v1665
    %v1667 = vmul.f32 %v1662, %v1666
    %1668 = vrot.lane.b32.xlu0 %v1356, 48
    %v1669 = vpop.permute.xlu0 %1668
    %v1671 = vsel %vm1361, %v1667, 0
    %v1673 = vsel %vm1404, %v1669, 0
    %1675 = vmatpush.msra.mxu0 0.0
    %1676 = vmatpush.msra.mxu0 0.0
    %1677 = vmatpush.msra.mxu0 0.0
    %1678 = vmatpush.msra.mxu0 0.0
    %1679 = vmatpush.msra.mxu0 0.0
    %1680 = vmatpush.msra.mxu0 0.0
    %1681 = vmatpush.msra.mxu0 0.0
    %1682 = vmatpush.msra.mxu0 0.0
    %1683 = vmatpush.msra.mxu0 0.0
    %1684 = vmatpush.msra.mxu0 0.0
    %1685 = vmatpush.msra.mxu0 0.0
    %1686 = vmatpush.msra.mxu0 0.0
    %1687 = vmatpush.msra.mxu0 0.0
    %1688 = vmatpush.msra.mxu0 0.0
    %1689 = vmatpush.msra.mxu0 0.0
    %1690 = vmatpush.msra.mxu0 %v1673
    %1691 = vmatmul.f32.gmra.mxu0 %v1671
    %v1692 = vpop.f32.mrf.mxu0
    %v1693 = vadd.f32 0.0, %v1692
    %1694 = vdwg.mxu0
    %1695 = vrot.lane.b32.xlu0 %v1356, 108
    %v1696 = vpop.permute.xlu0 %1695
    %1697 = vrot.lane.b32.xlu0 %v1356, 76
    %v1698 = vpop.permute.xlu0 %1697
    %v1699 = vsel %vm1361, %v1696, 0
    %v1701 = vsel %vm1361, %v1698, 0
    %1703 = vmatpush.xpose.msra.mxu0 0.0
    %1704 = vmatpush.xpose.msra.mxu0 0.0
    %1705 = vmatpush.xpose.msra.mxu0 0.0
    %1706 = vmatpush.xpose.msra.mxu0 0.0
    %1707 = vmatpush.xpose.msra.mxu0 0.0
    %1708 = vmatpush.xpose.msra.mxu0 0.0
    %1709 = vmatpush.xpose.msra.mxu0 0.0
    %1710 = vmatpush.xpose.msra.mxu0 0.0
    %1711 = vmatpush.xpose.msra.mxu0 0.0
    %1712 = vmatpush.xpose.msra.mxu0 0.0
    %1713 = vmatpush.xpose.msra.mxu0 0.0
    %1714 = vmatpush.xpose.msra.mxu0 0.0
    %1715 = vmatpush.xpose.msra.mxu0 0.0
    %1716 = vmatpush.xpose.msra.mxu0 0.0
    %1717 = vmatpush.xpose.msra.mxu0 0.0
    %1718 = vmatpush.xpose.msra.mxu0 %v1701
    %1719 = vmatmul.f32.gmra.mxu0 %v1699
    %v1720 = vpop.f32.mrf.mxu0
    %v1721 = vadd.f32 0.0, %v1720
    %1722 = vdwg.mxu0
    %v1723 = vmul.f32 %v1721, 0.5
    %v1724 = vsel %vm1387, %v1723, -inf
    %1725 = vmax.xlane.f32.xlu0 %v1724
    %v1726 = vpop.xlane.xlu0 %1725
    %v1727 = vsub.f32 %v1723, %v1726
    %v1728 = vmul.f32 %v1727, 1.442695
    %v1729 = vpow.pop %v1728
    %v1730 = vsel %vm1387, %v1729, 0.0
    %1731 = vadd.xlane.f32.xlu0 %v1730
    %v1732 = vpop.xlane.xlu0 %1731
    %v1733 = vrcp.pop %v1732
    %v1734 = vmul.f32 %v1729, %v1733
    %1735 = vrot.lane.b32.xlu0 %v1356, 44
    %v1736 = vpop.permute.xlu0 %1735
    %v1738 = vsel %vm1361, %v1734, 0
    %v1740 = vsel %vm1404, %v1736, 0
    %1742 = vmatpush.msra.mxu0 0.0
    %1743 = vmatpush.msra.mxu0 0.0
    %1744 = vmatpush.msra.mxu0 0.0
    %1745 = vmatpush.msra.mxu0 0.0
    %1746 = vmatpush.msra.mxu0 0.0
    %1747 = vmatpush.msra.mxu0 0.0
    %1748 = vmatpush.msra.mxu0 0.0
    %1749 = vmatpush.msra.mxu0 0.0
    %1750 = vmatpush.msra.mxu0 0.0
    %1751 = vmatpush.msra.mxu0 0.0
    %1752 = vmatpush.msra.mxu0 0.0
    %1753 = vmatpush.msra.mxu0 0.0
    %1754 = vmatpush.msra.mxu0 0.0
    %1755 = vmatpush.msra.mxu0 0.0
    %1756 = vmatpush.msra.mxu0 0.0
    %1757 = vmatpush.msra.mxu0 %v1740
    %1758 = vmatmul.f32.gmra.mxu0 %v1738
    %v1759 = vpop.f32.mrf.mxu0
    %v1760 = vadd.f32 0.0, %v1759
    %1761 = vdwg.mxu0
    %1762 = vrot.lane.b32.xlu0 %v1356, 104
    %v1763 = vpop.permute.xlu0 %1762
    %1764 = vrot.lane.b32.xlu0 %v1356, 72
    %v1765 = vpop.permute.xlu0 %1764
    %v1766 = vsel %vm1361, %v1763, 0
    %v1768 = vsel %vm1361, %v1765, 0
    %1770 = vmatpush.xpose.msra.mxu0 0.0
    %1771 = vmatpush.xpose.msra.mxu0 0.0
    %1772 = vmatpush.xpose.msra.mxu0 0.0
    %1773 = vmatpush.xpose.msra.mxu0 0.0
    %1774 = vmatpush.xpose.msra.mxu0 0.0
    %1775 = vmatpush.xpose.msra.mxu0 0.0
    %1776 = vmatpush.xpose.msra.mxu0 0.0
    %1777 = vmatpush.xpose.msra.mxu0 0.0
    %1778 = vmatpush.xpose.msra.mxu0 0.0
    %1779 = vmatpush.xpose.msra.mxu0 0.0
    %1780 = vmatpush.xpose.msra.mxu0 0.0
    %1781 = vmatpush.xpose.msra.mxu0 0.0
    %1782 = vmatpush.xpose.msra.mxu0 0.0
    %1783 = vmatpush.xpose.msra.mxu0 0.0
    %1784 = vmatpush.xpose.msra.mxu0 0.0
    %1785 = vmatpush.xpose.msra.mxu0 %v1768
    %1786 = vmatmul.f32.gmra.mxu0 %v1766
    %v1787 = vpop.f32.mrf.mxu0
    %v1788 = vadd.f32 0.0, %v1787
    %1789 = vdwg.mxu0
    %v1790 = vmul.f32 %v1788, 0.5
    %v1791 = vsel %vm1387, %v1790, -inf
    %1792 = vmax.xlane.f32.xlu0 %v1791
    %v1793 = vpop.xlane.xlu0 %1792
    %v1794 = vsub.f32 %v1790, %v1793
    %v1795 = vmul.f32 %v1794, 1.442695
    %v1796 = vpow.pop %v1795
    %v1797 = vsel %vm1387, %v1796, 0.0
    %1798 = vadd.xlane.f32.xlu0 %v1797
    %v1799 = vpop.xlane.xlu0 %1798
    %v1800 = vrcp.pop %v1799
    %v1801 = vmul.f32 %v1796, %v1800
    %1802 = vrot.lane.b32.xlu0 %v1356, 40
    %v1803 = vpop.permute.xlu0 %1802
    %v1805 = vsel %vm1361, %v1801, 0
    %v1807 = vsel %vm1404, %v1803, 0
    %1809 = vmatpush.msra.mxu0 0.0
    %1810 = vmatpush.msra.mxu0 0.0
    %1811 = vmatpush.msra.mxu0 0.0
    %1812 = vmatpush.msra.mxu0 0.0
    %1813 = vmatpush.msra.mxu0 0.0
    %1814 = vmatpush.msra.mxu0 0.0
    %1815 = vmatpush.msra.mxu0 0.0
    %1816 = vmatpush.msra.mxu0 0.0
    %1817 = vmatpush.msra.mxu0 0.0
    %1818 = vmatpush.msra.mxu0 0.0
    %1819 = vmatpush.msra.mxu0 0.0
    %1820 = vmatpush.msra.mxu0 0.0
    %1821 = vmatpush.msra.mxu0 0.0
    %1822 = vmatpush.msra.mxu0 0.0
    %1823 = vmatpush.msra.mxu0 0.0
    %1824 = vmatpush.msra.mxu0 %v1807
    %1825 = vmatmul.f32.gmra.mxu0 %v1805
    %v1826 = vpop.f32.mrf.mxu0
    %v1827 = vadd.f32 0.0, %v1826
    %1828 = vdwg.mxu0
    %1829 = vrot.lane.b32.xlu0 %v1356, 100
    %v1830 = vpop.permute.xlu0 %1829
    %1831 = vrot.lane.b32.xlu0 %v1356, 68
    %v1832 = vpop.permute.xlu0 %1831
    %v1833 = vsel %vm1361, %v1830, 0
    %v1835 = vsel %vm1361, %v1832, 0
    %1837 = vmatpush.xpose.msra.mxu0 0.0
    %1838 = vmatpush.xpose.msra.mxu0 0.0
    %1839 = vmatpush.xpose.msra.mxu0 0.0
    %1840 = vmatpush.xpose.msra.mxu0 0.0
    %1841 = vmatpush.xpose.msra.mxu0 0.0
    %1842 = vmatpush.xpose.msra.mxu0 0.0
    %1843 = vmatpush.xpose.msra.mxu0 0.0
    %1844 = vmatpush.xpose.msra.mxu0 0.0
    %1845 = vmatpush.xpose.msra.mxu0 0.0
    %1846 = vmatpush.xpose.msra.mxu0 0.0
    %1847 = vmatpush.xpose.msra.mxu0 0.0
    %1848 = vmatpush.xpose.msra.mxu0 0.0
    %1849 = vmatpush.xpose.msra.mxu0 0.0
    %1850 = vmatpush.xpose.msra.mxu0 0.0
    %1851 = vmatpush.xpose.msra.mxu0 0.0
    %1852 = vmatpush.xpose.msra.mxu0 %v1835
    %1853 = vmatmul.f32.gmra.mxu0 %v1833
    %v1854 = vpop.f32.mrf.mxu0
    %v1855 = vadd.f32 0.0, %v1854
    %1856 = vdwg.mxu0
    %v1857 = vmul.f32 %v1855, 0.5
    %v1858 = vsel %vm1387, %v1857, -inf
    %1859 = vmax.xlane.f32.xlu0 %v1858
    %v1860 = vpop.xlane.xlu0 %1859
    %v1861 = vsub.f32 %v1857, %v1860
    %v1862 = vmul.f32 %v1861, 1.442695
    %v1863 = vpow.pop %v1862
    %v1864 = vsel %vm1387, %v1863, 0.0
    %1865 = vadd.xlane.f32.xlu0 %v1864
    %v1866 = vpop.xlane.xlu0 %1865
    %v1867 = vrcp.pop %v1866
    %v1868 = vmul.f32 %v1863, %v1867
    %1869 = vrot.lane.b32.xlu0 %v1356, 36
    %v1870 = vpop.permute.xlu0 %1869
    %v1872 = vsel %vm1361, %v1868, 0
    %v1874 = vsel %vm1404, %v1870, 0
    %1876 = vmatpush.msra.mxu0 0.0
    %1877 = vmatpush.msra.mxu0 0.0
    %1878 = vmatpush.msra.mxu0 0.0
    %1879 = vmatpush.msra.mxu0 0.0
    %1880 = vmatpush.msra.mxu0 0.0
    %1881 = vmatpush.msra.mxu0 0.0
    %1882 = vmatpush.msra.mxu0 0.0
    %1883 = vmatpush.msra.mxu0 0.0
    %1884 = vmatpush.msra.mxu0 0.0
    %1885 = vmatpush.msra.mxu0 0.0
    %1886 = vmatpush.msra.mxu0 0.0
    %1887 = vmatpush.msra.mxu0 0.0
    %1888 = vmatpush.msra.mxu0 0.0
    %1889 = vmatpush.msra.mxu0 0.0
    %1890 = vmatpush.msra.mxu0 0.0
    %1891 = vmatpush.msra.mxu0 %v1874
    %1892 = vmatmul.f32.gmra.mxu0 %v1872
    %v1893 = vpop.f32.mrf.mxu0
    %v1894 = vadd.f32 0.0, %v1893
    %1895 = vdwg.mxu0
    %1897 = vrot.lane.b32.xlu0 %v1492, 4
    %v1898 = vpop.permute.xlu0 %1897
    %1901 = vrot.lane.b32.xlu0 %v1559, 8
    %v1902 = vpop.permute.xlu0 %1901
    %1905 = vrot.lane.b32.xlu0 %v1626, 12
    %v1906 = vpop.permute.xlu0 %1905
    %1909 = vrot.lane.b32.xlu0 %v1693, 16
    %v1910 = vpop.permute.xlu0 %1909
    %1913 = vrot.lane.b32.xlu0 %v1760, 20
    %v1914 = vpop.permute.xlu0 %1913
    %1917 = vrot.lane.b32.xlu0 %v1827, 24
    %v1918 = vpop.permute.xlu0 %1917
    %1921 = vrot.lane.b32.xlu0 %v1894, 28
    %v1922 = vpop.permute.xlu0 %1921
    %v1924 = vsel %vm1361, %v1425, %v1898
    %v1925 = vsel %vm153, %v1924, %v1902
    %vm1926 = vcmask 97280
    %v1927 = vsel %vm1926, %v1925, %v1906
    %vm1928 = vcmask 130048
    %v1929 = vsel %vm1928, %v1927, %v1910
    %vm1930 = vcmask 162816
    %v1931 = vsel %vm1930, %v1929, %v1914
    %vm1932 = vcmask 195584
    %v1933 = vsel %vm1932, %v1931, %v1918
    %vm1934 = vcmask 228352
    %v1935 = vsel %vm1934, %v1933, %v1922
    %v1936 = vld [vmem:[#allocation8] sm:$0xff]
    %v1937 = vld [vmem:[#allocation8 + $0x8] sm:$0xff]
    %v1938 = vld [vmem:[#allocation8 + $0x10] sm:$0xff]
    %v1939 = vld [vmem:[#allocation8 + $0x18] sm:$0xff]
    %v1940 = vld [vmem:[%s8] sm:$0x1]
    %v1942 = vperm.slane %v1940, 0
    %v1945 = vsel %vm223, %v1935, 0
    %1947 = vmatpush.msra.mxu0 0.0
    %1948 = vmatpush.msra.mxu0 0.0
    %1949 = vmatpush.msra.mxu0 0.0
    %1950 = vmatpush.msra.mxu0 0.0
    %1951 = vmatpush.msra.mxu0 0.0
    %1952 = vmatpush.msra.mxu0 0.0
    %1953 = vmatpush.msra.mxu0 0.0
    %1954 = vmatpush.msra.mxu0 0.0
    %1955 = vmatpush.msra.mxu0 0.0
    %1956 = vmatpush.msra.mxu0 0.0
    %1957 = vmatpush.msra.mxu0 0.0
    %1958 = vmatpush.msra.mxu0 0.0
    %1959 = vmatpush.msra.mxu0 %v1939
    %1960 = vmatpush.msra.mxu0 %v1938
    %1961 = vmatpush.msra.mxu0 %v1937
    %1962 = vmatpush.msra.mxu0 %v1936
    %1963 = vmatmul.f32.gmra.mxu0 %v1945
    %v1964 = vpop.f32.mrf.mxu0
    %v1965 = vadd.f32 %v1942, %v1964
    %1966 = vdwg.mxu0
    %v1967 = vld [vmem:[%s9] sm:$0xff]
    %v1968 = vld [vmem:[%s9 + $0x8] sm:$0xff]
    %v1969 = vld [vmem:[%s9 + $0x10] sm:$0xff]
    %v1970 = vld [vmem:[%s9 + $0x18] sm:$0xff]
    %v1971 = vld [vmem:[%s10] sm:$0x1]
    %v1973 = vperm.slane %v1971, 0
    %v1976 = vsel %vm223, %v1965, 0
    %1978 = vmatpush.msra.mxu0 0.0
    %1979 = vmatpush.msra.mxu0 0.0
    %1980 = vmatpush.msra.mxu0 0.0
    %1981 = vmatpush.msra.mxu0 0.0
    %1982 = vmatpush.msra.mxu0 0.0
    %1983 = vmatpush.msra.mxu0 0.0
    %1984 = vmatpush.msra.mxu0 0.0
    %1985 = vmatpush.msra.mxu0 0.0
    %1986 = vmatpush.msra.mxu0 0.0
    %1987 = vmatpush.msra.mxu0 0.0
    %1988 = vmatpush.msra.mxu0 0.0
    %1989 = vmatpush.msra.mxu0 0.0
    %1990 = vmatpush.msra.mxu0 %v1970
    %1991 = vmatpush.msra.mxu0 %v1969
    %1992 = vmatpush.msra.mxu0 %v1968
    %1993 = vmatpush.msra.mxu0 %v1967
    %1994 = vmatmul.f32.gmra.mxu0 %v1976
    %v1995 = vpop.f32.mrf.mxu0
    %v1996 = vadd.f32 %v1973, %v1995
    %1997 = vdwg.mxu0
    %v1998 = vmax.f32 %v1996, 0.0
    %v1999 = vld [vmem:[%s13] sm:$0x1]
    %v2001 = vperm.slane %v1999, 0
    %v2003 = vsub.f32 %v1998, %v2001
    %v2004 = vld [vmem:[%s14] sm:$0x1]
    %v2005 = vadd.f32 %v2004, 1e-05
    %v2006 = vrsqrt.pop %v2005
    %v2007 = vmul.f32 %v2006, %v2005
    %v2008 = vmul.f32 %v2007, %v2006
    %v2009 = vmul.f32 0.5, %v2008
    %v2010 = vsub.f32 1.5, %v2009
    %v2011 = vmul.f32 %v2006, %v2010
    %vm2012 = vweird.f32 %v2005
    %vm2013 = vweird.f32 %v2006
    %vm2014 = vmor %vm2012, %vm2013
    %v2015 = vsel %vm2014, %v2006, %v2011
    %v2017 = vperm.slane %v2015, 0
    %v2019 = vmul.f32 %v2003, %v2017
    %v2020 = vld [vmem:[%s11] sm:$0x1]
    %v2022 = vperm.slane %v2020, 0
    %v2024 = vmul.f32 %v2019, %v2022
    %v2025 = vld [vmem:[%s12] sm:$0x1]
    %v2027 = vperm.slane %v2025, 0
    %v2029 = vadd.f32 %v2024, %v2027
    %v2030 = vld [vmem:[%s15] sm:$0xff]
    %v2031 = vld [vmem:[%s15 + $0x8] sm:$0xff]
    %v2032 = vld [vmem:[%s16] sm:$0x1]
    %v2034 = vperm.slane %v2032, 0
    %v2037 = vsel %vm1928, %v2029, 0
    %2039 = vmatpush.msra.mxu0 0.0
    %2040 = vmatpush.msra.mxu0 0.0
    %2041 = vmatpush.msra.mxu0 0.0
    %2042 = vmatpush.msra.mxu0 0.0
    %2043 = vmatpush.msra.mxu0 0.0
    %2044 = vmatpush.msra.mxu0 0.0
    %2045 = vmatpush.msra.mxu0 0.0
    %2046 = vmatpush.msra.mxu0 0.0
    %2047 = vmatpush.msra.mxu0 0.0
    %2048 = vmatpush.msra.mxu0 0.0
    %2049 = vmatpush.msra.mxu0 0.0
    %2050 = vmatpush.msra.mxu0 0.0
    %2051 = vmatpush.msra.mxu0 0.0
    %2052 = vmatpush.msra.mxu0 0.0
    %2053 = vmatpush.msra.mxu0 %v2031
    %2054 = vmatpush.msra.mxu0 %v2030
    %2055 = vmatmul.f32.gmra.mxu0 %v2037
    %v2056 = vpop.f32.mrf.mxu0
    %v2057 = vadd.f32 %v2034, %v2056
    %2058 = vdwg.mxu0
    %vm2059 = vcmask 19456
    %v2060 = vsel %vm2059, %v2057, -inf
    %2061 = vmax.xlane.f32.xlu0 %v2060
    %v2062 = vpop.xlane.xlu0 %2061
    %v2063 = vsub.f32 %v2057, %v2062
    %v2064 = vmul.f32 %v2063, 1.442695
    %v2065 = vpow.pop %v2064
    %v2066 = vsel %vm2059, %v2065, 0.0
    %2067 = vadd.xlane.f32.xlu0 %v2066
    %v2068 = vpop.xlane.xlu0 %2067
    %v2069 = vrcp.pop %v2068
    %v2070 = vmul.f32 %v2068, %v2069
    %v2071 = vsub.f32 1.0, %v2070
    %v2072 = vmul.f32 %v2069, %v2071
    %v2073 = vadd.f32 %v2069, %v2072
    %vm2074 = vweird.f32 %v2068
    %vm2075 = vweird.f32 %v2069
    %vm2076 = vmor %vm2074, %vm2075
    %v2077 = vsel %vm2076, %v2069, %v2073
    %v2078 = vand.u32 2147483647, %v2068
    %vm2079 = vcmp.eq.f32.partialorder %v2078, 8.507059e+37
    %v2080 = vand.u32 %v2068, 2147483648
    %v2081 = vor.u32 1.1754944e-38, %v2080
    %v2082 = vsel %vm2079, %v2081, %v2077
    %v2083 = vmul.f32 %v2065, %v2082
    %2084 = vst.msk [vmem:[#allocation10] sm:$0xf] %vm2059, %v2083
    // Predicated region
    $region86: #{tpu_custom_call.1} parent=1 // pred_check
      _
    $region87: #{tpu_custom_call.1} parent=1 // pred_check_branch
      %2086 = sbr.rel (0) target = $region89
    $region88: #{tpu_custom_call.1} parent=1 // pred_region
      %2088 = vsyncadd [#allocation4], 0
      %s2090 = sshll.u32 [#allocation10], 4
      %s2091 = int_to_ptr.vmem [resolvable:$true] %s2090
      %s2092 = sshll.u32 %s17, 4
      %s2093 = int_to_ptr.hbm [resolvable:$true] %s2092
      %2095 = dma.vmem_to_hbm [thread:$0]  %s2091, 64, %s2093, [#allocation4]
    $region89: #{tpu_custom_call.1} parent=1 // pred_fallthru
      _
    // Predicated region
    $region90: #{tpu_custom_call.1} parent=1 // pred_check
      _
    $region91: #{tpu_custom_call.1} parent=1 // pred_check_branch
      %2097 = sbr.rel (0) target = $region93
    $region92: #{tpu_custom_call.1} parent=1 // pred_region
      %2099 = dma.done [#allocation4], 64
    $region93: #{tpu_custom_call.1} parent=1 // pred_fallthru
      _
    %2100 = vsyncpa [#allocation3], 1
    %2101 = vsyncpa [#allocation6], 1
    %2102 = vsyncpa [#allocation9], 1
    %2103 = vsyncpa [#allocation4], 1

</llo_original>
